<compile_context>
chip_gen: v7x
topology: tpu7x:2x2x1
jax: 0.10.0
libtpu: 0.0.40
codegen_flags: <defaults>
</compile_context>

<pallas_src>
import functools

import jax
import jax.numpy as jnp
from jax import lax
from jax.experimental import pallas as pl
from jax.experimental.pallas import tpu as pltpu


def _round_up(x, m):
    return ((x + m - 1) // m) * m


def _vmem_capacity_bytes():
    try:
        return int(pltpu.get_tpu_info().vmem_capacity_bytes)
    except Exception:
        return 64 * 1024 * 1024  # conservative (v7x per-TensorCore VMEM)


def projection_kernel(x_ref, w1_ref, b1_ref, w2_ref, b2_ref, o_ref, acc_ref,
                      *, precision):
    """Grid = (batch_tiles, k_tiles); k (reduction over input_dim) is last."""
    k = pl.program_id(1)

    @pl.when(k == 0)
    def _init():
        acc_ref[...] = jnp.zeros_like(acc_ref)

    # Linear 1 partial product on the MXU, f32 accumulation in VMEM scratch.
    acc_ref[...] += jnp.dot(x_ref[...], w1_ref[...],
                            preferred_element_type=jnp.float32,
                            precision=precision)

    @pl.when(k == pl.num_programs(1) - 1)
    def _epilogue():
        # bias + ReLU (f32, VPU).
        h = jnp.maximum(acc_ref[...] + b1_ref[...], 0.0)
        # TODO(synk): dropout is identity in eval mode; training-mode dropout
        # (pltpu.prng_random_bits mask) is intentionally not emitted here.

        # Linear 2 (cast back to matmul operand dtype: bf16 stays MXU-native).
        y = jnp.dot(h.astype(w2_ref.dtype), w2_ref[...],
                    preferred_element_type=jnp.float32,
                    precision=precision)
        y = y + b2_ref[...]

        # F.normalize(p=2, dim=-1): y / max(||y||, 1e-12)
        #   == y * rsqrt(max(||y||^2, 1e-24))   (rsqrt runs on the EUP slot)
        ss = jnp.sum(y * y, axis=-1, keepdims=True)
        o_ref[...] = (y * lax.rsqrt(jnp.maximum(ss, 1e-24))).astype(o_ref.dtype)


def prepare_projection_params(w1, b1, w2, b2, *, matmul_dtype=jnp.bfloat16):
    """Pad + cast the weights ONCE (hoisted out of the per-call path).

    w1: (input_dim, output_dim), w2: (output_dim, output_dim),
    b1/b2: (output_dim,) or (1, output_dim).  Zero-padded rows/cols are exact
    no-ops through both matmuls, the bias adds, the ReLU and the L2 norm.
    """
    input_dim, output_dim = w1.shape
    assert w2.shape == (output_dim, output_dim)
    din_p = _round_up(input_dim, 128)
    dout_p = _round_up(output_dim, 128)
    # Note: padding dout_p further to a multiple of 256 (MXU tile width on
    # v6e/v7x) is a minor win on the ragged pass but grows W2 quadratically;
    # intentionally not done here.

    mdt = jnp.dtype(matmul_dtype)
    f32 = jnp.float32
    w1p = jnp.zeros((din_p, dout_p), mdt).at[:input_dim, :output_dim].set(
        w1.astype(mdt))
    w2p = jnp.zeros((dout_p, dout_p), mdt).at[:output_dim, :output_dim].set(
        w2.astype(mdt))
    b1p = jnp.zeros((1, dout_p), f32).at[:, :output_dim].set(
        jnp.reshape(b1, (1, -1)).astype(f32))
    b2p = jnp.zeros((1, dout_p), f32).at[:, :output_dim].set(
        jnp.reshape(b2, (1, -1)).astype(f32))
    return dict(w1=w1p, b1=b1p, w2=w2p, b2=b2p,
                input_dim=input_dim, output_dim=output_dim, matmul_dtype=mdt)


def projection_apply(x, params, *, tile_b=None):
    """x: (B, input_dim) -> (B, output_dim) f32, using pre-padded params."""
    B, input_dim = x.shape
    assert input_dim == params["input_dim"]
    output_dim = params["output_dim"]
    w1p, b1p, w2p, b2p = params["w1"], params["b1"], params["w2"], params["b2"]
    din_p, dout_p = w1p.shape
    mdt = params["matmul_dtype"]
    itemsize = mdt.itemsize
    # f32 operands: force true-f32 MXU passes for strict parity with PyTorch;
    # bf16 operands are MXU-native, default precision.
    precision = (lax.Precision.HIGHEST if mdt == jnp.dtype(jnp.float32)
                 else lax.Precision.DEFAULT)

    # ---- Batch tiling: one grid step for small batches (v5e/v6e have a
    # single TensorCore, so extra grid steps are pure per-step overhead).
    # bf16 packs 16 sublanes per vreg -> 16-row alignment; 8 for f32.
    row_align = 16 if itemsize < 4 else 8
    if tile_b is None:
        if B <= 256:
            tile_b = _round_up(max(B, row_align), row_align)
        else:
            tile_b = 256
        # TODO(synk): on v7x (2 TensorCores) splitting small batches across 2
        # "parallel" grid steps can pay off; not gated on chip version here.
    b_p = _round_up(max(B, tile_b), tile_b)
    n_b = b_p // tile_b

    # ---- VMEM budget + K-tiling plan (reduction axis over din_p, last).
    vmem_cap = _vmem_capacity_bytes()
    budget = int(0.85 * vmem_cap)
    fixed = (dout_p * dout_p * itemsize     # W2 resident (single-buffered)
             + 2 * dout_p * 4               # b1, b2
             + 2 * tile_b * dout_p * 4      # out tile (double-buffered)
             + tile_b * dout_p * 4)         # f32 accumulator scratch

    def working_set(tk, w1_bufs):
        return (fixed + w1_bufs * tk * dout_p * itemsize
                + 2 * tile_b * tk * itemsize)

    if working_set(din_p, 1) <= budget:
        tk = din_p                                   # W1 fully resident
    else:
        per_tk = 2 * dout_p * itemsize + 2 * tile_b * itemsize
        tk = max(128, ((budget - fixed) // max(per_tk, 1)) // 128 * 128)
        tk = min(tk, din_p)
        while din_p % tk != 0:                       # tk must divide din_p
            tk -= 128
        # TODO(synk): if resident W2 alone overflows the budget (huge
        # output_dim), matmul-2 would additionally need N-tiling; not done.
    n_k = din_p // tk
    w1_bufs = 1 if n_k == 1 else 2
    vmem_limit = int(min(budget,
                         max(32 * 1024 * 1024,
                             int(1.25 * working_set(tk, w1_bufs)))))

    # ---- Per-call activation padding (batch-dependent, cannot be hoisted).
    if B == b_p and input_dim == din_p and x.dtype == mdt:
        xp = x
    else:
        xp = jnp.zeros((b_p, din_p), mdt).at[:B, :input_dim].set(x.astype(mdt))

    cost = pl.CostEstimate(
        flops=2 * b_p * (din_p * dout_p + dout_p * dout_p),
        transcendentals=b_p,
        bytes_accessed=(xp.size * itemsize + w1p.size * itemsize
                        + w2p.size * itemsize + (b1p.size + b2p.size) * 4
                        + b_p * dout_p * 4),
    )

    def build(single_buffer_consts):
        def const_spec(shape):
            if single_buffer_consts:
                return pl.BlockSpec(shape, lambda i, k: (0, 0),
                                    pipeline_mode=pl.Buffered(1))
            return pl.BlockSpec(shape, lambda i, k: (0, 0))

        if n_k == 1:
            w1_spec = const_spec((din_p, dout_p))          # grid-invariant
        else:
            w1_spec = pl.BlockSpec((tk, dout_p), lambda i, k: (k, 0))

        in_specs = [
            pl.BlockSpec((tile_b, tk), lambda i, k: (i, k)),   # x tile
            w1_spec,                                           # W1
            const_spec((1, dout_p)),                           # b1
            const_spec((dout_p, dout_p)),                      # W2
            const_spec((1, dout_p)),                           # b2
        ]
        return pl.pallas_call(
            functools.partial(projection_kernel, precision=precision),
            out_shape=jax.ShapeDtypeStruct((b_p, dout_p), jnp.float32),
            grid_spec=pltpu.PrefetchScalarGridSpec(
                num_scalar_prefetch=0,
                grid=(n_b, n_k),
                in_specs=in_specs,
                out_specs=pl.BlockSpec((tile_b, dout_p), lambda i, k: (i, 0)),
                scratch_shapes=[pltpu.VMEM((tile_b, dout_p), jnp.float32)],
            ),
            compiler_params=pltpu.CompilerParams(
                dimension_semantics=("parallel", "arbitrary"),
                vmem_limit_bytes=vmem_limit,
            ),
            cost_estimate=cost,
        )(xp, w1p, b1p, w2p, b2p)

    try:
        out = build(True)
    except Exception:
        # Fallback if this Pallas build rejects Buffered(1) on constant specs.
        out = build(False)

    return out[:B, :output_dim]


def projection_layer(x, w1, b1, w2, b2, *, matmul_dtype=jnp.bfloat16,
                     tile_b=None):
    """One-shot convenience wrapper (prefer prepare_projection_params once +
    projection_apply per call to avoid re-padding weights every call)."""
    params = prepare_projection_params(w1, b1, w2, b2,
                                       matmul_dtype=matmul_dtype)
    return projection_apply(x, params, tile_b=tile_b)


def reference(x, w1, b1, w2, b2):
    h = jnp.maximum(x @ w1 + b1.reshape(1, -1), 0.0)
    y = h @ w2 + b2.reshape(1, -1)
    n = jnp.sqrt(jnp.sum(y * y, axis=-1, keepdims=True))
    return y / jnp.maximum(n, 1e-12)


if __name__ == "__main__":
    batch = 16
    input_dim = 32
    output_dim = 64

    key = jax.random.PRNGKey(0)
    kx, kw1, kb1, kw2, kb2 = jax.random.split(key, 5)

    x = jax.random.normal(kx, (batch, input_dim), dtype=jnp.float32)
    w1 = jax.random.normal(kw1, (input_dim, output_dim),
                           dtype=jnp.float32) * (1.0 / input_dim ** 0.5)
    b1 = jax.random.normal(kb1, (output_dim,), dtype=jnp.float32) * 0.01
    w2 = jax.random.normal(kw2, (output_dim, output_dim),
                           dtype=jnp.float32) * (1.0 / output_dim ** 0.5)
    b2 = jax.random.normal(kb2, (output_dim,), dtype=jnp.float32) * 0.01

    ref = reference(x, w1, b1, w2, b2)

    # f32 operands + HIGHEST precision: tight match to the PyTorch forward.
    params_f32 = prepare_projection_params(w1, b1, w2, b2,
                                           matmul_dtype=jnp.float32)
    out_f32 = jax.block_until_ready(projection_apply(x, params_f32))
    assert out_f32.shape == (batch, output_dim)
    assert jnp.allclose(out_f32, ref, atol=1e-5, rtol=1e-5), \
        "f32 mismatch vs reference"

    # Default path: bf16 matmul operands (MXU-native on v6e/v7x), f32
    # accumulation + epilogue.  Looser tolerance.
    params_bf16 = prepare_projection_params(w1, b1, w2, b2)
    out_bf16 = jax.block_until_ready(projection_apply(x, params_bf16))
    assert out_bf16.shape == (batch, output_dim)
    assert jnp.allclose(out_bf16, ref, atol=2e-2, rtol=2e-2), \
        "bf16 mismatch vs reference"

    print("KERNEL_OK")
</pallas_src>

<mosaic_0001>
module attributes {stable_mosaic.version = 11 : i64} {
  func.func @projection_kernel(%arg0: i32, %arg1: i32, %arg2: memref<16x128xf32, #tpu.memory_space<vmem>>, %arg3: memref<128x128xf32, #tpu.memory_space<vmem>>, %arg4: memref<1x128xf32, #tpu.memory_space<vmem>>, %arg5: memref<128x128xf32, #tpu.memory_space<vmem>>, %arg6: memref<1x128xf32, #tpu.memory_space<vmem>>, %arg7: memref<16x128xf32, #tpu.memory_space<vmem>>, %arg8: memref<16x128xf32, #tpu.memory_space<vmem>>) attributes {dimension_semantics = [#tpu.dimension_semantics<parallel>, #tpu.dimension_semantics<arbitrary>], iteration_bounds = array<i64: 1, 1>, scalar_prefetch = 0 : i64, scratch_operands = 1 : i64, tpu.core_type = #tpu.core_type<tc>, window_params = [{transform_indices = @transform_0, window_bounds = array<i64: 16, 128>}, {pipeline_mode = #tpu.pipeline_mode<synchronous>, transform_indices = @transform_1, window_bounds = array<i64: 128, 128>}, {pipeline_mode = #tpu.pipeline_mode<synchronous>, transform_indices = @transform_2, window_bounds = array<i64: 1, 128>}, {pipeline_mode = #tpu.pipeline_mode<synchronous>, transform_indices = @transform_3, window_bounds = array<i64: 128, 128>}, {pipeline_mode = #tpu.pipeline_mode<synchronous>, transform_indices = @transform_4, window_bounds = array<i64: 1, 128>}, {transform_indices = @transform_5, window_bounds = array<i64: 16, 128>}]} {
    %c0_i32 = arith.constant 0 : i32
    %0 = arith.cmpi eq, %arg1, %c0_i32 : i32
    %1 = arith.extui %0 : i1 to i32
    %c0_i32_0 = arith.constant 0 : i32
    %2 = arith.cmpi ne, %1, %c0_i32_0 : i32
    scf.if %2 {
      %cst_10 = arith.constant 0.000000e+00 : f32
      %12 = vector.broadcast %cst_10 : f32 to vector<16x128xf32>
      %c0_11 = arith.constant 0 : index
      %c0_12 = arith.constant 0 : index
      %13 = vector.load %arg8[%c0_11, %c0_12] : memref<16x128xf32, #tpu.memory_space<vmem>>, vector<16x128xf32>
      tpu.vector_store %arg8[%c0_11, %c0_12], %12 {strides = array<i32>} : memref<16x128xf32, #tpu.memory_space<vmem>>, vector<16x128xf32>,
    } else {
    }
    %c0 = arith.constant 0 : index
    %c0_1 = arith.constant 0 : index
    %3 = vector.load %arg8[%c0, %c0_1] : memref<16x128xf32, #tpu.memory_space<vmem>>, vector<16x128xf32>
    %c0_2 = arith.constant 0 : index
    %c0_3 = arith.constant 0 : index
    %4 = vector.load %arg2[%c0_2, %c0_3] : memref<16x128xf32, #tpu.memory_space<vmem>>, vector<16x128xf32>
    %c0_4 = arith.constant 0 : index
    %c0_5 = arith.constant 0 : index
    %5 = vector.load %arg3[%c0_4, %c0_5] : memref<128x128xf32, #tpu.memory_space<vmem>>, vector<128x128xf32>
    %cst = arith.constant dense<0.000000e+00> : vector<16x128xf32>
    %6 = tpu.matmul %4, %5, %cst {dimension_numbers = #tpu.dot_dimension_numbers<[1], [0], [0], [1], [0, 0, 1, 1], [], []>, precision = #tpu.contract_precision<fp32>} : vector<16x128xf32>, vector<128x128xf32>, vector<16x128xf32> -> vector<16x128xf32>
    %7 = arith.addf %3, %6 : vector<16x128xf32>
    %c0_6 = arith.constant 0 : index
    %c0_7 = arith.constant 0 : index
    %8 = vector.load %arg8[%c0_6, %c0_7] : memref<16x128xf32, #tpu.memory_space<vmem>>, vector<16x128xf32>
    tpu.vector_store %arg8[%c0_6, %c0_7], %7 {strides = array<i32>} : memref<16x128xf32, #tpu.memory_space<vmem>>, vector<16x128xf32>,
    %c0_i32_8 = arith.constant 0 : i32
    %9 = arith.cmpi eq, %arg1, %c0_i32_8 : i32
    %10 = arith.extui %9 : i1 to i32
    %c0_i32_9 = arith.constant 0 : i32
    %11 = arith.cmpi ne, %10, %c0_i32_9 : i32
    scf.if %11 {
      %c0_10 = arith.constant 0 : index
      %c0_11 = arith.constant 0 : index
      %12 = vector.load %arg8[%c0_10, %c0_11] : memref<16x128xf32, #tpu.memory_space<vmem>>, vector<16x128xf32>
      %c0_12 = arith.constant 0 : index
      %c0_13 = arith.constant 0 : index
      %13 = vector.load %arg4[%c0_12, %c0_13] : memref<1x128xf32, #tpu.memory_space<vmem>>, vector<1x128xf32>
      %14 = vector.broadcast %13 : vector<1x128xf32> to vector<16x128xf32>
      %15 = arith.addf %12, %14 : vector<16x128xf32>
      %cst_14 = arith.constant 0.000000e+00 : f32
      %16 = vector.broadcast %cst_14 : f32 to vector<16x128xf32>
      %17 = arith.maximumf %15, %16 : vector<16x128xf32>
      %c0_15 = arith.constant 0 : index
      %c0_16 = arith.constant 0 : index
      %18 = vector.load %arg5[%c0_15, %c0_16] : memref<128x128xf32, #tpu.memory_space<vmem>>, vector<128x128xf32>
      %cst_17 = arith.constant dense<0.000000e+00> : vector<16x128xf32>
      %19 = tpu.matmul %17, %18, %cst_17 {dimension_numbers = #tpu.dot_dimension_numbers<[1], [0], [0], [1], [0, 0, 1, 1], [], []>, precision = #tpu.contract_precision<fp32>} : vector<16x128xf32>, vector<128x128xf32>, vector<16x128xf32> -> vector<16x128xf32>
      %c0_18 = arith.constant 0 : index
      %c0_19 = arith.constant 0 : index
      %20 = vector.load %arg6[%c0_18, %c0_19] : memref<1x128xf32, #tpu.memory_space<vmem>>, vector<1x128xf32>
      %21 = vector.broadcast %20 : vector<1x128xf32> to vector<16x128xf32>
      %22 = arith.addf %19, %21 : vector<16x128xf32>
      %23 = arith.mulf %22, %22 : vector<16x128xf32>
      %cst_20 = arith.constant dense<0.000000e+00> : vector<16xf32>
      %24 = vector.multi_reduction <add>, %23, %cst_20 [1] : vector<16x128xf32> to vector<16xf32>
      %25 = vector.shape_cast %24 : vector<16xf32> to vector<16x1xf32>
      %cst_21 = arith.constant 1.000000e-24 : f32
      %26 = vector.broadcast %cst_21 : f32 to vector<16x1xf32>
      %27 = arith.maximumf %25, %26 : vector<16x1xf32>
      %28 = math.rsqrt %27 : vector<16x1xf32>
      %29 = vector.broadcast %28 : vector<16x1xf32> to vector<16x128xf32>
      %30 = arith.mulf %22, %29 : vector<16x128xf32>
      %c0_22 = arith.constant 0 : index
      %c0_23 = arith.constant 0 : index
      %31 = vector.load %arg7[%c0_22, %c0_23] : memref<16x128xf32, #tpu.memory_space<vmem>>, vector<16x128xf32>
      tpu.vector_store %arg7[%c0_22, %c0_23], %30 {strides = array<i32>} : memref<16x128xf32, #tpu.memory_space<vmem>>, vector<16x128xf32>,
    } else {
    }
    return
  }
  func.func @transform_0(%arg0: i32, %arg1: i32) -> (i32, i32) {
    %c0_i32 = arith.constant 0 : i32
    return %arg0, %arg1 : i32, i32
  }
  func.func @transform_1(%arg0: i32, %arg1: i32) -> (i32, i32) {
    %c0_i32 = arith.constant 0 : i32
    %c0_i32_0 = arith.constant 0 : i32
    %c0_i32_1 = arith.constant 0 : i32
    return %c0_i32, %c0_i32_0 : i32, i32
  }
  func.func @transform_2(%arg0: i32, %arg1: i32) -> (i32, i32) {
    %c0_i32 = arith.constant 0 : i32
    %c0_i32_0 = arith.constant 0 : i32
    %c0_i32_1 = arith.constant 0 : i32
    return %c0_i32, %c0_i32_0 : i32, i32
  }
  func.func @transform_3(%arg0: i32, %arg1: i32) -> (i32, i32) {
    %c0_i32 = arith.constant 0 : i32
    %c0_i32_0 = arith.constant 0 : i32
    %c0_i32_1 = arith.constant 0 : i32
    return %c0_i32, %c0_i32_0 : i32, i32
  }
  func.func @transform_4(%arg0: i32, %arg1: i32) -> (i32, i32) {
    %c0_i32 = arith.constant 0 : i32
    %c0_i32_0 = arith.constant 0 : i32
    %c0_i32_1 = arith.constant 0 : i32
    return %c0_i32, %c0_i32_0 : i32, i32
  }
  func.func @transform_5(%arg0: i32, %arg1: i32) -> (i32, i32) {
    %c0_i32 = arith.constant 0 : i32
    %c0_i32_0 = arith.constant 0 : i32
    return %arg0, %c0_i32 : i32, i32
  }
}

module attributes {stable_mosaic.version = 11 : i64} {
  func.func @projection_kernel(%arg0: i32, %arg1: i32, %arg2: memref<16x128xf32, #tpu.memory_space<vmem>>, %arg3: memref<128x128xf32, #tpu.memory_space<vmem>>, %arg4: memref<1x128xf32, #tpu.memory_space<vmem>>, %arg5: memref<128x128xf32, #tpu.memory_space<vmem>>, %arg6: memref<1x128xf32, #tpu.memory_space<vmem>>, %arg7: memref<16x128xf32, #tpu.memory_space<vmem>>, %arg8: memref<16x128xf32, #tpu.memory_space<vmem>>) attributes {dimension_semantics = [#tpu.dimension_semantics<parallel>, #tpu.dimension_semantics<arbitrary>], iteration_bounds = array<i64: 1, 1>, scalar_prefetch = 0 : i64, scratch_operands = 1 : i64, tpu.core_type = #tpu.core_type<tc>, window_params = [{transform_indices = @transform_0, window_bounds = array<i64: 16, 128>}, {pipeline_mode = #tpu.pipeline_mode<synchronous>, transform_indices = @transform_1, window_bounds = array<i64: 128, 128>}, {pipeline_mode = #tpu.pipeline_mode<synchronous>, transform_indices = @transform_2, window_bounds = array<i64: 1, 128>}, {pipeline_mode = #tpu.pipeline_mode<synchronous>, transform_indices = @transform_3, window_bounds = array<i64: 128, 128>}, {pipeline_mode = #tpu.pipeline_mode<synchronous>, transform_indices = @transform_4, window_bounds = array<i64: 1, 128>}, {transform_indices = @transform_5, window_bounds = array<i64: 16, 128>}]} {
    %c0_i32 = arith.constant 0 : i32
    %0 = arith.cmpi eq, %arg1, %c0_i32 : i32
    %1 = arith.extui %0 : i1 to i32
    %c0_i32_0 = arith.constant 0 : i32
    %2 = arith.cmpi ne, %1, %c0_i32_0 : i32
    scf.if %2 {
      %cst_10 = arith.constant 0.000000e+00 : f32
      %12 = vector.broadcast %cst_10 : f32 to vector<16x128xf32>
      %c0_11 = arith.constant 0 : index
      %c0_12 = arith.constant 0 : index
      %13 = vector.load %arg8[%c0_11, %c0_12] : memref<16x128xf32, #tpu.memory_space<vmem>>, vector<16x128xf32>
      tpu.vector_store %arg8[%c0_11, %c0_12], %12 {strides = array<i32>} : memref<16x128xf32, #tpu.memory_space<vmem>>, vector<16x128xf32>,
    } else {
    }
    %c0 = arith.constant 0 : index
    %c0_1 = arith.constant 0 : index
    %3 = vector.load %arg8[%c0, %c0_1] : memref<16x128xf32, #tpu.memory_space<vmem>>, vector<16x128xf32>
    %c0_2 = arith.constant 0 : index
    %c0_3 = arith.constant 0 : index
    %4 = vector.load %arg2[%c0_2, %c0_3] : memref<16x128xf32, #tpu.memory_space<vmem>>, vector<16x128xf32>
    %c0_4 = arith.constant 0 : index
    %c0_5 = arith.constant 0 : index
    %5 = vector.load %arg3[%c0_4, %c0_5] : memref<128x128xf32, #tpu.memory_space<vmem>>, vector<128x128xf32>
    %cst = arith.constant dense<0.000000e+00> : vector<16x128xf32>
    %6 = tpu.matmul %4, %5, %cst {dimension_numbers = #tpu.dot_dimension_numbers<[1], [0], [0], [1], [0, 0, 1, 1], [], []>, precision = #tpu.contract_precision<fp32>} : vector<16x128xf32>, vector<128x128xf32>, vector<16x128xf32> -> vector<16x128xf32>
    %7 = arith.addf %3, %6 : vector<16x128xf32>
    %c0_6 = arith.constant 0 : index
    %c0_7 = arith.constant 0 : index
    %8 = vector.load %arg8[%c0_6, %c0_7] : memref<16x128xf32, #tpu.memory_space<vmem>>, vector<16x128xf32>
    tpu.vector_store %arg8[%c0_6, %c0_7], %7 {strides = array<i32>} : memref<16x128xf32, #tpu.memory_space<vmem>>, vector<16x128xf32>,
    %c0_i32_8 = arith.constant 0 : i32
    %9 = arith.cmpi eq, %arg1, %c0_i32_8 : i32
    %10 = arith.extui %9 : i1 to i32
    %c0_i32_9 = arith.constant 0 : i32
    %11 = arith.cmpi ne, %10, %c0_i32_9 : i32
    scf.if %11 {
      %c0_10 = arith.constant 0 : index
      %c0_11 = arith.constant 0 : index
      %12 = vector.load %arg8[%c0_10, %c0_11] : memref<16x128xf32, #tpu.memory_space<vmem>>, vector<16x128xf32>
      %c0_12 = arith.constant 0 : index
      %c0_13 = arith.constant 0 : index
      %13 = vector.load %arg4[%c0_12, %c0_13] : memref<1x128xf32, #tpu.memory_space<vmem>>, vector<1x128xf32>
      %14 = vector.broadcast %13 : vector<1x128xf32> to vector<16x128xf32>
      %15 = arith.addf %12, %14 : vector<16x128xf32>
      %cst_14 = arith.constant 0.000000e+00 : f32
      %16 = vector.broadcast %cst_14 : f32 to vector<16x128xf32>
      %17 = arith.maximumf %15, %16 : vector<16x128xf32>
      %c0_15 = arith.constant 0 : index
      %c0_16 = arith.constant 0 : index
      %18 = vector.load %arg5[%c0_15, %c0_16] : memref<128x128xf32, #tpu.memory_space<vmem>>, vector<128x128xf32>
      %cst_17 = arith.constant dense<0.000000e+00> : vector<16x128xf32>
      %19 = tpu.matmul %17, %18, %cst_17 {dimension_numbers = #tpu.dot_dimension_numbers<[1], [0], [0], [1], [0, 0, 1, 1], [], []>, precision = #tpu.contract_precision<fp32>} : vector<16x128xf32>, vector<128x128xf32>, vector<16x128xf32> -> vector<16x128xf32>
      %c0_18 = arith.constant 0 : index
      %c0_19 = arith.constant 0 : index
      %20 = vector.load %arg6[%c0_18, %c0_19] : memref<1x128xf32, #tpu.memory_space<vmem>>, vector<1x128xf32>
      %21 = vector.broadcast %20 : vector<1x128xf32> to vector<16x128xf32>
      %22 = arith.addf %19, %21 : vector<16x128xf32>
      %23 = arith.mulf %22, %22 : vector<16x128xf32>
      %cst_20 = arith.constant dense<0.000000e+00> : vector<16xf32>
      %24 = vector.multi_reduction <add>, %23, %cst_20 [1] : vector<16x128xf32> to vector<16xf32>
      %25 = vector.shape_cast %24 : vector<16xf32> to vector<16x1xf32>
      %cst_21 = arith.constant 1.000000e-24 : f32
      %26 = vector.broadcast %cst_21 : f32 to vector<16x1xf32>
      %27 = arith.maximumf %25, %26 : vector<16x1xf32>
      %28 = math.rsqrt %27 : vector<16x1xf32>
      %29 = vector.broadcast %28 : vector<16x1xf32> to vector<16x128xf32>
      %30 = arith.mulf %22, %29 : vector<16x128xf32>
      %c0_22 = arith.constant 0 : index
      %c0_23 = arith.constant 0 : index
      %31 = vector.load %arg7[%c0_22, %c0_23] : memref<16x128xf32, #tpu.memory_space<vmem>>, vector<16x128xf32>
      tpu.vector_store %arg7[%c0_22, %c0_23], %30 {strides = array<i32>} : memref<16x128xf32, #tpu.memory_space<vmem>>, vector<16x128xf32>,
    } else {
    }
    return
  }
  func.func @transform_0(%arg0: i32, %arg1: i32) -> (i32, i32) {
    %c0_i32 = arith.constant 0 : i32
    return %arg0, %arg1 : i32, i32
  }
  func.func @transform_1(%arg0: i32, %arg1: i32) -> (i32, i32) {
    %c0_i32 = arith.constant 0 : i32
    %c0_i32_0 = arith.constant 0 : i32
    %c0_i32_1 = arith.constant 0 : i32
    return %c0_i32, %c0_i32_0 : i32, i32
  }
  func.func @transform_2(%arg0: i32, %arg1: i32) -> (i32, i32) {
    %c0_i32 = arith.constant 0 : i32
    %c0_i32_0 = arith.constant 0 : i32
    %c0_i32_1 = arith.constant 0 : i32
    return %c0_i32, %c0_i32_0 : i32, i32
  }
  func.func @transform_3(%arg0: i32, %arg1: i32) -> (i32, i32) {
    %c0_i32 = arith.constant 0 : i32
    %c0_i32_0 = arith.constant 0 : i32
    %c0_i32_1 = arith.constant 0 : i32
    return %c0_i32, %c0_i32_0 : i32, i32
  }
  func.func @transform_4(%arg0: i32, %arg1: i32) -> (i32, i32) {
    %c0_i32 = arith.constant 0 : i32
    %c0_i32_0 = arith.constant 0 : i32
    %c0_i32_1 = arith.constant 0 : i32
    return %c0_i32, %c0_i32_0 : i32, i32
  }
  func.func @transform_5(%arg0: i32, %arg1: i32) -> (i32, i32) {
    %c0_i32 = arith.constant 0 : i32
    %c0_i32_0 = arith.constant 0 : i32
    return %arg0, %c0_i32 : i32, i32
  }
}

</mosaic_0001>

<llo_original>
// kernel: tpu_custom_call.1
$region0: #{tpu_custom_call.1}
  #allocation0 [shape = 'u32[]', space=smem, size = 0x4, offset = 0x4, fixed_abs, tag = 'smem constant byte address 0x4 - core index']
  #allocation1 [shape = 'u32[144,128]{1,0:T(1,128)}', space=vmem, size = 0x12000, scoped, tag = 'internal scratch']
  #allocation2 [shape = 'f32[16,128]{1,0:T(8,128)}', space=vmem, size = 0x2000, scoped, tag = 'scratch operand']
  %s0 = inlined_call_operand.hbm [shape: f32[16,128], index: 0, kind: input, shape index: {}]
  %s1 = inlined_call_operand.hbm [shape: f32[128,128], index: 1, kind: input, shape index: {}]
  %s2 = inlined_call_operand.vmem [shape: f32[1,128], index: 2, kind: input, shape index: {}]
  %s3 = inlined_call_operand.hbm [shape: f32[128,128], index: 3, kind: input, shape index: {}]
  %s4 = inlined_call_operand.vmem [shape: f32[1,128], index: 4, kind: input, shape index: {}]
  %s5 = inlined_call_operand.hbm [shape: f32[16,128], index: 5, kind: output, shape index: {}]
  %s6 = sld [smem:[#allocation0]]
  $region50: #{tpu_custom_call.1} parent=0
    _
  %s8 = ssub.s32 1, %s6
  %s9 = scalar_select 0, %s8, %s6
  $region1: #{tpu_custom_call.1} parent=0
    #allocation3 [shape = 'u8[8192]{0}', space=vmem, size = 0x2000, scoped, tag = 'input window, operand 0, single buffered']
    #allocation4 [shape = 's32[1]{0}', space=sflag, size = 0x4, scoped, tag = 'scoped memory for tpu_custom_call.1']
    #allocation5 [shape = 's32[1]{0}', space=sflag, size = 0x4, scoped, tag = 'scoped memory for tpu_custom_call.1']
    #allocation6 [shape = 'u8[65536]{0}', space=vmem, size = 0x10000, scoped, tag = 'input window, operand 1, single buffered']
    #allocation7 [shape = 's32[1]{0}', space=sflag, size = 0x4, scoped, tag = 'scoped memory for tpu_custom_call.1']
    #allocation8 [shape = 'u8[65536]{0}', space=vmem, size = 0x10000, scoped, tag = 'input window, operand 3, single buffered']
    #allocation9 [shape = 'u8[8192]{0}', space=vmem, size = 0x2000, scoped, tag = 'output window, operand 0, single buffered']
    %10 = vsyncpa [#allocation4], 0
    %11 = vsyncpa [#allocation7], 0
    %12 = vsyncpa [#allocation5], 0
    // Predicated region
    $region2: #{tpu_custom_call.1} parent=1 // pred_check
      _
    $region3: #{tpu_custom_call.1} parent=1 // pred_check_branch
      %14 = sbr.rel (0) target = $region5
    $region4: #{tpu_custom_call.1} parent=1 // pred_region
      %s16 = ssub.s32 256, 256
      %17 = vsyncadd [#allocation4], %s16
      %s18 = sshll.u32 [#allocation3], 4
      %s19 = int_to_ptr.vmem [resolvable:$true] %s18
      %24 = dma.hbm_to_vmem [thread:$0]  %s0, 256, %s19, [#allocation4], 128, 128, 8
    $region5: #{tpu_custom_call.1} parent=1 // pred_fallthru
      _
    // Predicated region
    $region6: #{tpu_custom_call.1} parent=1 // pred_check
      _
    $region7: #{tpu_custom_call.1} parent=1 // pred_check_branch
      %26 = sbr.rel (0) target = $region9
    $region8: #{tpu_custom_call.1} parent=1 // pred_region
      %s28 = ssub.s32 2048, 2048
      %29 = vsyncadd [#allocation7], %s28
      %s30 = sshll.u32 [#allocation6], 4
      %s31 = int_to_ptr.vmem [resolvable:$true] %s30
      %36 = dma.hbm_to_vmem [thread:$0]  %s1, 2048, %s31, [#allocation7], 128, 128, 8
    $region9: #{tpu_custom_call.1} parent=1 // pred_fallthru
      _
    // Predicated region
    $region10: #{tpu_custom_call.1} parent=1 // pred_check
      _
    $region11: #{tpu_custom_call.1} parent=1 // pred_check_branch
      %38 = sbr.rel (0) target = $region13
    $region12: #{tpu_custom_call.1} parent=1 // pred_region
      _
    $region13: #{tpu_custom_call.1} parent=1 // pred_fallthru
      _
    // Predicated region
    $region14: #{tpu_custom_call.1} parent=1 // pred_check
      _
    $region15: #{tpu_custom_call.1} parent=1 // pred_check_branch
      %40 = sbr.rel (0) target = $region17
    $region16: #{tpu_custom_call.1} parent=1 // pred_region
      %s42 = ssub.s32 2048, 2048
      %43 = vsyncadd [#allocation7], %s42
      %s44 = sshll.u32 [#allocation8], 4
      %s45 = int_to_ptr.vmem [resolvable:$true] %s44
      %50 = dma.hbm_to_vmem [thread:$0]  %s3, 2048, %s45, [#allocation7], 128, 128, 8
    $region17: #{tpu_custom_call.1} parent=1 // pred_fallthru
      _
    // Predicated region
    $region18: #{tpu_custom_call.1} parent=1 // pred_check
      _
    $region19: #{tpu_custom_call.1} parent=1 // pred_check_branch
      %52 = sbr.rel (0) target = $region21
    $region20: #{tpu_custom_call.1} parent=1 // pred_region
      _
    $region21: #{tpu_custom_call.1} parent=1 // pred_fallthru
      _
    // Predicated region
    $region22: #{tpu_custom_call.1} parent=1 // pred_check
      _
    $region23: #{tpu_custom_call.1} parent=1 // pred_check_branch
      %54 = sbr.rel (0) target = $region25
    $region24: #{tpu_custom_call.1} parent=1 // pred_region
      %55 = dma.done [#allocation4], 256
    $region25: #{tpu_custom_call.1} parent=1 // pred_fallthru
      _
    // Predicated region
    $region26: #{tpu_custom_call.1} parent=1 // pred_check
      _
    $region27: #{tpu_custom_call.1} parent=1 // pred_check_branch
      %57 = sbr.rel (0) target = $region29
    $region28: #{tpu_custom_call.1} parent=1 // pred_region
      %58 = dma.done [#allocation7], 2048
    $region29: #{tpu_custom_call.1} parent=1 // pred_fallthru
      _
    // Predicated region
    $region30: #{tpu_custom_call.1} parent=1 // pred_check
      _
    $region31: #{tpu_custom_call.1} parent=1 // pred_check_branch
      %60 = sbr.rel (0) target = $region33
    $region32: #{tpu_custom_call.1} parent=1 // pred_region
      %61 = dma.done [#allocation7], 2048
    $region33: #{tpu_custom_call.1} parent=1 // pred_fallthru
      _
    %p62 = scmp.eq.s32.totalorder 0, 0
    // Predicated region
    $region34: #{tpu_custom_call.1} parent=1 // pred_check
      %p63 = pneg %p62
    $region35: #{tpu_custom_call.1} parent=1 // pred_check_branch
      %65 = sbr.rel (%p63) target = $region37
    $region36: #{tpu_custom_call.1} parent=1 // pred_region
      %66 = vst [vmem:[#allocation2] sm:$0xff] 0.0
      %67 = vst [vmem:[#allocation2 + $0x8] sm:$0xff] 0.0
    $region37: #{tpu_custom_call.1} parent=1 // pred_fallthru
      _
    %v68 = vld [vmem:[#allocation2] sm:$0xff]
    %v69 = vld [vmem:[#allocation2 + $0x8] sm:$0xff]
    %v70 = vld [vmem:[#allocation3] sm:$0xff]
    %v71 = vld [vmem:[#allocation3 + $0x8] sm:$0xff]
    %v72 = vld [vmem:[#allocation6] sm:$0xff]
    %v73 = vld [vmem:[#allocation6 + $0x8] sm:$0xff]
    %v74 = vld [vmem:[#allocation6 + $0x10] sm:$0xff]
    %v75 = vld [vmem:[#allocation6 + $0x18] sm:$0xff]
    %v76 = vld [vmem:[#allocation6 + $0x20] sm:$0xff]
    %v77 = vld [vmem:[#allocation6 + $0x28] sm:$0xff]
    %v78 = vld [vmem:[#allocation6 + $0x30] sm:$0xff]
    %v79 = vld [vmem:[#allocation6 + $0x38] sm:$0xff]
    %v80 = vld [vmem:[#allocation6 + $0x40] sm:$0xff]
    %v81 = vld [vmem:[#allocation6 + $0x48] sm:$0xff]
    %v82 = vld [vmem:[#allocation6 + $0x50] sm:$0xff]
    %v83 = vld [vmem:[#allocation6 + $0x58] sm:$0xff]
    %v84 = vld [vmem:[#allocation6 + $0x60] sm:$0xff]
    %v85 = vld [vmem:[#allocation6 + $0x68] sm:$0xff]
    %v86 = vld [vmem:[#allocation6 + $0x70] sm:$0xff]
    %v87 = vld [vmem:[#allocation6 + $0x78] sm:$0xff]
    %88 = vmatprep.subr.mxu0 0.0
    %v89 = vand.u32 %v72, 4294901760
    %90 = vmatpush1.msra.mxu0 %v89
    %91 = vmatprep.subr.mxu0 0.0
    %v92 = vand.u32 %v73, 4294901760
    %93 = vmatpush1.msra.mxu0 %v92
    %94 = vmatprep.subr.mxu0 0.0
    %v95 = vand.u32 %v74, 4294901760
    %96 = vmatpush1.msra.mxu0 %v95
    %97 = vmatprep.subr.mxu0 0.0
    %v98 = vand.u32 %v75, 4294901760
    %99 = vmatpush1.msra.mxu0 %v98
    %100 = vmatprep.subr.mxu0 0.0
    %v101 = vand.u32 %v76, 4294901760
    %102 = vmatpush1.msra.mxu0 %v101
    %103 = vmatprep.subr.mxu0 0.0
    %v104 = vand.u32 %v77, 4294901760
    %105 = vmatpush1.msra.mxu0 %v104
    %106 = vmatprep.subr.mxu0 0.0
    %v107 = vand.u32 %v78, 4294901760
    %108 = vmatpush1.msra.mxu0 %v107
    %109 = vmatprep.subr.mxu0 0.0
    %v110 = vand.u32 %v79, 4294901760
    %111 = vmatpush1.msra.mxu0 %v110
    %112 = vmatprep.subr.mxu0 0.0
    %v113 = vand.u32 %v80, 4294901760
    %114 = vmatpush1.msra.mxu0 %v113
    %115 = vmatprep.subr.mxu0 0.0
    %v116 = vand.u32 %v81, 4294901760
    %117 = vmatpush1.msra.mxu0 %v116
    %118 = vmatprep.subr.mxu0 0.0
    %v119 = vand.u32 %v82, 4294901760
    %120 = vmatpush1.msra.mxu0 %v119
    %121 = vmatprep.subr.mxu0 0.0
    %v122 = vand.u32 %v83, 4294901760
    %123 = vmatpush1.msra.mxu0 %v122
    %124 = vmatprep.subr.mxu0 0.0
    %v125 = vand.u32 %v84, 4294901760
    %126 = vmatpush1.msra.mxu0 %v125
    %127 = vmatprep.subr.mxu0 0.0
    %v128 = vand.u32 %v85, 4294901760
    %129 = vmatpush1.msra.mxu0 %v128
    %130 = vmatprep.subr.mxu0 0.0
    %v131 = vand.u32 %v86, 4294901760
    %132 = vmatpush1.msra.mxu0 %v131
    %133 = vmatprep.subr.mxu0 0.0
    %v134 = vand.u32 %v87, 4294901760
    %135 = vmatpush1.msra.mxu0 %v134
    %136 = vmatprep.subr.mxu0 0.0
    %137 = vmatpush1.msra.mxu0 0.0
    %138 = vmatprep.subr.mxu0 0.0
    %139 = vmatpush1.msra.mxu0 0.0
    %140 = vmatprep.subr.mxu0 0.0
    %141 = vmatpush1.msra.mxu0 0.0
    %142 = vmatprep.subr.mxu0 0.0
    %143 = vmatpush1.msra.mxu0 0.0
    %144 = vmatprep.subr.mxu0 0.0
    %145 = vmatpush1.msra.mxu0 0.0
    %146 = vmatprep.subr.mxu0 0.0
    %147 = vmatpush1.msra.mxu0 0.0
    %148 = vmatprep.subr.mxu0 0.0
    %149 = vmatpush1.msra.mxu0 0.0
    %150 = vmatprep.subr.mxu0 0.0
    %151 = vmatpush1.msra.mxu0 0.0
    %152 = vmatprep.subr.mxu0 0.0
    %153 = vmatpush1.msra.mxu0 0.0
    %154 = vmatprep.subr.mxu0 0.0
    %155 = vmatpush1.msra.mxu0 0.0
    %156 = vmatprep.subr.mxu0 0.0
    %157 = vmatpush1.msra.mxu0 0.0
    %158 = vmatprep.subr.mxu0 0.0
    %159 = vmatpush1.msra.mxu0 0.0
    %160 = vmatprep.subr.mxu0 0.0
    %161 = vmatpush1.msra.mxu0 0.0
    %162 = vmatprep.subr.mxu0 0.0
    %163 = vmatpush1.msra.mxu0 0.0
    %164 = vmatprep.subr.mxu0 0.0
    %165 = vmatpush1.msra.mxu0 0.0
    %166 = vmatprep.subr.mxu0 0.0
    %167 = vmatpush1.msra.mxu0 0.0
    %168 = vmatprep.mubr.f32.mxu0 0.0
    %v169 = vand.u32 %v70, 4294901760
    %v170 = vsub.f32 %v70, %v169
    %v171 = vand.u32 %v170, 4294901760
    %v172 = vsub.f32 %v170, %v171
    %v173 = vand.u32 %v172, 4294901760
    %174 = vmatmul.mubr.f32.gmra.mrb[0].mxu0 %v173
    %v175 = vpop.f32.mrb[0].mxu0
    %v176 = vadd.f32 0.0, %v175
    %v177 = vpop.f32.mrb[0].mxu0
    %178 = vmatprep.mubr.f32.mxu0 0.0
    %v179 = vand.u32 %v71, 4294901760
    %v180 = vsub.f32 %v71, %v179
    %v181 = vand.u32 %v180, 4294901760
    %v182 = vsub.f32 %v180, %v181
    %v183 = vand.u32 %v182, 4294901760
    %184 = vmatmul.mubr.f32.gmra.mrb[0].mxu0 %v183
    %v185 = vpop.f32.mrb[0].mxu0
    %v186 = vadd.f32 0.0, %v185
    %v187 = vpop.f32.mrb[0].mxu0
    %188 = vdwg.mxu0
    %189 = vmatprep.subr.mxu0 0.0
    %v190 = vand.u32 %v72, 4294901760
    %v191 = vsub.f32 %v72, %v190
    %v192 = vand.u32 %v191, 4294901760
    %v193 = vsub.f32 %v191, %v192
    %v194 = vand.u32 %v193, 4294901760
    %195 = vmatpush1.msra.mxu0 %v194
    %196 = vmatprep.subr.mxu0 0.0
    %v197 = vand.u32 %v73, 4294901760
    %v198 = vsub.f32 %v73, %v197
    %v199 = vand.u32 %v198, 4294901760
    %v200 = vsub.f32 %v198, %v199
    %v201 = vand.u32 %v200, 4294901760
    %202 = vmatpush1.msra.mxu0 %v201
    %203 = vmatprep.subr.mxu0 0.0
    %v204 = vand.u32 %v74, 4294901760
    %v205 = vsub.f32 %v74, %v204
    %v206 = vand.u32 %v205, 4294901760
    %v207 = vsub.f32 %v205, %v206
    %v208 = vand.u32 %v207, 4294901760
    %209 = vmatpush1.msra.mxu0 %v208
    %210 = vmatprep.subr.mxu0 0.0
    %v211 = vand.u32 %v75, 4294901760
    %v212 = vsub.f32 %v75, %v211
    %v213 = vand.u32 %v212, 4294901760
    %v214 = vsub.f32 %v212, %v213
    %v215 = vand.u32 %v214, 4294901760
    %216 = vmatpush1.msra.mxu0 %v215
    %217 = vmatprep.subr.mxu0 0.0
    %v218 = vand.u32 %v76, 4294901760
    %v219 = vsub.f32 %v76, %v218
    %v220 = vand.u32 %v219, 4294901760
    %v221 = vsub.f32 %v219, %v220
    %v222 = vand.u32 %v221, 4294901760
    %223 = vmatpush1.msra.mxu0 %v222
    %224 = vmatprep.subr.mxu0 0.0
    %v225 = vand.u32 %v77, 4294901760
    %v226 = vsub.f32 %v77, %v225
    %v227 = vand.u32 %v226, 4294901760
    %v228 = vsub.f32 %v226, %v227
    %v229 = vand.u32 %v228, 4294901760
    %230 = vmatpush1.msra.mxu0 %v229
    %231 = vmatprep.subr.mxu0 0.0
    %v232 = vand.u32 %v78, 4294901760
    %v233 = vsub.f32 %v78, %v232
    %v234 = vand.u32 %v233, 4294901760
    %v235 = vsub.f32 %v233, %v234
    %v236 = vand.u32 %v235, 4294901760
    %237 = vmatpush1.msra.mxu0 %v236
    %238 = vmatprep.subr.mxu0 0.0
    %v239 = vand.u32 %v79, 4294901760
    %v240 = vsub.f32 %v79, %v239
    %v241 = vand.u32 %v240, 4294901760
    %v242 = vsub.f32 %v240, %v241
    %v243 = vand.u32 %v242, 4294901760
    %244 = vmatpush1.msra.mxu0 %v243
    %245 = vmatprep.subr.mxu0 0.0
    %v246 = vand.u32 %v80, 4294901760
    %v247 = vsub.f32 %v80, %v246
    %v248 = vand.u32 %v247, 4294901760
    %v249 = vsub.f32 %v247, %v248
    %v250 = vand.u32 %v249, 4294901760
    %251 = vmatpush1.msra.mxu0 %v250
    %252 = vmatprep.subr.mxu0 0.0
    %v253 = vand.u32 %v81, 4294901760
    %v254 = vsub.f32 %v81, %v253
    %v255 = vand.u32 %v254, 4294901760
    %v256 = vsub.f32 %v254, %v255
    %v257 = vand.u32 %v256, 4294901760
    %258 = vmatpush1.msra.mxu0 %v257
    %259 = vmatprep.subr.mxu0 0.0
    %v260 = vand.u32 %v82, 4294901760
    %v261 = vsub.f32 %v82, %v260
    %v262 = vand.u32 %v261, 4294901760
    %v263 = vsub.f32 %v261, %v262
    %v264 = vand.u32 %v263, 4294901760
    %265 = vmatpush1.msra.mxu0 %v264
    %266 = vmatprep.subr.mxu0 0.0
    %v267 = vand.u32 %v83, 4294901760
    %v268 = vsub.f32 %v83, %v267
    %v269 = vand.u32 %v268, 4294901760
    %v270 = vsub.f32 %v268, %v269
    %v271 = vand.u32 %v270, 4294901760
    %272 = vmatpush1.msra.mxu0 %v271
    %273 = vmatprep.subr.mxu0 0.0
    %v274 = vand.u32 %v84, 4294901760
    %v275 = vsub.f32 %v84, %v274
    %v276 = vand.u32 %v275, 4294901760
    %v277 = vsub.f32 %v275, %v276
    %v278 = vand.u32 %v277, 4294901760
    %279 = vmatpush1.msra.mxu0 %v278
    %280 = vmatprep.subr.mxu0 0.0
    %v281 = vand.u32 %v85, 4294901760
    %v282 = vsub.f32 %v85, %v281
    %v283 = vand.u32 %v282, 4294901760
    %v284 = vsub.f32 %v282, %v283
    %v285 = vand.u32 %v284, 4294901760
    %286 = vmatpush1.msra.mxu0 %v285
    %287 = vmatprep.subr.mxu0 0.0
    %v288 = vand.u32 %v86, 4294901760
    %v289 = vsub.f32 %v86, %v288
    %v290 = vand.u32 %v289, 4294901760
    %v291 = vsub.f32 %v289, %v290
    %v292 = vand.u32 %v291, 4294901760
    %293 = vmatpush1.msra.mxu0 %v292
    %294 = vmatprep.subr.mxu0 0.0
    %v295 = vand.u32 %v87, 4294901760
    %v296 = vsub.f32 %v87, %v295
    %v297 = vand.u32 %v296, 4294901760
    %v298 = vsub.f32 %v296, %v297
    %v299 = vand.u32 %v298, 4294901760
    %300 = vmatpush1.msra.mxu0 %v299
    %301 = vmatprep.subr.mxu0 0.0
    %302 = vmatpush1.msra.mxu0 0.0
    %303 = vmatprep.subr.mxu0 0.0
    %304 = vmatpush1.msra.mxu0 0.0
    %305 = vmatprep.subr.mxu0 0.0
    %306 = vmatpush1.msra.mxu0 0.0
    %307 = vmatprep.subr.mxu0 0.0
    %308 = vmatpush1.msra.mxu0 0.0
    %309 = vmatprep.subr.mxu0 0.0
    %310 = vmatpush1.msra.mxu0 0.0
    %311 = vmatprep.subr.mxu0 0.0
    %312 = vmatpush1.msra.mxu0 0.0
    %313 = vmatprep.subr.mxu0 0.0
    %314 = vmatpush1.msra.mxu0 0.0
    %315 = vmatprep.subr.mxu0 0.0
    %316 = vmatpush1.msra.mxu0 0.0
    %317 = vmatprep.subr.mxu0 0.0
    %318 = vmatpush1.msra.mxu0 0.0
    %319 = vmatprep.subr.mxu0 0.0
    %320 = vmatpush1.msra.mxu0 0.0
    %321 = vmatprep.subr.mxu0 0.0
    %322 = vmatpush1.msra.mxu0 0.0
    %323 = vmatprep.subr.mxu0 0.0
    %324 = vmatpush1.msra.mxu0 0.0
    %325 = vmatprep.subr.mxu0 0.0
    %326 = vmatpush1.msra.mxu0 0.0
    %327 = vmatprep.subr.mxu0 0.0
    %328 = vmatpush1.msra.mxu0 0.0
    %329 = vmatprep.subr.mxu0 0.0
    %330 = vmatpush1.msra.mxu0 0.0
    %331 = vmatprep.subr.mxu0 0.0
    %332 = vmatpush1.msra.mxu0 0.0
    %333 = vmatprep.mubr.f32.mxu0 0.0
    %v334 = vand.u32 %v70, 4294901760
    %335 = vmatmul.mubr.f32.gmra.mrb[0].mxu0 %v334
    %v336 = vpop.f32.mrb[0].mxu0
    %v337 = vadd.f32 %v176, %v336
    %v338 = vpop.f32.mrb[0].mxu0
    %339 = vmatprep.mubr.f32.mxu0 0.0
    %v340 = vand.u32 %v71, 4294901760
    %341 = vmatmul.mubr.f32.gmra.mrb[0].mxu0 %v340
    %v342 = vpop.f32.mrb[0].mxu0
    %v343 = vadd.f32 %v186, %v342
    %v344 = vpop.f32.mrb[0].mxu0
    %345 = vdwg.mxu0
    %346 = vmatprep.subr.mxu0 0.0
    %v347 = vand.u32 %v72, 4294901760
    %v348 = vsub.f32 %v72, %v347
    %349 = vmatpush1.msra.mxu0 %v348
    %350 = vmatprep.subr.mxu0 0.0
    %v351 = vand.u32 %v73, 4294901760
    %v352 = vsub.f32 %v73, %v351
    %353 = vmatpush1.msra.mxu0 %v352
    %354 = vmatprep.subr.mxu0 0.0
    %v355 = vand.u32 %v74, 4294901760
    %v356 = vsub.f32 %v74, %v355
    %357 = vmatpush1.msra.mxu0 %v356
    %358 = vmatprep.subr.mxu0 0.0
    %v359 = vand.u32 %v75, 4294901760
    %v360 = vsub.f32 %v75, %v359
    %361 = vmatpush1.msra.mxu0 %v360
    %362 = vmatprep.subr.mxu0 0.0
    %v363 = vand.u32 %v76, 4294901760
    %v364 = vsub.f32 %v76, %v363
    %365 = vmatpush1.msra.mxu0 %v364
    %366 = vmatprep.subr.mxu0 0.0
    %v367 = vand.u32 %v77, 4294901760
    %v368 = vsub.f32 %v77, %v367
    %369 = vmatpush1.msra.mxu0 %v368
    %370 = vmatprep.subr.mxu0 0.0
    %v371 = vand.u32 %v78, 4294901760
    %v372 = vsub.f32 %v78, %v371
    %373 = vmatpush1.msra.mxu0 %v372
    %374 = vmatprep.subr.mxu0 0.0
    %v375 = vand.u32 %v79, 4294901760
    %v376 = vsub.f32 %v79, %v375
    %377 = vmatpush1.msra.mxu0 %v376
    %378 = vmatprep.subr.mxu0 0.0
    %v379 = vand.u32 %v80, 4294901760
    %v380 = vsub.f32 %v80, %v379
    %381 = vmatpush1.msra.mxu0 %v380
    %382 = vmatprep.subr.mxu0 0.0
    %v383 = vand.u32 %v81, 4294901760
    %v384 = vsub.f32 %v81, %v383
    %385 = vmatpush1.msra.mxu0 %v384
    %386 = vmatprep.subr.mxu0 0.0
    %v387 = vand.u32 %v82, 4294901760
    %v388 = vsub.f32 %v82, %v387
    %389 = vmatpush1.msra.mxu0 %v388
    %390 = vmatprep.subr.mxu0 0.0
    %v391 = vand.u32 %v83, 4294901760
    %v392 = vsub.f32 %v83, %v391
    %393 = vmatpush1.msra.mxu0 %v392
    %394 = vmatprep.subr.mxu0 0.0
    %v395 = vand.u32 %v84, 4294901760
    %v396 = vsub.f32 %v84, %v395
    %397 = vmatpush1.msra.mxu0 %v396
    %398 = vmatprep.subr.mxu0 0.0
    %v399 = vand.u32 %v85, 4294901760
    %v400 = vsub.f32 %v85, %v399
    %401 = vmatpush1.msra.mxu0 %v400
    %402 = vmatprep.subr.mxu0 0.0
    %v403 = vand.u32 %v86, 4294901760
    %v404 = vsub.f32 %v86, %v403
    %405 = vmatpush1.msra.mxu0 %v404
    %406 = vmatprep.subr.mxu0 0.0
    %v407 = vand.u32 %v87, 4294901760
    %v408 = vsub.f32 %v87, %v407
    %409 = vmatpush1.msra.mxu0 %v408
    %410 = vmatprep.subr.mxu0 0.0
    %411 = vmatpush1.msra.mxu0 0.0
    %412 = vmatprep.subr.mxu0 0.0
    %413 = vmatpush1.msra.mxu0 0.0
    %414 = vmatprep.subr.mxu0 0.0
    %415 = vmatpush1.msra.mxu0 0.0
    %416 = vmatprep.subr.mxu0 0.0
    %417 = vmatpush1.msra.mxu0 0.0
    %418 = vmatprep.subr.mxu0 0.0
    %419 = vmatpush1.msra.mxu0 0.0
    %420 = vmatprep.subr.mxu0 0.0
    %421 = vmatpush1.msra.mxu0 0.0
    %422 = vmatprep.subr.mxu0 0.0
    %423 = vmatpush1.msra.mxu0 0.0
    %424 = vmatprep.subr.mxu0 0.0
    %425 = vmatpush1.msra.mxu0 0.0
    %426 = vmatprep.subr.mxu0 0.0
    %427 = vmatpush1.msra.mxu0 0.0
    %428 = vmatprep.subr.mxu0 0.0
    %429 = vmatpush1.msra.mxu0 0.0
    %430 = vmatprep.subr.mxu0 0.0
    %431 = vmatpush1.msra.mxu0 0.0
    %432 = vmatprep.subr.mxu0 0.0
    %433 = vmatpush1.msra.mxu0 0.0
    %434 = vmatprep.subr.mxu0 0.0
    %435 = vmatpush1.msra.mxu0 0.0
    %436 = vmatprep.subr.mxu0 0.0
    %437 = vmatpush1.msra.mxu0 0.0
    %438 = vmatprep.subr.mxu0 0.0
    %439 = vmatpush1.msra.mxu0 0.0
    %440 = vmatprep.subr.mxu0 0.0
    %441 = vmatpush1.msra.mxu0 0.0
    %442 = vmatprep.mubr.f32.mxu0 0.0
    %v443 = vand.u32 %v70, 4294901760
    %v444 = vsub.f32 %v70, %v443
    %445 = vmatmul.mubr.f32.gmra.mrb[0].mxu0 %v444
    %v446 = vpop.f32.mrb[0].mxu0
    %v447 = vadd.f32 %v337, %v446
    %v448 = vpop.f32.mrb[0].mxu0
    %449 = vmatprep.mubr.f32.mxu0 0.0
    %v450 = vand.u32 %v71, 4294901760
    %v451 = vsub.f32 %v71, %v450
    %452 = vmatmul.mubr.f32.gmra.mrb[0].mxu0 %v451
    %v453 = vpop.f32.mrb[0].mxu0
    %v454 = vadd.f32 %v343, %v453
    %v455 = vpop.f32.mrb[0].mxu0
    %456 = vdwg.mxu0
    %457 = vmatprep.subr.mxu0 0.0
    %v458 = vand.u32 %v72, 4294901760
    %459 = vmatpush1.msra.mxu0 %v458
    %460 = vmatprep.subr.mxu0 0.0
    %v461 = vand.u32 %v73, 4294901760
    %462 = vmatpush1.msra.mxu0 %v461
    %463 = vmatprep.subr.mxu0 0.0
    %v464 = vand.u32 %v74, 4294901760
    %465 = vmatpush1.msra.mxu0 %v464
    %466 = vmatprep.subr.mxu0 0.0
    %v467 = vand.u32 %v75, 4294901760
    %468 = vmatpush1.msra.mxu0 %v467
    %469 = vmatprep.subr.mxu0 0.0
    %v470 = vand.u32 %v76, 4294901760
    %471 = vmatpush1.msra.mxu0 %v470
    %472 = vmatprep.subr.mxu0 0.0
    %v473 = vand.u32 %v77, 4294901760
    %474 = vmatpush1.msra.mxu0 %v473
    %475 = vmatprep.subr.mxu0 0.0
    %v476 = vand.u32 %v78, 4294901760
    %477 = vmatpush1.msra.mxu0 %v476
    %478 = vmatprep.subr.mxu0 0.0
    %v479 = vand.u32 %v79, 4294901760
    %480 = vmatpush1.msra.mxu0 %v479
    %481 = vmatprep.subr.mxu0 0.0
    %v482 = vand.u32 %v80, 4294901760
    %483 = vmatpush1.msra.mxu0 %v482
    %484 = vmatprep.subr.mxu0 0.0
    %v485 = vand.u32 %v81, 4294901760
    %486 = vmatpush1.msra.mxu0 %v485
    %487 = vmatprep.subr.mxu0 0.0
    %v488 = vand.u32 %v82, 4294901760
    %489 = vmatpush1.msra.mxu0 %v488
    %490 = vmatprep.subr.mxu0 0.0
    %v491 = vand.u32 %v83, 4294901760
    %492 = vmatpush1.msra.mxu0 %v491
    %493 = vmatprep.subr.mxu0 0.0
    %v494 = vand.u32 %v84, 4294901760
    %495 = vmatpush1.msra.mxu0 %v494
    %496 = vmatprep.subr.mxu0 0.0
    %v497 = vand.u32 %v85, 4294901760
    %498 = vmatpush1.msra.mxu0 %v497
    %499 = vmatprep.subr.mxu0 0.0
    %v500 = vand.u32 %v86, 4294901760
    %501 = vmatpush1.msra.mxu0 %v500
    %502 = vmatprep.subr.mxu0 0.0
    %v503 = vand.u32 %v87, 4294901760
    %504 = vmatpush1.msra.mxu0 %v503
    %505 = vmatprep.subr.mxu0 0.0
    %506 = vmatpush1.msra.mxu0 0.0
    %507 = vmatprep.subr.mxu0 0.0
    %508 = vmatpush1.msra.mxu0 0.0
    %509 = vmatprep.subr.mxu0 0.0
    %510 = vmatpush1.msra.mxu0 0.0
    %511 = vmatprep.subr.mxu0 0.0
    %512 = vmatpush1.msra.mxu0 0.0
    %513 = vmatprep.subr.mxu0 0.0
    %514 = vmatpush1.msra.mxu0 0.0
    %515 = vmatprep.subr.mxu0 0.0
    %516 = vmatpush1.msra.mxu0 0.0
    %517 = vmatprep.subr.mxu0 0.0
    %518 = vmatpush1.msra.mxu0 0.0
    %519 = vmatprep.subr.mxu0 0.0
    %520 = vmatpush1.msra.mxu0 0.0
    %521 = vmatprep.subr.mxu0 0.0
    %522 = vmatpush1.msra.mxu0 0.0
    %523 = vmatprep.subr.mxu0 0.0
    %524 = vmatpush1.msra.mxu0 0.0
    %525 = vmatprep.subr.mxu0 0.0
    %526 = vmatpush1.msra.mxu0 0.0
    %527 = vmatprep.subr.mxu0 0.0
    %528 = vmatpush1.msra.mxu0 0.0
    %529 = vmatprep.subr.mxu0 0.0
    %530 = vmatpush1.msra.mxu0 0.0
    %531 = vmatprep.subr.mxu0 0.0
    %532 = vmatpush1.msra.mxu0 0.0
    %533 = vmatprep.subr.mxu0 0.0
    %534 = vmatpush1.msra.mxu0 0.0
    %535 = vmatprep.subr.mxu0 0.0
    %536 = vmatpush1.msra.mxu0 0.0
    %537 = vmatprep.mubr.f32.mxu0 0.0
    %v538 = vand.u32 %v70, 4294901760
    %v539 = vsub.f32 %v70, %v538
    %v540 = vand.u32 %v539, 4294901760
    %541 = vmatmul.mubr.f32.gmra.mrb[0].mxu0 %v540
    %v542 = vpop.f32.mrb[0].mxu0
    %v543 = vadd.f32 %v447, %v542
    %v544 = vpop.f32.mrb[0].mxu0
    %545 = vmatprep.mubr.f32.mxu0 0.0
    %v546 = vand.u32 %v71, 4294901760
    %v547 = vsub.f32 %v71, %v546
    %v548 = vand.u32 %v547, 4294901760
    %549 = vmatmul.mubr.f32.gmra.mrb[0].mxu0 %v548
    %v550 = vpop.f32.mrb[0].mxu0
    %v551 = vadd.f32 %v454, %v550
    %v552 = vpop.f32.mrb[0].mxu0
    %553 = vdwg.mxu0
    %554 = vmatprep.subr.mxu0 0.0
    %v555 = vand.u32 %v72, 4294901760
    %v556 = vsub.f32 %v72, %v555
    %v557 = vand.u32 %v556, 4294901760
    %558 = vmatpush1.msra.mxu0 %v557
    %559 = vmatprep.subr.mxu0 0.0
    %v560 = vand.u32 %v73, 4294901760
    %v561 = vsub.f32 %v73, %v560
    %v562 = vand.u32 %v561, 4294901760
    %563 = vmatpush1.msra.mxu0 %v562
    %564 = vmatprep.subr.mxu0 0.0
    %v565 = vand.u32 %v74, 4294901760
    %v566 = vsub.f32 %v74, %v565
    %v567 = vand.u32 %v566, 4294901760
    %568 = vmatpush1.msra.mxu0 %v567
    %569 = vmatprep.subr.mxu0 0.0
    %v570 = vand.u32 %v75, 4294901760
    %v571 = vsub.f32 %v75, %v570
    %v572 = vand.u32 %v571, 4294901760
    %573 = vmatpush1.msra.mxu0 %v572
    %574 = vmatprep.subr.mxu0 0.0
    %v575 = vand.u32 %v76, 4294901760
    %v576 = vsub.f32 %v76, %v575
    %v577 = vand.u32 %v576, 4294901760
    %578 = vmatpush1.msra.mxu0 %v577
    %579 = vmatprep.subr.mxu0 0.0
    %v580 = vand.u32 %v77, 4294901760
    %v581 = vsub.f32 %v77, %v580
    %v582 = vand.u32 %v581, 4294901760
    %583 = vmatpush1.msra.mxu0 %v582
    %584 = vmatprep.subr.mxu0 0.0
    %v585 = vand.u32 %v78, 4294901760
    %v586 = vsub.f32 %v78, %v585
    %v587 = vand.u32 %v586, 4294901760
    %588 = vmatpush1.msra.mxu0 %v587
    %589 = vmatprep.subr.mxu0 0.0
    %v590 = vand.u32 %v79, 4294901760
    %v591 = vsub.f32 %v79, %v590
    %v592 = vand.u32 %v591, 4294901760
    %593 = vmatpush1.msra.mxu0 %v592
    %594 = vmatprep.subr.mxu0 0.0
    %v595 = vand.u32 %v80, 4294901760
    %v596 = vsub.f32 %v80, %v595
    %v597 = vand.u32 %v596, 4294901760
    %598 = vmatpush1.msra.mxu0 %v597
    %599 = vmatprep.subr.mxu0 0.0
    %v600 = vand.u32 %v81, 4294901760
    %v601 = vsub.f32 %v81, %v600
    %v602 = vand.u32 %v601, 4294901760
    %603 = vmatpush1.msra.mxu0 %v602
    %604 = vmatprep.subr.mxu0 0.0
    %v605 = vand.u32 %v82, 4294901760
    %v606 = vsub.f32 %v82, %v605
    %v607 = vand.u32 %v606, 4294901760
    %608 = vmatpush1.msra.mxu0 %v607
    %609 = vmatprep.subr.mxu0 0.0
    %v610 = vand.u32 %v83, 4294901760
    %v611 = vsub.f32 %v83, %v610
    %v612 = vand.u32 %v611, 4294901760
    %613 = vmatpush1.msra.mxu0 %v612
    %614 = vmatprep.subr.mxu0 0.0
    %v615 = vand.u32 %v84, 4294901760
    %v616 = vsub.f32 %v84, %v615
    %v617 = vand.u32 %v616, 4294901760
    %618 = vmatpush1.msra.mxu0 %v617
    %619 = vmatprep.subr.mxu0 0.0
    %v620 = vand.u32 %v85, 4294901760
    %v621 = vsub.f32 %v85, %v620
    %v622 = vand.u32 %v621, 4294901760
    %623 = vmatpush1.msra.mxu0 %v622
    %624 = vmatprep.subr.mxu0 0.0
    %v625 = vand.u32 %v86, 4294901760
    %v626 = vsub.f32 %v86, %v625
    %v627 = vand.u32 %v626, 4294901760
    %628 = vmatpush1.msra.mxu0 %v627
    %629 = vmatprep.subr.mxu0 0.0
    %v630 = vand.u32 %v87, 4294901760
    %v631 = vsub.f32 %v87, %v630
    %v632 = vand.u32 %v631, 4294901760
    %633 = vmatpush1.msra.mxu0 %v632
    %634 = vmatprep.subr.mxu0 0.0
    %635 = vmatpush1.msra.mxu0 0.0
    %636 = vmatprep.subr.mxu0 0.0
    %637 = vmatpush1.msra.mxu0 0.0
    %638 = vmatprep.subr.mxu0 0.0
    %639 = vmatpush1.msra.mxu0 0.0
    %640 = vmatprep.subr.mxu0 0.0
    %641 = vmatpush1.msra.mxu0 0.0
    %642 = vmatprep.subr.mxu0 0.0
    %643 = vmatpush1.msra.mxu0 0.0
    %644 = vmatprep.subr.mxu0 0.0
    %645 = vmatpush1.msra.mxu0 0.0
    %646 = vmatprep.subr.mxu0 0.0
    %647 = vmatpush1.msra.mxu0 0.0
    %648 = vmatprep.subr.mxu0 0.0
    %649 = vmatpush1.msra.mxu0 0.0
    %650 = vmatprep.subr.mxu0 0.0
    %651 = vmatpush1.msra.mxu0 0.0
    %652 = vmatprep.subr.mxu0 0.0
    %653 = vmatpush1.msra.mxu0 0.0
    %654 = vmatprep.subr.mxu0 0.0
    %655 = vmatpush1.msra.mxu0 0.0
    %656 = vmatprep.subr.mxu0 0.0
    %657 = vmatpush1.msra.mxu0 0.0
    %658 = vmatprep.subr.mxu0 0.0
    %659 = vmatpush1.msra.mxu0 0.0
    %660 = vmatprep.subr.mxu0 0.0
    %661 = vmatpush1.msra.mxu0 0.0
    %662 = vmatprep.subr.mxu0 0.0
    %663 = vmatpush1.msra.mxu0 0.0
    %664 = vmatprep.subr.mxu0 0.0
    %665 = vmatpush1.msra.mxu0 0.0
    %666 = vmatprep.mubr.f32.mxu0 0.0
    %v667 = vand.u32 %v70, 4294901760
    %668 = vmatmul.mubr.f32.gmra.mrb[0].mxu0 %v667
    %v669 = vpop.f32.mrb[0].mxu0
    %v670 = vadd.f32 %v543, %v669
    %v671 = vpop.f32.mrb[0].mxu0
    %672 = vmatprep.mubr.f32.mxu0 0.0
    %v673 = vand.u32 %v71, 4294901760
    %674 = vmatmul.mubr.f32.gmra.mrb[0].mxu0 %v673
    %v675 = vpop.f32.mrb[0].mxu0
    %v676 = vadd.f32 %v551, %v675
    %v677 = vpop.f32.mrb[0].mxu0
    %678 = vdwg.mxu0
    %679 = vmatprep.subr.mxu0 0.0
    %v680 = vand.u32 %v72, 4294901760
    %681 = vmatpush1.msra.mxu0 %v680
    %682 = vmatprep.subr.mxu0 0.0
    %v683 = vand.u32 %v73, 4294901760
    %684 = vmatpush1.msra.mxu0 %v683
    %685 = vmatprep.subr.mxu0 0.0
    %v686 = vand.u32 %v74, 4294901760
    %687 = vmatpush1.msra.mxu0 %v686
    %688 = vmatprep.subr.mxu0 0.0
    %v689 = vand.u32 %v75, 4294901760
    %690 = vmatpush1.msra.mxu0 %v689
    %691 = vmatprep.subr.mxu0 0.0
    %v692 = vand.u32 %v76, 4294901760
    %693 = vmatpush1.msra.mxu0 %v692
    %694 = vmatprep.subr.mxu0 0.0
    %v695 = vand.u32 %v77, 4294901760
    %696 = vmatpush1.msra.mxu0 %v695
    %697 = vmatprep.subr.mxu0 0.0
    %v698 = vand.u32 %v78, 4294901760
    %699 = vmatpush1.msra.mxu0 %v698
    %700 = vmatprep.subr.mxu0 0.0
    %v701 = vand.u32 %v79, 4294901760
    %702 = vmatpush1.msra.mxu0 %v701
    %703 = vmatprep.subr.mxu0 0.0
    %v704 = vand.u32 %v80, 4294901760
    %705 = vmatpush1.msra.mxu0 %v704
    %706 = vmatprep.subr.mxu0 0.0
    %v707 = vand.u32 %v81, 4294901760
    %708 = vmatpush1.msra.mxu0 %v707
    %709 = vmatprep.subr.mxu0 0.0
    %v710 = vand.u32 %v82, 4294901760
    %711 = vmatpush1.msra.mxu0 %v710
    %712 = vmatprep.subr.mxu0 0.0
    %v713 = vand.u32 %v83, 4294901760
    %714 = vmatpush1.msra.mxu0 %v713
    %715 = vmatprep.subr.mxu0 0.0
    %v716 = vand.u32 %v84, 4294901760
    %717 = vmatpush1.msra.mxu0 %v716
    %718 = vmatprep.subr.mxu0 0.0
    %v719 = vand.u32 %v85, 4294901760
    %720 = vmatpush1.msra.mxu0 %v719
    %721 = vmatprep.subr.mxu0 0.0
    %v722 = vand.u32 %v86, 4294901760
    %723 = vmatpush1.msra.mxu0 %v722
    %724 = vmatprep.subr.mxu0 0.0
    %v725 = vand.u32 %v87, 4294901760
    %726 = vmatpush1.msra.mxu0 %v725
    %727 = vmatprep.subr.mxu0 0.0
    %728 = vmatpush1.msra.mxu0 0.0
    %729 = vmatprep.subr.mxu0 0.0
    %730 = vmatpush1.msra.mxu0 0.0
    %731 = vmatprep.subr.mxu0 0.0
    %732 = vmatpush1.msra.mxu0 0.0
    %733 = vmatprep.subr.mxu0 0.0
    %734 = vmatpush1.msra.mxu0 0.0
    %735 = vmatprep.subr.mxu0 0.0
    %736 = vmatpush1.msra.mxu0 0.0
    %737 = vmatprep.subr.mxu0 0.0
    %738 = vmatpush1.msra.mxu0 0.0
    %739 = vmatprep.subr.mxu0 0.0
    %740 = vmatpush1.msra.mxu0 0.0
    %741 = vmatprep.subr.mxu0 0.0
    %742 = vmatpush1.msra.mxu0 0.0
    %743 = vmatprep.subr.mxu0 0.0
    %744 = vmatpush1.msra.mxu0 0.0
    %745 = vmatprep.subr.mxu0 0.0
    %746 = vmatpush1.msra.mxu0 0.0
    %747 = vmatprep.subr.mxu0 0.0
    %748 = vmatpush1.msra.mxu0 0.0
    %749 = vmatprep.subr.mxu0 0.0
    %750 = vmatpush1.msra.mxu0 0.0
    %751 = vmatprep.subr.mxu0 0.0
    %752 = vmatpush1.msra.mxu0 0.0
    %753 = vmatprep.subr.mxu0 0.0
    %754 = vmatpush1.msra.mxu0 0.0
    %755 = vmatprep.subr.mxu0 0.0
    %756 = vmatpush1.msra.mxu0 0.0
    %757 = vmatprep.subr.mxu0 0.0
    %758 = vmatpush1.msra.mxu0 0.0
    %759 = vmatprep.mubr.f32.mxu0 0.0
    %v760 = vand.u32 %v70, 4294901760
    %761 = vmatmul.mubr.f32.gmra.mrb[0].mxu0 %v760
    %v762 = vpop.f32.mrb[0].mxu0
    %v763 = vadd.f32 %v670, %v762
    %v764 = vpop.f32.mrb[0].mxu0
    %765 = vmatprep.mubr.f32.mxu0 0.0
    %v766 = vand.u32 %v71, 4294901760
    %767 = vmatmul.mubr.f32.gmra.mrb[0].mxu0 %v766
    %v768 = vpop.f32.mrb[0].mxu0
    %v769 = vadd.f32 %v676, %v768
    %v770 = vpop.f32.mrb[0].mxu0
    %771 = vdwg.mxu0
    %v772 = vadd.f32 %v68, %v763
    %v773 = vadd.f32 %v69, %v769
    %774 = vst [vmem:[#allocation2] sm:$0xff] %v772
    %775 = vst [vmem:[#allocation2 + $0x8] sm:$0xff] %v773
    // Predicated region
    $region38: #{tpu_custom_call.1} parent=1 // pred_check
      %p776 = pneg %p62
    $region39: #{tpu_custom_call.1} parent=1 // pred_check_branch
      %778 = sbr.rel (%p776) target = $region41
    $region40: #{tpu_custom_call.1} parent=1 // pred_region
      %v779 = vld [vmem:[#allocation2] sm:$0xff]
      %v780 = vld [vmem:[#allocation2 + $0x8] sm:$0xff]
      %v781 = vld [vmem:[%s2] sm:$0x1]
      %v783 = vlaneseq
      %v784 = vshrl.u32 %v783, 7
      %v785 = vsub.s32 0, %v784
      %v786 = vrot.slane %v781, %v785
      %v788 = vadd.f32 %v779, %v786
      %v789 = vadd.f32 %v780, %v786
      %v790 = vmax.f32 %v788, 0.0
      %v791 = vmax.f32 %v789, 0.0
      %v792 = vld [vmem:[#allocation8] sm:$0xff]
      %v793 = vld [vmem:[#allocation8 + $0x8] sm:$0xff]
      %v794 = vld [vmem:[#allocation8 + $0x10] sm:$0xff]
      %v795 = vld [vmem:[#allocation8 + $0x18] sm:$0xff]
      %v796 = vld [vmem:[#allocation8 + $0x20] sm:$0xff]
      %v797 = vld [vmem:[#allocation8 + $0x28] sm:$0xff]
      %v798 = vld [vmem:[#allocation8 + $0x30] sm:$0xff]
      %v799 = vld [vmem:[#allocation8 + $0x38] sm:$0xff]
      %v800 = vld [vmem:[#allocation8 + $0x40] sm:$0xff]
      %v801 = vld [vmem:[#allocation8 + $0x48] sm:$0xff]
      %v802 = vld [vmem:[#allocation8 + $0x50] sm:$0xff]
      %v803 = vld [vmem:[#allocation8 + $0x58] sm:$0xff]
      %v804 = vld [vmem:[#allocation8 + $0x60] sm:$0xff]
      %v805 = vld [vmem:[#allocation8 + $0x68] sm:$0xff]
      %v806 = vld [vmem:[#allocation8 + $0x70] sm:$0xff]
      %v807 = vld [vmem:[#allocation8 + $0x78] sm:$0xff]
      %v808 = vld [vmem:[%s4] sm:$0x1]
      %v810 = vlaneseq
      %v811 = vshrl.u32 %v810, 7
      %v812 = vsub.s32 0, %v811
      %v813 = vrot.slane %v808, %v812
      %815 = vmatprep.subr.mxu0 0.0
      %v816 = vand.u32 %v792, 4294901760
      %817 = vmatpush1.msra.mxu0 %v816
      %818 = vmatprep.subr.mxu0 0.0
      %v819 = vand.u32 %v793, 4294901760
      %820 = vmatpush1.msra.mxu0 %v819
      %821 = vmatprep.subr.mxu0 0.0
      %v822 = vand.u32 %v794, 4294901760
      %823 = vmatpush1.msra.mxu0 %v822
      %824 = vmatprep.subr.mxu0 0.0
      %v825 = vand.u32 %v795, 4294901760
      %826 = vmatpush1.msra.mxu0 %v825
      %827 = vmatprep.subr.mxu0 0.0
      %v828 = vand.u32 %v796, 4294901760
      %829 = vmatpush1.msra.mxu0 %v828
      %830 = vmatprep.subr.mxu0 0.0
      %v831 = vand.u32 %v797, 4294901760
      %832 = vmatpush1.msra.mxu0 %v831
      %833 = vmatprep.subr.mxu0 0.0
      %v834 = vand.u32 %v798, 4294901760
      %835 = vmatpush1.msra.mxu0 %v834
      %836 = vmatprep.subr.mxu0 0.0
      %v837 = vand.u32 %v799, 4294901760
      %838 = vmatpush1.msra.mxu0 %v837
      %839 = vmatprep.subr.mxu0 0.0
      %v840 = vand.u32 %v800, 4294901760
      %841 = vmatpush1.msra.mxu0 %v840
      %842 = vmatprep.subr.mxu0 0.0
      %v843 = vand.u32 %v801, 4294901760
      %844 = vmatpush1.msra.mxu0 %v843
      %845 = vmatprep.subr.mxu0 0.0
      %v846 = vand.u32 %v802, 4294901760
      %847 = vmatpush1.msra.mxu0 %v846
      %848 = vmatprep.subr.mxu0 0.0
      %v849 = vand.u32 %v803, 4294901760
      %850 = vmatpush1.msra.mxu0 %v849
      %851 = vmatprep.subr.mxu0 0.0
      %v852 = vand.u32 %v804, 4294901760
      %853 = vmatpush1.msra.mxu0 %v852
      %854 = vmatprep.subr.mxu0 0.0
      %v855 = vand.u32 %v805, 4294901760
      %856 = vmatpush1.msra.mxu0 %v855
      %857 = vmatprep.subr.mxu0 0.0
      %v858 = vand.u32 %v806, 4294901760
      %859 = vmatpush1.msra.mxu0 %v858
      %860 = vmatprep.subr.mxu0 0.0
      %v861 = vand.u32 %v807, 4294901760
      %862 = vmatpush1.msra.mxu0 %v861
      %863 = vmatprep.subr.mxu0 0.0
      %864 = vmatpush1.msra.mxu0 0.0
      %865 = vmatprep.subr.mxu0 0.0
      %866 = vmatpush1.msra.mxu0 0.0
      %867 = vmatprep.subr.mxu0 0.0
      %868 = vmatpush1.msra.mxu0 0.0
      %869 = vmatprep.subr.mxu0 0.0
      %870 = vmatpush1.msra.mxu0 0.0
      %871 = vmatprep.subr.mxu0 0.0
      %872 = vmatpush1.msra.mxu0 0.0
      %873 = vmatprep.subr.mxu0 0.0
      %874 = vmatpush1.msra.mxu0 0.0
      %875 = vmatprep.subr.mxu0 0.0
      %876 = vmatpush1.msra.mxu0 0.0
      %877 = vmatprep.subr.mxu0 0.0
      %878 = vmatpush1.msra.mxu0 0.0
      %879 = vmatprep.subr.mxu0 0.0
      %880 = vmatpush1.msra.mxu0 0.0
      %881 = vmatprep.subr.mxu0 0.0
      %882 = vmatpush1.msra.mxu0 0.0
      %883 = vmatprep.subr.mxu0 0.0
      %884 = vmatpush1.msra.mxu0 0.0
      %885 = vmatprep.subr.mxu0 0.0
      %886 = vmatpush1.msra.mxu0 0.0
      %887 = vmatprep.subr.mxu0 0.0
      %888 = vmatpush1.msra.mxu0 0.0
      %889 = vmatprep.subr.mxu0 0.0
      %890 = vmatpush1.msra.mxu0 0.0
      %891 = vmatprep.subr.mxu0 0.0
      %892 = vmatpush1.msra.mxu0 0.0
      %893 = vmatprep.subr.mxu0 0.0
      %894 = vmatpush1.msra.mxu0 0.0
      %895 = vmatprep.mubr.f32.mxu0 0.0
      %v896 = vand.u32 %v790, 4294901760
      %v897 = vsub.f32 %v790, %v896
      %v898 = vand.u32 %v897, 4294901760
      %v899 = vsub.f32 %v897, %v898
      %v900 = vand.u32 %v899, 4294901760
      %901 = vmatmul.mubr.f32.gmra.mrb[0].mxu0 %v900
      %v902 = vpop.f32.mrb[0].mxu0
      %v903 = vadd.f32 %v813, %v902
      %v904 = vpop.f32.mrb[0].mxu0
      %905 = vmatprep.mubr.f32.mxu0 0.0
      %v906 = vand.u32 %v791, 4294901760
      %v907 = vsub.f32 %v791, %v906
      %v908 = vand.u32 %v907, 4294901760
      %v909 = vsub.f32 %v907, %v908
      %v910 = vand.u32 %v909, 4294901760
      %911 = vmatmul.mubr.f32.gmra.mrb[0].mxu0 %v910
      %v912 = vpop.f32.mrb[0].mxu0
      %v913 = vadd.f32 %v813, %v912
      %v914 = vpop.f32.mrb[0].mxu0
      %915 = vdwg.mxu0
      %916 = vmatprep.subr.mxu0 0.0
      %v917 = vand.u32 %v792, 4294901760
      %v918 = vsub.f32 %v792, %v917
      %v919 = vand.u32 %v918, 4294901760
      %v920 = vsub.f32 %v918, %v919
      %v921 = vand.u32 %v920, 4294901760
      %922 = vmatpush1.msra.mxu0 %v921
      %923 = vmatprep.subr.mxu0 0.0
      %v924 = vand.u32 %v793, 4294901760
      %v925 = vsub.f32 %v793, %v924
      %v926 = vand.u32 %v925, 4294901760
      %v927 = vsub.f32 %v925, %v926
      %v928 = vand.u32 %v927, 4294901760
      %929 = vmatpush1.msra.mxu0 %v928
      %930 = vmatprep.subr.mxu0 0.0
      %v931 = vand.u32 %v794, 4294901760
      %v932 = vsub.f32 %v794, %v931
      %v933 = vand.u32 %v932, 4294901760
      %v934 = vsub.f32 %v932, %v933
      %v935 = vand.u32 %v934, 4294901760
      %936 = vmatpush1.msra.mxu0 %v935
      %937 = vmatprep.subr.mxu0 0.0
      %v938 = vand.u32 %v795, 4294901760
      %v939 = vsub.f32 %v795, %v938
      %v940 = vand.u32 %v939, 4294901760
      %v941 = vsub.f32 %v939, %v940
      %v942 = vand.u32 %v941, 4294901760
      %943 = vmatpush1.msra.mxu0 %v942
      %944 = vmatprep.subr.mxu0 0.0
      %v945 = vand.u32 %v796, 4294901760
      %v946 = vsub.f32 %v796, %v945
      %v947 = vand.u32 %v946, 4294901760
      %v948 = vsub.f32 %v946, %v947
      %v949 = vand.u32 %v948, 4294901760
      %950 = vmatpush1.msra.mxu0 %v949
      %951 = vmatprep.subr.mxu0 0.0
      %v952 = vand.u32 %v797, 4294901760
      %v953 = vsub.f32 %v797, %v952
      %v954 = vand.u32 %v953, 4294901760
      %v955 = vsub.f32 %v953, %v954
      %v956 = vand.u32 %v955, 4294901760
      %957 = vmatpush1.msra.mxu0 %v956
      %958 = vmatprep.subr.mxu0 0.0
      %v959 = vand.u32 %v798, 4294901760
      %v960 = vsub.f32 %v798, %v959
      %v961 = vand.u32 %v960, 4294901760
      %v962 = vsub.f32 %v960, %v961
      %v963 = vand.u32 %v962, 4294901760
      %964 = vmatpush1.msra.mxu0 %v963
      %965 = vmatprep.subr.mxu0 0.0
      %v966 = vand.u32 %v799, 4294901760
      %v967 = vsub.f32 %v799, %v966
      %v968 = vand.u32 %v967, 4294901760
      %v969 = vsub.f32 %v967, %v968
      %v970 = vand.u32 %v969, 4294901760
      %971 = vmatpush1.msra.mxu0 %v970
      %972 = vmatprep.subr.mxu0 0.0
      %v973 = vand.u32 %v800, 4294901760
      %v974 = vsub.f32 %v800, %v973
      %v975 = vand.u32 %v974, 4294901760
      %v976 = vsub.f32 %v974, %v975
      %v977 = vand.u32 %v976, 4294901760
      %978 = vmatpush1.msra.mxu0 %v977
      %979 = vmatprep.subr.mxu0 0.0
      %v980 = vand.u32 %v801, 4294901760
      %v981 = vsub.f32 %v801, %v980
      %v982 = vand.u32 %v981, 4294901760
      %v983 = vsub.f32 %v981, %v982
      %v984 = vand.u32 %v983, 4294901760
      %985 = vmatpush1.msra.mxu0 %v984
      %986 = vmatprep.subr.mxu0 0.0
      %v987 = vand.u32 %v802, 4294901760
      %v988 = vsub.f32 %v802, %v987
      %v989 = vand.u32 %v988, 4294901760
      %v990 = vsub.f32 %v988, %v989
      %v991 = vand.u32 %v990, 4294901760
      %992 = vmatpush1.msra.mxu0 %v991
      %993 = vmatprep.subr.mxu0 0.0
      %v994 = vand.u32 %v803, 4294901760
      %v995 = vsub.f32 %v803, %v994
      %v996 = vand.u32 %v995, 4294901760
      %v997 = vsub.f32 %v995, %v996
      %v998 = vand.u32 %v997, 4294901760
      %999 = vmatpush1.msra.mxu0 %v998
      %1000 = vmatprep.subr.mxu0 0.0
      %v1001 = vand.u32 %v804, 4294901760
      %v1002 = vsub.f32 %v804, %v1001
      %v1003 = vand.u32 %v1002, 4294901760
      %v1004 = vsub.f32 %v1002, %v1003
      %v1005 = vand.u32 %v1004, 4294901760
      %1006 = vmatpush1.msra.mxu0 %v1005
      %1007 = vmatprep.subr.mxu0 0.0
      %v1008 = vand.u32 %v805, 4294901760
      %v1009 = vsub.f32 %v805, %v1008
      %v1010 = vand.u32 %v1009, 4294901760
      %v1011 = vsub.f32 %v1009, %v1010
      %v1012 = vand.u32 %v1011, 4294901760
      %1013 = vmatpush1.msra.mxu0 %v1012
      %1014 = vmatprep.subr.mxu0 0.0
      %v1015 = vand.u32 %v806, 4294901760
      %v1016 = vsub.f32 %v806, %v1015
      %v1017 = vand.u32 %v1016, 4294901760
      %v1018 = vsub.f32 %v1016, %v1017
      %v1019 = vand.u32 %v1018, 4294901760
      %1020 = vmatpush1.msra.mxu0 %v1019
      %1021 = vmatprep.subr.mxu0 0.0
      %v1022 = vand.u32 %v807, 4294901760
      %v1023 = vsub.f32 %v807, %v1022
      %v1024 = vand.u32 %v1023, 4294901760
      %v1025 = vsub.f32 %v1023, %v1024
      %v1026 = vand.u32 %v1025, 4294901760
      %1027 = vmatpush1.msra.mxu0 %v1026
      %1028 = vmatprep.subr.mxu0 0.0
      %1029 = vmatpush1.msra.mxu0 0.0
      %1030 = vmatprep.subr.mxu0 0.0
      %1031 = vmatpush1.msra.mxu0 0.0
      %1032 = vmatprep.subr.mxu0 0.0
      %1033 = vmatpush1.msra.mxu0 0.0
      %1034 = vmatprep.subr.mxu0 0.0
      %1035 = vmatpush1.msra.mxu0 0.0
      %1036 = vmatprep.subr.mxu0 0.0
      %1037 = vmatpush1.msra.mxu0 0.0
      %1038 = vmatprep.subr.mxu0 0.0
      %1039 = vmatpush1.msra.mxu0 0.0
      %1040 = vmatprep.subr.mxu0 0.0
      %1041 = vmatpush1.msra.mxu0 0.0
      %1042 = vmatprep.subr.mxu0 0.0
      %1043 = vmatpush1.msra.mxu0 0.0
      %1044 = vmatprep.subr.mxu0 0.0
      %1045 = vmatpush1.msra.mxu0 0.0
      %1046 = vmatprep.subr.mxu0 0.0
      %1047 = vmatpush1.msra.mxu0 0.0
      %1048 = vmatprep.subr.mxu0 0.0
      %1049 = vmatpush1.msra.mxu0 0.0
      %1050 = vmatprep.subr.mxu0 0.0
      %1051 = vmatpush1.msra.mxu0 0.0
      %1052 = vmatprep.subr.mxu0 0.0
      %1053 = vmatpush1.msra.mxu0 0.0
      %1054 = vmatprep.subr.mxu0 0.0
      %1055 = vmatpush1.msra.mxu0 0.0
      %1056 = vmatprep.subr.mxu0 0.0
      %1057 = vmatpush1.msra.mxu0 0.0
      %1058 = vmatprep.subr.mxu0 0.0
      %1059 = vmatpush1.msra.mxu0 0.0
      %1060 = vmatprep.mubr.f32.mxu0 0.0
      %v1061 = vand.u32 %v790, 4294901760
      %1062 = vmatmul.mubr.f32.gmra.mrb[0].mxu0 %v1061
      %v1063 = vpop.f32.mrb[0].mxu0
      %v1064 = vadd.f32 %v903, %v1063
      %v1065 = vpop.f32.mrb[0].mxu0
      %1066 = vmatprep.mubr.f32.mxu0 0.0
      %v1067 = vand.u32 %v791, 4294901760
      %1068 = vmatmul.mubr.f32.gmra.mrb[0].mxu0 %v1067
      %v1069 = vpop.f32.mrb[0].mxu0
      %v1070 = vadd.f32 %v913, %v1069
      %v1071 = vpop.f32.mrb[0].mxu0
      %1072 = vdwg.mxu0
      %1073 = vmatprep.subr.mxu0 0.0
      %v1074 = vand.u32 %v792, 4294901760
      %v1075 = vsub.f32 %v792, %v1074
      %1076 = vmatpush1.msra.mxu0 %v1075
      %1077 = vmatprep.subr.mxu0 0.0
      %v1078 = vand.u32 %v793, 4294901760
      %v1079 = vsub.f32 %v793, %v1078
      %1080 = vmatpush1.msra.mxu0 %v1079
      %1081 = vmatprep.subr.mxu0 0.0
      %v1082 = vand.u32 %v794, 4294901760
      %v1083 = vsub.f32 %v794, %v1082
      %1084 = vmatpush1.msra.mxu0 %v1083
      %1085 = vmatprep.subr.mxu0 0.0
      %v1086 = vand.u32 %v795, 4294901760
      %v1087 = vsub.f32 %v795, %v1086
      %1088 = vmatpush1.msra.mxu0 %v1087
      %1089 = vmatprep.subr.mxu0 0.0
      %v1090 = vand.u32 %v796, 4294901760
      %v1091 = vsub.f32 %v796, %v1090
      %1092 = vmatpush1.msra.mxu0 %v1091
      %1093 = vmatprep.subr.mxu0 0.0
      %v1094 = vand.u32 %v797, 4294901760
      %v1095 = vsub.f32 %v797, %v1094
      %1096 = vmatpush1.msra.mxu0 %v1095
      %1097 = vmatprep.subr.mxu0 0.0
      %v1098 = vand.u32 %v798, 4294901760
      %v1099 = vsub.f32 %v798, %v1098
      %1100 = vmatpush1.msra.mxu0 %v1099
      %1101 = vmatprep.subr.mxu0 0.0
      %v1102 = vand.u32 %v799, 4294901760
      %v1103 = vsub.f32 %v799, %v1102
      %1104 = vmatpush1.msra.mxu0 %v1103
      %1105 = vmatprep.subr.mxu0 0.0
      %v1106 = vand.u32 %v800, 4294901760
      %v1107 = vsub.f32 %v800, %v1106
      %1108 = vmatpush1.msra.mxu0 %v1107
      %1109 = vmatprep.subr.mxu0 0.0
      %v1110 = vand.u32 %v801, 4294901760
      %v1111 = vsub.f32 %v801, %v1110
      %1112 = vmatpush1.msra.mxu0 %v1111
      %1113 = vmatprep.subr.mxu0 0.0
      %v1114 = vand.u32 %v802, 4294901760
      %v1115 = vsub.f32 %v802, %v1114
      %1116 = vmatpush1.msra.mxu0 %v1115
      %1117 = vmatprep.subr.mxu0 0.0
      %v1118 = vand.u32 %v803, 4294901760
      %v1119 = vsub.f32 %v803, %v1118
      %1120 = vmatpush1.msra.mxu0 %v1119
      %1121 = vmatprep.subr.mxu0 0.0
      %v1122 = vand.u32 %v804, 4294901760
      %v1123 = vsub.f32 %v804, %v1122
      %1124 = vmatpush1.msra.mxu0 %v1123
      %1125 = vmatprep.subr.mxu0 0.0
      %v1126 = vand.u32 %v805, 4294901760
      %v1127 = vsub.f32 %v805, %v1126
      %1128 = vmatpush1.msra.mxu0 %v1127
      %1129 = vmatprep.subr.mxu0 0.0
      %v1130 = vand.u32 %v806, 4294901760
      %v1131 = vsub.f32 %v806, %v1130
      %1132 = vmatpush1.msra.mxu0 %v1131
      %1133 = vmatprep.subr.mxu0 0.0
      %v1134 = vand.u32 %v807, 4294901760
      %v1135 = vsub.f32 %v807, %v1134
      %1136 = vmatpush1.msra.mxu0 %v1135
      %1137 = vmatprep.subr.mxu0 0.0
      %1138 = vmatpush1.msra.mxu0 0.0
      %1139 = vmatprep.subr.mxu0 0.0
      %1140 = vmatpush1.msra.mxu0 0.0
      %1141 = vmatprep.subr.mxu0 0.0
      %1142 = vmatpush1.msra.mxu0 0.0
      %1143 = vmatprep.subr.mxu0 0.0
      %1144 = vmatpush1.msra.mxu0 0.0
      %1145 = vmatprep.subr.mxu0 0.0
      %1146 = vmatpush1.msra.mxu0 0.0
      %1147 = vmatprep.subr.mxu0 0.0
      %1148 = vmatpush1.msra.mxu0 0.0
      %1149 = vmatprep.subr.mxu0 0.0
      %1150 = vmatpush1.msra.mxu0 0.0
      %1151 = vmatprep.subr.mxu0 0.0
      %1152 = vmatpush1.msra.mxu0 0.0
      %1153 = vmatprep.subr.mxu0 0.0
      %1154 = vmatpush1.msra.mxu0 0.0
      %1155 = vmatprep.subr.mxu0 0.0
      %1156 = vmatpush1.msra.mxu0 0.0
      %1157 = vmatprep.subr.mxu0 0.0
      %1158 = vmatpush1.msra.mxu0 0.0
      %1159 = vmatprep.subr.mxu0 0.0
      %1160 = vmatpush1.msra.mxu0 0.0
      %1161 = vmatprep.subr.mxu0 0.0
      %1162 = vmatpush1.msra.mxu0 0.0
      %1163 = vmatprep.subr.mxu0 0.0
      %1164 = vmatpush1.msra.mxu0 0.0
      %1165 = vmatprep.subr.mxu0 0.0
      %1166 = vmatpush1.msra.mxu0 0.0
      %1167 = vmatprep.subr.mxu0 0.0
      %1168 = vmatpush1.msra.mxu0 0.0
      %1169 = vmatprep.mubr.f32.mxu0 0.0
      %v1170 = vand.u32 %v790, 4294901760
      %v1171 = vsub.f32 %v790, %v1170
      %1172 = vmatmul.mubr.f32.gmra.mrb[0].mxu0 %v1171
      %v1173 = vpop.f32.mrb[0].mxu0
      %v1174 = vadd.f32 %v1064, %v1173
      %v1175 = vpop.f32.mrb[0].mxu0
      %1176 = vmatprep.mubr.f32.mxu0 0.0
      %v1177 = vand.u32 %v791, 4294901760
      %v1178 = vsub.f32 %v791, %v1177
      %1179 = vmatmul.mubr.f32.gmra.mrb[0].mxu0 %v1178
      %v1180 = vpop.f32.mrb[0].mxu0
      %v1181 = vadd.f32 %v1070, %v1180
      %v1182 = vpop.f32.mrb[0].mxu0
      %1183 = vdwg.mxu0
      %1184 = vmatprep.subr.mxu0 0.0
      %v1185 = vand.u32 %v792, 4294901760
      %1186 = vmatpush1.msra.mxu0 %v1185
      %1187 = vmatprep.subr.mxu0 0.0
      %v1188 = vand.u32 %v793, 4294901760
      %1189 = vmatpush1.msra.mxu0 %v1188
      %1190 = vmatprep.subr.mxu0 0.0
      %v1191 = vand.u32 %v794, 4294901760
      %1192 = vmatpush1.msra.mxu0 %v1191
      %1193 = vmatprep.subr.mxu0 0.0
      %v1194 = vand.u32 %v795, 4294901760
      %1195 = vmatpush1.msra.mxu0 %v1194
      %1196 = vmatprep.subr.mxu0 0.0
      %v1197 = vand.u32 %v796, 4294901760
      %1198 = vmatpush1.msra.mxu0 %v1197
      %1199 = vmatprep.subr.mxu0 0.0
      %v1200 = vand.u32 %v797, 4294901760
      %1201 = vmatpush1.msra.mxu0 %v1200
      %1202 = vmatprep.subr.mxu0 0.0
      %v1203 = vand.u32 %v798, 4294901760
      %1204 = vmatpush1.msra.mxu0 %v1203
      %1205 = vmatprep.subr.mxu0 0.0
      %v1206 = vand.u32 %v799, 4294901760
      %1207 = vmatpush1.msra.mxu0 %v1206
      %1208 = vmatprep.subr.mxu0 0.0
      %v1209 = vand.u32 %v800, 4294901760
      %1210 = vmatpush1.msra.mxu0 %v1209
      %1211 = vmatprep.subr.mxu0 0.0
      %v1212 = vand.u32 %v801, 4294901760
      %1213 = vmatpush1.msra.mxu0 %v1212
      %1214 = vmatprep.subr.mxu0 0.0
      %v1215 = vand.u32 %v802, 4294901760
      %1216 = vmatpush1.msra.mxu0 %v1215
      %1217 = vmatprep.subr.mxu0 0.0
      %v1218 = vand.u32 %v803, 4294901760
      %1219 = vmatpush1.msra.mxu0 %v1218
      %1220 = vmatprep.subr.mxu0 0.0
      %v1221 = vand.u32 %v804, 4294901760
      %1222 = vmatpush1.msra.mxu0 %v1221
      %1223 = vmatprep.subr.mxu0 0.0
      %v1224 = vand.u32 %v805, 4294901760
      %1225 = vmatpush1.msra.mxu0 %v1224
      %1226 = vmatprep.subr.mxu0 0.0
      %v1227 = vand.u32 %v806, 4294901760
      %1228 = vmatpush1.msra.mxu0 %v1227
      %1229 = vmatprep.subr.mxu0 0.0
      %v1230 = vand.u32 %v807, 4294901760
      %1231 = vmatpush1.msra.mxu0 %v1230
      %1232 = vmatprep.subr.mxu0 0.0
      %1233 = vmatpush1.msra.mxu0 0.0
      %1234 = vmatprep.subr.mxu0 0.0
      %1235 = vmatpush1.msra.mxu0 0.0
      %1236 = vmatprep.subr.mxu0 0.0
      %1237 = vmatpush1.msra.mxu0 0.0
      %1238 = vmatprep.subr.mxu0 0.0
      %1239 = vmatpush1.msra.mxu0 0.0
      %1240 = vmatprep.subr.mxu0 0.0
      %1241 = vmatpush1.msra.mxu0 0.0
      %1242 = vmatprep.subr.mxu0 0.0
      %1243 = vmatpush1.msra.mxu0 0.0
      %1244 = vmatprep.subr.mxu0 0.0
      %1245 = vmatpush1.msra.mxu0 0.0
      %1246 = vmatprep.subr.mxu0 0.0
      %1247 = vmatpush1.msra.mxu0 0.0
      %1248 = vmatprep.subr.mxu0 0.0
      %1249 = vmatpush1.msra.mxu0 0.0
      %1250 = vmatprep.subr.mxu0 0.0
      %1251 = vmatpush1.msra.mxu0 0.0
      %1252 = vmatprep.subr.mxu0 0.0
      %1253 = vmatpush1.msra.mxu0 0.0
      %1254 = vmatprep.subr.mxu0 0.0
      %1255 = vmatpush1.msra.mxu0 0.0
      %1256 = vmatprep.subr.mxu0 0.0
      %1257 = vmatpush1.msra.mxu0 0.0
      %1258 = vmatprep.subr.mxu0 0.0
      %1259 = vmatpush1.msra.mxu0 0.0
      %1260 = vmatprep.subr.mxu0 0.0
      %1261 = vmatpush1.msra.mxu0 0.0
      %1262 = vmatprep.subr.mxu0 0.0
      %1263 = vmatpush1.msra.mxu0 0.0
      %1264 = vmatprep.mubr.f32.mxu0 0.0
      %v1265 = vand.u32 %v790, 4294901760
      %v1266 = vsub.f32 %v790, %v1265
      %v1267 = vand.u32 %v1266, 4294901760
      %1268 = vmatmul.mubr.f32.gmra.mrb[0].mxu0 %v1267
      %v1269 = vpop.f32.mrb[0].mxu0
      %v1270 = vadd.f32 %v1174, %v1269
      %v1271 = vpop.f32.mrb[0].mxu0
      %1272 = vmatprep.mubr.f32.mxu0 0.0
      %v1273 = vand.u32 %v791, 4294901760
      %v1274 = vsub.f32 %v791, %v1273
      %v1275 = vand.u32 %v1274, 4294901760
      %1276 = vmatmul.mubr.f32.gmra.mrb[0].mxu0 %v1275
      %v1277 = vpop.f32.mrb[0].mxu0
      %v1278 = vadd.f32 %v1181, %v1277
      %v1279 = vpop.f32.mrb[0].mxu0
      %1280 = vdwg.mxu0
      %1281 = vmatprep.subr.mxu0 0.0
      %v1282 = vand.u32 %v792, 4294901760
      %v1283 = vsub.f32 %v792, %v1282
      %v1284 = vand.u32 %v1283, 4294901760
      %1285 = vmatpush1.msra.mxu0 %v1284
      %1286 = vmatprep.subr.mxu0 0.0
      %v1287 = vand.u32 %v793, 4294901760
      %v1288 = vsub.f32 %v793, %v1287
      %v1289 = vand.u32 %v1288, 4294901760
      %1290 = vmatpush1.msra.mxu0 %v1289
      %1291 = vmatprep.subr.mxu0 0.0
      %v1292 = vand.u32 %v794, 4294901760
      %v1293 = vsub.f32 %v794, %v1292
      %v1294 = vand.u32 %v1293, 4294901760
      %1295 = vmatpush1.msra.mxu0 %v1294
      %1296 = vmatprep.subr.mxu0 0.0
      %v1297 = vand.u32 %v795, 4294901760
      %v1298 = vsub.f32 %v795, %v1297
      %v1299 = vand.u32 %v1298, 4294901760
      %1300 = vmatpush1.msra.mxu0 %v1299
      %1301 = vmatprep.subr.mxu0 0.0
      %v1302 = vand.u32 %v796, 4294901760
      %v1303 = vsub.f32 %v796, %v1302
      %v1304 = vand.u32 %v1303, 4294901760
      %1305 = vmatpush1.msra.mxu0 %v1304
      %1306 = vmatprep.subr.mxu0 0.0
      %v1307 = vand.u32 %v797, 4294901760
      %v1308 = vsub.f32 %v797, %v1307
      %v1309 = vand.u32 %v1308, 4294901760
      %1310 = vmatpush1.msra.mxu0 %v1309
      %1311 = vmatprep.subr.mxu0 0.0
      %v1312 = vand.u32 %v798, 4294901760
      %v1313 = vsub.f32 %v798, %v1312
      %v1314 = vand.u32 %v1313, 4294901760
      %1315 = vmatpush1.msra.mxu0 %v1314
      %1316 = vmatprep.subr.mxu0 0.0
      %v1317 = vand.u32 %v799, 4294901760
      %v1318 = vsub.f32 %v799, %v1317
      %v1319 = vand.u32 %v1318, 4294901760
      %1320 = vmatpush1.msra.mxu0 %v1319
      %1321 = vmatprep.subr.mxu0 0.0
      %v1322 = vand.u32 %v800, 4294901760
      %v1323 = vsub.f32 %v800, %v1322
      %v1324 = vand.u32 %v1323, 4294901760
      %1325 = vmatpush1.msra.mxu0 %v1324
      %1326 = vmatprep.subr.mxu0 0.0
      %v1327 = vand.u32 %v801, 4294901760
      %v1328 = vsub.f32 %v801, %v1327
      %v1329 = vand.u32 %v1328, 4294901760
      %1330 = vmatpush1.msra.mxu0 %v1329
      %1331 = vmatprep.subr.mxu0 0.0
      %v1332 = vand.u32 %v802, 4294901760
      %v1333 = vsub.f32 %v802, %v1332
      %v1334 = vand.u32 %v1333, 4294901760
      %1335 = vmatpush1.msra.mxu0 %v1334
      %1336 = vmatprep.subr.mxu0 0.0
      %v1337 = vand.u32 %v803, 4294901760
      %v1338 = vsub.f32 %v803, %v1337
      %v1339 = vand.u32 %v1338, 4294901760
      %1340 = vmatpush1.msra.mxu0 %v1339
      %1341 = vmatprep.subr.mxu0 0.0
      %v1342 = vand.u32 %v804, 4294901760
      %v1343 = vsub.f32 %v804, %v1342
      %v1344 = vand.u32 %v1343, 4294901760
      %1345 = vmatpush1.msra.mxu0 %v1344
      %1346 = vmatprep.subr.mxu0 0.0
      %v1347 = vand.u32 %v805, 4294901760
      %v1348 = vsub.f32 %v805, %v1347
      %v1349 = vand.u32 %v1348, 4294901760
      %1350 = vmatpush1.msra.mxu0 %v1349
      %1351 = vmatprep.subr.mxu0 0.0
      %v1352 = vand.u32 %v806, 4294901760
      %v1353 = vsub.f32 %v806, %v1352
      %v1354 = vand.u32 %v1353, 4294901760
      %1355 = vmatpush1.msra.mxu0 %v1354
      %1356 = vmatprep.subr.mxu0 0.0
      %v1357 = vand.u32 %v807, 4294901760
      %v1358 = vsub.f32 %v807, %v1357
      %v1359 = vand.u32 %v1358, 4294901760
      %1360 = vmatpush1.msra.mxu0 %v1359
      %1361 = vmatprep.subr.mxu0 0.0
      %1362 = vmatpush1.msra.mxu0 0.0
      %1363 = vmatprep.subr.mxu0 0.0
      %1364 = vmatpush1.msra.mxu0 0.0
      %1365 = vmatprep.subr.mxu0 0.0
      %1366 = vmatpush1.msra.mxu0 0.0
      %1367 = vmatprep.subr.mxu0 0.0
      %1368 = vmatpush1.msra.mxu0 0.0
      %1369 = vmatprep.subr.mxu0 0.0
      %1370 = vmatpush1.msra.mxu0 0.0
      %1371 = vmatprep.subr.mxu0 0.0
      %1372 = vmatpush1.msra.mxu0 0.0
      %1373 = vmatprep.subr.mxu0 0.0
      %1374 = vmatpush1.msra.mxu0 0.0
      %1375 = vmatprep.subr.mxu0 0.0
      %1376 = vmatpush1.msra.mxu0 0.0
      %1377 = vmatprep.subr.mxu0 0.0
      %1378 = vmatpush1.msra.mxu0 0.0
      %1379 = vmatprep.subr.mxu0 0.0
      %1380 = vmatpush1.msra.mxu0 0.0
      %1381 = vmatprep.subr.mxu0 0.0
      %1382 = vmatpush1.msra.mxu0 0.0
      %1383 = vmatprep.subr.mxu0 0.0
      %1384 = vmatpush1.msra.mxu0 0.0
      %1385 = vmatprep.subr.mxu0 0.0
      %1386 = vmatpush1.msra.mxu0 0.0
      %1387 = vmatprep.subr.mxu0 0.0
      %1388 = vmatpush1.msra.mxu0 0.0
      %1389 = vmatprep.subr.mxu0 0.0
      %1390 = vmatpush1.msra.mxu0 0.0
      %1391 = vmatprep.subr.mxu0 0.0
      %1392 = vmatpush1.msra.mxu0 0.0
      %1393 = vmatprep.mubr.f32.mxu0 0.0
      %v1394 = vand.u32 %v790, 4294901760
      %1395 = vmatmul.mubr.f32.gmra.mrb[0].mxu0 %v1394
      %v1396 = vpop.f32.mrb[0].mxu0
      %v1397 = vadd.f32 %v1270, %v1396
      %v1398 = vpop.f32.mrb[0].mxu0
      %1399 = vmatprep.mubr.f32.mxu0 0.0
      %v1400 = vand.u32 %v791, 4294901760
      %1401 = vmatmul.mubr.f32.gmra.mrb[0].mxu0 %v1400
      %v1402 = vpop.f32.mrb[0].mxu0
      %v1403 = vadd.f32 %v1278, %v1402
      %v1404 = vpop.f32.mrb[0].mxu0
      %1405 = vdwg.mxu0
      %1406 = vmatprep.subr.mxu0 0.0
      %v1407 = vand.u32 %v792, 4294901760
      %1408 = vmatpush1.msra.mxu0 %v1407
      %1409 = vmatprep.subr.mxu0 0.0
      %v1410 = vand.u32 %v793, 4294901760
      %1411 = vmatpush1.msra.mxu0 %v1410
      %1412 = vmatprep.subr.mxu0 0.0
      %v1413 = vand.u32 %v794, 4294901760
      %1414 = vmatpush1.msra.mxu0 %v1413
      %1415 = vmatprep.subr.mxu0 0.0
      %v1416 = vand.u32 %v795, 4294901760
      %1417 = vmatpush1.msra.mxu0 %v1416
      %1418 = vmatprep.subr.mxu0 0.0
      %v1419 = vand.u32 %v796, 4294901760
      %1420 = vmatpush1.msra.mxu0 %v1419
      %1421 = vmatprep.subr.mxu0 0.0
      %v1422 = vand.u32 %v797, 4294901760
      %1423 = vmatpush1.msra.mxu0 %v1422
      %1424 = vmatprep.subr.mxu0 0.0
      %v1425 = vand.u32 %v798, 4294901760
      %1426 = vmatpush1.msra.mxu0 %v1425
      %1427 = vmatprep.subr.mxu0 0.0
      %v1428 = vand.u32 %v799, 4294901760
      %1429 = vmatpush1.msra.mxu0 %v1428
      %1430 = vmatprep.subr.mxu0 0.0
      %v1431 = vand.u32 %v800, 4294901760
      %1432 = vmatpush1.msra.mxu0 %v1431
      %1433 = vmatprep.subr.mxu0 0.0
      %v1434 = vand.u32 %v801, 4294901760
      %1435 = vmatpush1.msra.mxu0 %v1434
      %1436 = vmatprep.subr.mxu0 0.0
      %v1437 = vand.u32 %v802, 4294901760
      %1438 = vmatpush1.msra.mxu0 %v1437
      %1439 = vmatprep.subr.mxu0 0.0
      %v1440 = vand.u32 %v803, 4294901760
      %1441 = vmatpush1.msra.mxu0 %v1440
      %1442 = vmatprep.subr.mxu0 0.0
      %v1443 = vand.u32 %v804, 4294901760
      %1444 = vmatpush1.msra.mxu0 %v1443
      %1445 = vmatprep.subr.mxu0 0.0
      %v1446 = vand.u32 %v805, 4294901760
      %1447 = vmatpush1.msra.mxu0 %v1446
      %1448 = vmatprep.subr.mxu0 0.0
      %v1449 = vand.u32 %v806, 4294901760
      %1450 = vmatpush1.msra.mxu0 %v1449
      %1451 = vmatprep.subr.mxu0 0.0
      %v1452 = vand.u32 %v807, 4294901760
      %1453 = vmatpush1.msra.mxu0 %v1452
      %1454 = vmatprep.subr.mxu0 0.0
      %1455 = vmatpush1.msra.mxu0 0.0
      %1456 = vmatprep.subr.mxu0 0.0
      %1457 = vmatpush1.msra.mxu0 0.0
      %1458 = vmatprep.subr.mxu0 0.0
      %1459 = vmatpush1.msra.mxu0 0.0
      %1460 = vmatprep.subr.mxu0 0.0
      %1461 = vmatpush1.msra.mxu0 0.0
      %1462 = vmatprep.subr.mxu0 0.0
      %1463 = vmatpush1.msra.mxu0 0.0
      %1464 = vmatprep.subr.mxu0 0.0
      %1465 = vmatpush1.msra.mxu0 0.0
      %1466 = vmatprep.subr.mxu0 0.0
      %1467 = vmatpush1.msra.mxu0 0.0
      %1468 = vmatprep.subr.mxu0 0.0
      %1469 = vmatpush1.msra.mxu0 0.0
      %1470 = vmatprep.subr.mxu0 0.0
      %1471 = vmatpush1.msra.mxu0 0.0
      %1472 = vmatprep.subr.mxu0 0.0
      %1473 = vmatpush1.msra.mxu0 0.0
      %1474 = vmatprep.subr.mxu0 0.0
      %1475 = vmatpush1.msra.mxu0 0.0
      %1476 = vmatprep.subr.mxu0 0.0
      %1477 = vmatpush1.msra.mxu0 0.0
      %1478 = vmatprep.subr.mxu0 0.0
      %1479 = vmatpush1.msra.mxu0 0.0
      %1480 = vmatprep.subr.mxu0 0.0
      %1481 = vmatpush1.msra.mxu0 0.0
      %1482 = vmatprep.subr.mxu0 0.0
      %1483 = vmatpush1.msra.mxu0 0.0
      %1484 = vmatprep.subr.mxu0 0.0
      %1485 = vmatpush1.msra.mxu0 0.0
      %1486 = vmatprep.mubr.f32.mxu0 0.0
      %v1487 = vand.u32 %v790, 4294901760
      %1488 = vmatmul.mubr.f32.gmra.mrb[0].mxu0 %v1487
      %v1489 = vpop.f32.mrb[0].mxu0
      %v1490 = vadd.f32 %v1397, %v1489
      %v1491 = vpop.f32.mrb[0].mxu0
      %1492 = vmatprep.mubr.f32.mxu0 0.0
      %v1493 = vand.u32 %v791, 4294901760
      %1494 = vmatmul.mubr.f32.gmra.mrb[0].mxu0 %v1493
      %v1495 = vpop.f32.mrb[0].mxu0
      %v1496 = vadd.f32 %v1403, %v1495
      %v1497 = vpop.f32.mrb[0].mxu0
      %1498 = vdwg.mxu0
      %v1499 = vmul.f32 %v1490, %v1490
      %v1500 = vmul.f32 %v1496, %v1496
      %1501 = vadd.xlane.f32.xlu0 %v1499
      %v1502 = vpop.xlane.xlu0 %1501
      %1503 = vadd.xlane.f32.xlu0 %v1500
      %v1504 = vpop.xlane.xlu0 %1503
      %v1505 = vmax.f32 %v1502, 1e-24
      %v1506 = vmax.f32 %v1504, 1e-24
      %v1507 = vrsqrt.pop %v1505
      %v1508 = vrsqrt.pop %v1506
      %v1509 = vmul.f32 %v1490, %v1507
      %v1510 = vmul.f32 %v1496, %v1508
      %1511 = vst [vmem:[#allocation9] sm:$0xff] %v1509
      %1512 = vst [vmem:[#allocation9 + $0x8] sm:$0xff] %v1510
    $region41: #{tpu_custom_call.1} parent=1 // pred_fallthru
      _
    // Predicated region
    $region42: #{tpu_custom_call.1} parent=1 // pred_check
      _
    $region43: #{tpu_custom_call.1} parent=1 // pred_check_branch
      %1514 = sbr.rel (0) target = $region45
    $region44: #{tpu_custom_call.1} parent=1 // pred_region
      %s1516 = ssub.s32 256, 256
      %1517 = vsyncadd [#allocation5], %s1516
      %s1518 = sshll.u32 [#allocation9], 4
      %s1519 = int_to_ptr.vmem [resolvable:$true] %s1518
      %1524 = dma.vmem_to_hbm [thread:$0]  %s1519, 256, %s5, [#allocation5], 128, 128, 8
    $region45: #{tpu_custom_call.1} parent=1 // pred_fallthru
      _
    // Predicated region
    $region46: #{tpu_custom_call.1} parent=1 // pred_check
      _
    $region47: #{tpu_custom_call.1} parent=1 // pred_check_branch
      %1526 = sbr.rel (0) target = $region49
    $region48: #{tpu_custom_call.1} parent=1 // pred_region
      %1527 = dma.done [#allocation5], 256
    $region49: #{tpu_custom_call.1} parent=1 // pred_fallthru
      _
    %1528 = vsyncpa [#allocation4], 1
    %1529 = vsyncpa [#allocation7], 1
    %1530 = vsyncpa [#allocation5], 1

// kernel: tpu_custom_call.1
$region0: #{tpu_custom_call.1}
  #allocation0 [shape = 'u32[]', space=smem, size = 0x4, offset = 0x4, fixed_abs, tag = 'smem constant byte address 0x4 - core index']
  #allocation1 [shape = 'u32[144,128]{1,0:T(1,128)}', space=vmem, size = 0x12000, scoped, tag = 'internal scratch']
  #allocation2 [shape = 'f32[16,128]{1,0:T(8,128)}', space=vmem, size = 0x2000, scoped, tag = 'scratch operand']
  %s0 = inlined_call_operand.hbm [shape: f32[16,128], index: 0, kind: input, shape index: {}]
  %s1 = inlined_call_operand.hbm [shape: f32[128,128], index: 1, kind: input, shape index: {}]
  %s2 = inlined_call_operand.vmem [shape: f32[1,128], index: 2, kind: input, shape index: {}]
  %s3 = inlined_call_operand.hbm [shape: f32[128,128], index: 3, kind: input, shape index: {}]
  %s4 = inlined_call_operand.vmem [shape: f32[1,128], index: 4, kind: input, shape index: {}]
  %s5 = inlined_call_operand.hbm [shape: f32[16,128], index: 5, kind: output, shape index: {}]
  %s6 = sld [smem:[#allocation0]]
  $region50: #{tpu_custom_call.1} parent=0
    _
  %s8 = ssub.s32 1, %s6
  %s9 = scalar_select 0, %s8, %s6
  $region1: #{tpu_custom_call.1} parent=0
    #allocation3 [shape = 'u8[8192]{0}', space=vmem, size = 0x2000, scoped, tag = 'input window, operand 0, single buffered']
    #allocation4 [shape = 's32[1]{0}', space=sflag, size = 0x4, scoped, tag = 'scoped memory for tpu_custom_call.1']
    #allocation5 [shape = 's32[1]{0}', space=sflag, size = 0x4, scoped, tag = 'scoped memory for tpu_custom_call.1']
    #allocation6 [shape = 'u8[65536]{0}', space=vmem, size = 0x10000, scoped, tag = 'input window, operand 1, single buffered']
    #allocation7 [shape = 's32[1]{0}', space=sflag, size = 0x4, scoped, tag = 'scoped memory for tpu_custom_call.1']
    #allocation8 [shape = 'u8[65536]{0}', space=vmem, size = 0x10000, scoped, tag = 'input window, operand 3, single buffered']
    #allocation9 [shape = 'u8[8192]{0}', space=vmem, size = 0x2000, scoped, tag = 'output window, operand 0, single buffered']
    %10 = vsyncpa [#allocation4], 0
    %11 = vsyncpa [#allocation7], 0
    %12 = vsyncpa [#allocation5], 0
    // Predicated region
    $region2: #{tpu_custom_call.1} parent=1 // pred_check
      _
    $region3: #{tpu_custom_call.1} parent=1 // pred_check_branch
      %14 = sbr.rel (0) target = $region5
    $region4: #{tpu_custom_call.1} parent=1 // pred_region
      %s16 = ssub.s32 256, 256
      %17 = vsyncadd [#allocation4], %s16
      %s18 = sshll.u32 [#allocation3], 4
      %s19 = int_to_ptr.vmem [resolvable:$true] %s18
      %24 = dma.hbm_to_vmem [thread:$0]  %s0, 256, %s19, [#allocation4], 128, 128, 8
    $region5: #{tpu_custom_call.1} parent=1 // pred_fallthru
      _
    // Predicated region
    $region6: #{tpu_custom_call.1} parent=1 // pred_check
      _
    $region7: #{tpu_custom_call.1} parent=1 // pred_check_branch
      %26 = sbr.rel (0) target = $region9
    $region8: #{tpu_custom_call.1} parent=1 // pred_region
      %s28 = ssub.s32 2048, 2048
      %29 = vsyncadd [#allocation7], %s28
      %s30 = sshll.u32 [#allocation6], 4
      %s31 = int_to_ptr.vmem [resolvable:$true] %s30
      %36 = dma.hbm_to_vmem [thread:$0]  %s1, 2048, %s31, [#allocation7], 128, 128, 8
    $region9: #{tpu_custom_call.1} parent=1 // pred_fallthru
      _
    // Predicated region
    $region10: #{tpu_custom_call.1} parent=1 // pred_check
      _
    $region11: #{tpu_custom_call.1} parent=1 // pred_check_branch
      %38 = sbr.rel (0) target = $region13
    $region12: #{tpu_custom_call.1} parent=1 // pred_region
      _
    $region13: #{tpu_custom_call.1} parent=1 // pred_fallthru
      _
    // Predicated region
    $region14: #{tpu_custom_call.1} parent=1 // pred_check
      _
    $region15: #{tpu_custom_call.1} parent=1 // pred_check_branch
      %40 = sbr.rel (0) target = $region17
    $region16: #{tpu_custom_call.1} parent=1 // pred_region
      %s42 = ssub.s32 2048, 2048
      %43 = vsyncadd [#allocation7], %s42
      %s44 = sshll.u32 [#allocation8], 4
      %s45 = int_to_ptr.vmem [resolvable:$true] %s44
      %50 = dma.hbm_to_vmem [thread:$0]  %s3, 2048, %s45, [#allocation7], 128, 128, 8
    $region17: #{tpu_custom_call.1} parent=1 // pred_fallthru
      _
    // Predicated region
    $region18: #{tpu_custom_call.1} parent=1 // pred_check
      _
    $region19: #{tpu_custom_call.1} parent=1 // pred_check_branch
      %52 = sbr.rel (0) target = $region21
    $region20: #{tpu_custom_call.1} parent=1 // pred_region
      _
    $region21: #{tpu_custom_call.1} parent=1 // pred_fallthru
      _
    // Predicated region
    $region22: #{tpu_custom_call.1} parent=1 // pred_check
      _
    $region23: #{tpu_custom_call.1} parent=1 // pred_check_branch
      %54 = sbr.rel (0) target = $region25
    $region24: #{tpu_custom_call.1} parent=1 // pred_region
      %55 = dma.done [#allocation4], 256
    $region25: #{tpu_custom_call.1} parent=1 // pred_fallthru
      _
    // Predicated region
    $region26: #{tpu_custom_call.1} parent=1 // pred_check
      _
    $region27: #{tpu_custom_call.1} parent=1 // pred_check_branch
      %57 = sbr.rel (0) target = $region29
    $region28: #{tpu_custom_call.1} parent=1 // pred_region
      %58 = dma.done [#allocation7], 2048
    $region29: #{tpu_custom_call.1} parent=1 // pred_fallthru
      _
    // Predicated region
    $region30: #{tpu_custom_call.1} parent=1 // pred_check
      _
    $region31: #{tpu_custom_call.1} parent=1 // pred_check_branch
      %60 = sbr.rel (0) target = $region33
    $region32: #{tpu_custom_call.1} parent=1 // pred_region
      %61 = dma.done [#allocation7], 2048
    $region33: #{tpu_custom_call.1} parent=1 // pred_fallthru
      _
    %p62 = scmp.eq.s32.totalorder 0, 0
    // Predicated region
    $region34: #{tpu_custom_call.1} parent=1 // pred_check
      %p63 = pneg %p62
    $region35: #{tpu_custom_call.1} parent=1 // pred_check_branch
      %65 = sbr.rel (%p63) target = $region37
    $region36: #{tpu_custom_call.1} parent=1 // pred_region
      %66 = vst [vmem:[#allocation2] sm:$0xff] 0.0
      %67 = vst [vmem:[#allocation2 + $0x8] sm:$0xff] 0.0
    $region37: #{tpu_custom_call.1} parent=1 // pred_fallthru
      _
    %v68 = vld [vmem:[#allocation2] sm:$0xff]
    %v69 = vld [vmem:[#allocation2 + $0x8] sm:$0xff]
    %v70 = vld [vmem:[#allocation3] sm:$0xff]
    %v71 = vld [vmem:[#allocation3 + $0x8] sm:$0xff]
    %v72 = vld [vmem:[#allocation6] sm:$0xff]
    %v73 = vld [vmem:[#allocation6 + $0x8] sm:$0xff]
    %v74 = vld [vmem:[#allocation6 + $0x10] sm:$0xff]
    %v75 = vld [vmem:[#allocation6 + $0x18] sm:$0xff]
    %v76 = vld [vmem:[#allocation6 + $0x20] sm:$0xff]
    %v77 = vld [vmem:[#allocation6 + $0x28] sm:$0xff]
    %v78 = vld [vmem:[#allocation6 + $0x30] sm:$0xff]
    %v79 = vld [vmem:[#allocation6 + $0x38] sm:$0xff]
    %v80 = vld [vmem:[#allocation6 + $0x40] sm:$0xff]
    %v81 = vld [vmem:[#allocation6 + $0x48] sm:$0xff]
    %v82 = vld [vmem:[#allocation6 + $0x50] sm:$0xff]
    %v83 = vld [vmem:[#allocation6 + $0x58] sm:$0xff]
    %v84 = vld [vmem:[#allocation6 + $0x60] sm:$0xff]
    %v85 = vld [vmem:[#allocation6 + $0x68] sm:$0xff]
    %v86 = vld [vmem:[#allocation6 + $0x70] sm:$0xff]
    %v87 = vld [vmem:[#allocation6 + $0x78] sm:$0xff]
    %88 = vmatprep.subr.mxu0 0.0
    %v89 = vand.u32 %v72, 4294901760
    %90 = vmatpush1.msra.mxu0 %v89
    %91 = vmatprep.subr.mxu0 0.0
    %v92 = vand.u32 %v73, 4294901760
    %93 = vmatpush1.msra.mxu0 %v92
    %94 = vmatprep.subr.mxu0 0.0
    %v95 = vand.u32 %v74, 4294901760
    %96 = vmatpush1.msra.mxu0 %v95
    %97 = vmatprep.subr.mxu0 0.0
    %v98 = vand.u32 %v75, 4294901760
    %99 = vmatpush1.msra.mxu0 %v98
    %100 = vmatprep.subr.mxu0 0.0
    %v101 = vand.u32 %v76, 4294901760
    %102 = vmatpush1.msra.mxu0 %v101
    %103 = vmatprep.subr.mxu0 0.0
    %v104 = vand.u32 %v77, 4294901760
    %105 = vmatpush1.msra.mxu0 %v104
    %106 = vmatprep.subr.mxu0 0.0
    %v107 = vand.u32 %v78, 4294901760
    %108 = vmatpush1.msra.mxu0 %v107
    %109 = vmatprep.subr.mxu0 0.0
    %v110 = vand.u32 %v79, 4294901760
    %111 = vmatpush1.msra.mxu0 %v110
    %112 = vmatprep.subr.mxu0 0.0
    %v113 = vand.u32 %v80, 4294901760
    %114 = vmatpush1.msra.mxu0 %v113
    %115 = vmatprep.subr.mxu0 0.0
    %v116 = vand.u32 %v81, 4294901760
    %117 = vmatpush1.msra.mxu0 %v116
    %118 = vmatprep.subr.mxu0 0.0
    %v119 = vand.u32 %v82, 4294901760
    %120 = vmatpush1.msra.mxu0 %v119
    %121 = vmatprep.subr.mxu0 0.0
    %v122 = vand.u32 %v83, 4294901760
    %123 = vmatpush1.msra.mxu0 %v122
    %124 = vmatprep.subr.mxu0 0.0
    %v125 = vand.u32 %v84, 4294901760
    %126 = vmatpush1.msra.mxu0 %v125
    %127 = vmatprep.subr.mxu0 0.0
    %v128 = vand.u32 %v85, 4294901760
    %129 = vmatpush1.msra.mxu0 %v128
    %130 = vmatprep.subr.mxu0 0.0
    %v131 = vand.u32 %v86, 4294901760
    %132 = vmatpush1.msra.mxu0 %v131
    %133 = vmatprep.subr.mxu0 0.0
    %v134 = vand.u32 %v87, 4294901760
    %135 = vmatpush1.msra.mxu0 %v134
    %136 = vmatprep.subr.mxu0 0.0
    %137 = vmatpush1.msra.mxu0 0.0
    %138 = vmatprep.subr.mxu0 0.0
    %139 = vmatpush1.msra.mxu0 0.0
    %140 = vmatprep.subr.mxu0 0.0
    %141 = vmatpush1.msra.mxu0 0.0
    %142 = vmatprep.subr.mxu0 0.0
    %143 = vmatpush1.msra.mxu0 0.0
    %144 = vmatprep.subr.mxu0 0.0
    %145 = vmatpush1.msra.mxu0 0.0
    %146 = vmatprep.subr.mxu0 0.0
    %147 = vmatpush1.msra.mxu0 0.0
    %148 = vmatprep.subr.mxu0 0.0
    %149 = vmatpush1.msra.mxu0 0.0
    %150 = vmatprep.subr.mxu0 0.0
    %151 = vmatpush1.msra.mxu0 0.0
    %152 = vmatprep.subr.mxu0 0.0
    %153 = vmatpush1.msra.mxu0 0.0
    %154 = vmatprep.subr.mxu0 0.0
    %155 = vmatpush1.msra.mxu0 0.0
    %156 = vmatprep.subr.mxu0 0.0
    %157 = vmatpush1.msra.mxu0 0.0
    %158 = vmatprep.subr.mxu0 0.0
    %159 = vmatpush1.msra.mxu0 0.0
    %160 = vmatprep.subr.mxu0 0.0
    %161 = vmatpush1.msra.mxu0 0.0
    %162 = vmatprep.subr.mxu0 0.0
    %163 = vmatpush1.msra.mxu0 0.0
    %164 = vmatprep.subr.mxu0 0.0
    %165 = vmatpush1.msra.mxu0 0.0
    %166 = vmatprep.subr.mxu0 0.0
    %167 = vmatpush1.msra.mxu0 0.0
    %168 = vmatprep.mubr.f32.mxu0 0.0
    %v169 = vand.u32 %v70, 4294901760
    %v170 = vsub.f32 %v70, %v169
    %v171 = vand.u32 %v170, 4294901760
    %v172 = vsub.f32 %v170, %v171
    %v173 = vand.u32 %v172, 4294901760
    %174 = vmatmul.mubr.f32.gmra.mrb[0].mxu0 %v173
    %v175 = vpop.f32.mrb[0].mxu0
    %v176 = vadd.f32 0.0, %v175
    %v177 = vpop.f32.mrb[0].mxu0
    %178 = vmatprep.mubr.f32.mxu0 0.0
    %v179 = vand.u32 %v71, 4294901760
    %v180 = vsub.f32 %v71, %v179
    %v181 = vand.u32 %v180, 4294901760
    %v182 = vsub.f32 %v180, %v181
    %v183 = vand.u32 %v182, 4294901760
    %184 = vmatmul.mubr.f32.gmra.mrb[0].mxu0 %v183
    %v185 = vpop.f32.mrb[0].mxu0
    %v186 = vadd.f32 0.0, %v185
    %v187 = vpop.f32.mrb[0].mxu0
    %188 = vdwg.mxu0
    %189 = vmatprep.subr.mxu0 0.0
    %v190 = vand.u32 %v72, 4294901760
    %v191 = vsub.f32 %v72, %v190
    %v192 = vand.u32 %v191, 4294901760
    %v193 = vsub.f32 %v191, %v192
    %v194 = vand.u32 %v193, 4294901760
    %195 = vmatpush1.msra.mxu0 %v194
    %196 = vmatprep.subr.mxu0 0.0
    %v197 = vand.u32 %v73, 4294901760
    %v198 = vsub.f32 %v73, %v197
    %v199 = vand.u32 %v198, 4294901760
    %v200 = vsub.f32 %v198, %v199
    %v201 = vand.u32 %v200, 4294901760
    %202 = vmatpush1.msra.mxu0 %v201
    %203 = vmatprep.subr.mxu0 0.0
    %v204 = vand.u32 %v74, 4294901760
    %v205 = vsub.f32 %v74, %v204
    %v206 = vand.u32 %v205, 4294901760
    %v207 = vsub.f32 %v205, %v206
    %v208 = vand.u32 %v207, 4294901760
    %209 = vmatpush1.msra.mxu0 %v208
    %210 = vmatprep.subr.mxu0 0.0
    %v211 = vand.u32 %v75, 4294901760
    %v212 = vsub.f32 %v75, %v211
    %v213 = vand.u32 %v212, 4294901760
    %v214 = vsub.f32 %v212, %v213
    %v215 = vand.u32 %v214, 4294901760
    %216 = vmatpush1.msra.mxu0 %v215
    %217 = vmatprep.subr.mxu0 0.0
    %v218 = vand.u32 %v76, 4294901760
    %v219 = vsub.f32 %v76, %v218
    %v220 = vand.u32 %v219, 4294901760
    %v221 = vsub.f32 %v219, %v220
    %v222 = vand.u32 %v221, 4294901760
    %223 = vmatpush1.msra.mxu0 %v222
    %224 = vmatprep.subr.mxu0 0.0
    %v225 = vand.u32 %v77, 4294901760
    %v226 = vsub.f32 %v77, %v225
    %v227 = vand.u32 %v226, 4294901760
    %v228 = vsub.f32 %v226, %v227
    %v229 = vand.u32 %v228, 4294901760
    %230 = vmatpush1.msra.mxu0 %v229
    %231 = vmatprep.subr.mxu0 0.0
    %v232 = vand.u32 %v78, 4294901760
    %v233 = vsub.f32 %v78, %v232
    %v234 = vand.u32 %v233, 4294901760
    %v235 = vsub.f32 %v233, %v234
    %v236 = vand.u32 %v235, 4294901760
    %237 = vmatpush1.msra.mxu0 %v236
    %238 = vmatprep.subr.mxu0 0.0
    %v239 = vand.u32 %v79, 4294901760
    %v240 = vsub.f32 %v79, %v239
    %v241 = vand.u32 %v240, 4294901760
    %v242 = vsub.f32 %v240, %v241
    %v243 = vand.u32 %v242, 4294901760
    %244 = vmatpush1.msra.mxu0 %v243
    %245 = vmatprep.subr.mxu0 0.0
    %v246 = vand.u32 %v80, 4294901760
    %v247 = vsub.f32 %v80, %v246
    %v248 = vand.u32 %v247, 4294901760
    %v249 = vsub.f32 %v247, %v248
    %v250 = vand.u32 %v249, 4294901760
    %251 = vmatpush1.msra.mxu0 %v250
    %252 = vmatprep.subr.mxu0 0.0
    %v253 = vand.u32 %v81, 4294901760
    %v254 = vsub.f32 %v81, %v253
    %v255 = vand.u32 %v254, 4294901760
    %v256 = vsub.f32 %v254, %v255
    %v257 = vand.u32 %v256, 4294901760
    %258 = vmatpush1.msra.mxu0 %v257
    %259 = vmatprep.subr.mxu0 0.0
    %v260 = vand.u32 %v82, 4294901760
    %v261 = vsub.f32 %v82, %v260
    %v262 = vand.u32 %v261, 4294901760
    %v263 = vsub.f32 %v261, %v262
    %v264 = vand.u32 %v263, 4294901760
    %265 = vmatpush1.msra.mxu0 %v264
    %266 = vmatprep.subr.mxu0 0.0
    %v267 = vand.u32 %v83, 4294901760
    %v268 = vsub.f32 %v83, %v267
    %v269 = vand.u32 %v268, 4294901760
    %v270 = vsub.f32 %v268, %v269
    %v271 = vand.u32 %v270, 4294901760
    %272 = vmatpush1.msra.mxu0 %v271
    %273 = vmatprep.subr.mxu0 0.0
    %v274 = vand.u32 %v84, 4294901760
    %v275 = vsub.f32 %v84, %v274
    %v276 = vand.u32 %v275, 4294901760
    %v277 = vsub.f32 %v275, %v276
    %v278 = vand.u32 %v277, 4294901760
    %279 = vmatpush1.msra.mxu0 %v278
    %280 = vmatprep.subr.mxu0 0.0
    %v281 = vand.u32 %v85, 4294901760
    %v282 = vsub.f32 %v85, %v281
    %v283 = vand.u32 %v282, 4294901760
    %v284 = vsub.f32 %v282, %v283
    %v285 = vand.u32 %v284, 4294901760
    %286 = vmatpush1.msra.mxu0 %v285
    %287 = vmatprep.subr.mxu0 0.0
    %v288 = vand.u32 %v86, 4294901760
    %v289 = vsub.f32 %v86, %v288
    %v290 = vand.u32 %v289, 4294901760
    %v291 = vsub.f32 %v289, %v290
    %v292 = vand.u32 %v291, 4294901760
    %293 = vmatpush1.msra.mxu0 %v292
    %294 = vmatprep.subr.mxu0 0.0
    %v295 = vand.u32 %v87, 4294901760
    %v296 = vsub.f32 %v87, %v295
    %v297 = vand.u32 %v296, 4294901760
    %v298 = vsub.f32 %v296, %v297
    %v299 = vand.u32 %v298, 4294901760
    %300 = vmatpush1.msra.mxu0 %v299
    %301 = vmatprep.subr.mxu0 0.0
    %302 = vmatpush1.msra.mxu0 0.0
    %303 = vmatprep.subr.mxu0 0.0
    %304 = vmatpush1.msra.mxu0 0.0
    %305 = vmatprep.subr.mxu0 0.0
    %306 = vmatpush1.msra.mxu0 0.0
    %307 = vmatprep.subr.mxu0 0.0
    %308 = vmatpush1.msra.mxu0 0.0
    %309 = vmatprep.subr.mxu0 0.0
    %310 = vmatpush1.msra.mxu0 0.0
    %311 = vmatprep.subr.mxu0 0.0
    %312 = vmatpush1.msra.mxu0 0.0
    %313 = vmatprep.subr.mxu0 0.0
    %314 = vmatpush1.msra.mxu0 0.0
    %315 = vmatprep.subr.mxu0 0.0
    %316 = vmatpush1.msra.mxu0 0.0
    %317 = vmatprep.subr.mxu0 0.0
    %318 = vmatpush1.msra.mxu0 0.0
    %319 = vmatprep.subr.mxu0 0.0
    %320 = vmatpush1.msra.mxu0 0.0
    %321 = vmatprep.subr.mxu0 0.0
    %322 = vmatpush1.msra.mxu0 0.0
    %323 = vmatprep.subr.mxu0 0.0
    %324 = vmatpush1.msra.mxu0 0.0
    %325 = vmatprep.subr.mxu0 0.0
    %326 = vmatpush1.msra.mxu0 0.0
    %327 = vmatprep.subr.mxu0 0.0
    %328 = vmatpush1.msra.mxu0 0.0
    %329 = vmatprep.subr.mxu0 0.0
    %330 = vmatpush1.msra.mxu0 0.0
    %331 = vmatprep.subr.mxu0 0.0
    %332 = vmatpush1.msra.mxu0 0.0
    %333 = vmatprep.mubr.f32.mxu0 0.0
    %v334 = vand.u32 %v70, 4294901760
    %335 = vmatmul.mubr.f32.gmra.mrb[0].mxu0 %v334
    %v336 = vpop.f32.mrb[0].mxu0
    %v337 = vadd.f32 %v176, %v336
    %v338 = vpop.f32.mrb[0].mxu0
    %339 = vmatprep.mubr.f32.mxu0 0.0
    %v340 = vand.u32 %v71, 4294901760
    %341 = vmatmul.mubr.f32.gmra.mrb[0].mxu0 %v340
    %v342 = vpop.f32.mrb[0].mxu0
    %v343 = vadd.f32 %v186, %v342
    %v344 = vpop.f32.mrb[0].mxu0
    %345 = vdwg.mxu0
    %346 = vmatprep.subr.mxu0 0.0
    %v347 = vand.u32 %v72, 4294901760
    %v348 = vsub.f32 %v72, %v347
    %349 = vmatpush1.msra.mxu0 %v348
    %350 = vmatprep.subr.mxu0 0.0
    %v351 = vand.u32 %v73, 4294901760
    %v352 = vsub.f32 %v73, %v351
    %353 = vmatpush1.msra.mxu0 %v352
    %354 = vmatprep.subr.mxu0 0.0
    %v355 = vand.u32 %v74, 4294901760
    %v356 = vsub.f32 %v74, %v355
    %357 = vmatpush1.msra.mxu0 %v356
    %358 = vmatprep.subr.mxu0 0.0
    %v359 = vand.u32 %v75, 4294901760
    %v360 = vsub.f32 %v75, %v359
    %361 = vmatpush1.msra.mxu0 %v360
    %362 = vmatprep.subr.mxu0 0.0
    %v363 = vand.u32 %v76, 4294901760
    %v364 = vsub.f32 %v76, %v363
    %365 = vmatpush1.msra.mxu0 %v364
    %366 = vmatprep.subr.mxu0 0.0
    %v367 = vand.u32 %v77, 4294901760
    %v368 = vsub.f32 %v77, %v367
    %369 = vmatpush1.msra.mxu0 %v368
    %370 = vmatprep.subr.mxu0 0.0
    %v371 = vand.u32 %v78, 4294901760
    %v372 = vsub.f32 %v78, %v371
    %373 = vmatpush1.msra.mxu0 %v372
    %374 = vmatprep.subr.mxu0 0.0
    %v375 = vand.u32 %v79, 4294901760
    %v376 = vsub.f32 %v79, %v375
    %377 = vmatpush1.msra.mxu0 %v376
    %378 = vmatprep.subr.mxu0 0.0
    %v379 = vand.u32 %v80, 4294901760
    %v380 = vsub.f32 %v80, %v379
    %381 = vmatpush1.msra.mxu0 %v380
    %382 = vmatprep.subr.mxu0 0.0
    %v383 = vand.u32 %v81, 4294901760
    %v384 = vsub.f32 %v81, %v383
    %385 = vmatpush1.msra.mxu0 %v384
    %386 = vmatprep.subr.mxu0 0.0
    %v387 = vand.u32 %v82, 4294901760
    %v388 = vsub.f32 %v82, %v387
    %389 = vmatpush1.msra.mxu0 %v388
    %390 = vmatprep.subr.mxu0 0.0
    %v391 = vand.u32 %v83, 4294901760
    %v392 = vsub.f32 %v83, %v391
    %393 = vmatpush1.msra.mxu0 %v392
    %394 = vmatprep.subr.mxu0 0.0
    %v395 = vand.u32 %v84, 4294901760
    %v396 = vsub.f32 %v84, %v395
    %397 = vmatpush1.msra.mxu0 %v396
    %398 = vmatprep.subr.mxu0 0.0
    %v399 = vand.u32 %v85, 4294901760
    %v400 = vsub.f32 %v85, %v399
    %401 = vmatpush1.msra.mxu0 %v400
    %402 = vmatprep.subr.mxu0 0.0
    %v403 = vand.u32 %v86, 4294901760
    %v404 = vsub.f32 %v86, %v403
    %405 = vmatpush1.msra.mxu0 %v404
    %406 = vmatprep.subr.mxu0 0.0
    %v407 = vand.u32 %v87, 4294901760
    %v408 = vsub.f32 %v87, %v407
    %409 = vmatpush1.msra.mxu0 %v408
    %410 = vmatprep.subr.mxu0 0.0
    %411 = vmatpush1.msra.mxu0 0.0
    %412 = vmatprep.subr.mxu0 0.0
    %413 = vmatpush1.msra.mxu0 0.0
    %414 = vmatprep.subr.mxu0 0.0
    %415 = vmatpush1.msra.mxu0 0.0
    %416 = vmatprep.subr.mxu0 0.0
    %417 = vmatpush1.msra.mxu0 0.0
    %418 = vmatprep.subr.mxu0 0.0
    %419 = vmatpush1.msra.mxu0 0.0
    %420 = vmatprep.subr.mxu0 0.0
    %421 = vmatpush1.msra.mxu0 0.0
    %422 = vmatprep.subr.mxu0 0.0
    %423 = vmatpush1.msra.mxu0 0.0
    %424 = vmatprep.subr.mxu0 0.0
    %425 = vmatpush1.msra.mxu0 0.0
    %426 = vmatprep.subr.mxu0 0.0
    %427 = vmatpush1.msra.mxu0 0.0
    %428 = vmatprep.subr.mxu0 0.0
    %429 = vmatpush1.msra.mxu0 0.0
    %430 = vmatprep.subr.mxu0 0.0
    %431 = vmatpush1.msra.mxu0 0.0
    %432 = vmatprep.subr.mxu0 0.0
    %433 = vmatpush1.msra.mxu0 0.0
    %434 = vmatprep.subr.mxu0 0.0
    %435 = vmatpush1.msra.mxu0 0.0
    %436 = vmatprep.subr.mxu0 0.0
    %437 = vmatpush1.msra.mxu0 0.0
    %438 = vmatprep.subr.mxu0 0.0
    %439 = vmatpush1.msra.mxu0 0.0
    %440 = vmatprep.subr.mxu0 0.0
    %441 = vmatpush1.msra.mxu0 0.0
    %442 = vmatprep.mubr.f32.mxu0 0.0
    %v443 = vand.u32 %v70, 4294901760
    %v444 = vsub.f32 %v70, %v443
    %445 = vmatmul.mubr.f32.gmra.mrb[0].mxu0 %v444
    %v446 = vpop.f32.mrb[0].mxu0
    %v447 = vadd.f32 %v337, %v446
    %v448 = vpop.f32.mrb[0].mxu0
    %449 = vmatprep.mubr.f32.mxu0 0.0
    %v450 = vand.u32 %v71, 4294901760
    %v451 = vsub.f32 %v71, %v450
    %452 = vmatmul.mubr.f32.gmra.mrb[0].mxu0 %v451
    %v453 = vpop.f32.mrb[0].mxu0
    %v454 = vadd.f32 %v343, %v453
    %v455 = vpop.f32.mrb[0].mxu0
    %456 = vdwg.mxu0
    %457 = vmatprep.subr.mxu0 0.0
    %v458 = vand.u32 %v72, 4294901760
    %459 = vmatpush1.msra.mxu0 %v458
    %460 = vmatprep.subr.mxu0 0.0
    %v461 = vand.u32 %v73, 4294901760
    %462 = vmatpush1.msra.mxu0 %v461
    %463 = vmatprep.subr.mxu0 0.0
    %v464 = vand.u32 %v74, 4294901760
    %465 = vmatpush1.msra.mxu0 %v464
    %466 = vmatprep.subr.mxu0 0.0
    %v467 = vand.u32 %v75, 4294901760
    %468 = vmatpush1.msra.mxu0 %v467
    %469 = vmatprep.subr.mxu0 0.0
    %v470 = vand.u32 %v76, 4294901760
    %471 = vmatpush1.msra.mxu0 %v470
    %472 = vmatprep.subr.mxu0 0.0
    %v473 = vand.u32 %v77, 4294901760
    %474 = vmatpush1.msra.mxu0 %v473
    %475 = vmatprep.subr.mxu0 0.0
    %v476 = vand.u32 %v78, 4294901760
    %477 = vmatpush1.msra.mxu0 %v476
    %478 = vmatprep.subr.mxu0 0.0
    %v479 = vand.u32 %v79, 4294901760
    %480 = vmatpush1.msra.mxu0 %v479
    %481 = vmatprep.subr.mxu0 0.0
    %v482 = vand.u32 %v80, 4294901760
    %483 = vmatpush1.msra.mxu0 %v482
    %484 = vmatprep.subr.mxu0 0.0
    %v485 = vand.u32 %v81, 4294901760
    %486 = vmatpush1.msra.mxu0 %v485
    %487 = vmatprep.subr.mxu0 0.0
    %v488 = vand.u32 %v82, 4294901760
    %489 = vmatpush1.msra.mxu0 %v488
    %490 = vmatprep.subr.mxu0 0.0
    %v491 = vand.u32 %v83, 4294901760
    %492 = vmatpush1.msra.mxu0 %v491
    %493 = vmatprep.subr.mxu0 0.0
    %v494 = vand.u32 %v84, 4294901760
    %495 = vmatpush1.msra.mxu0 %v494
    %496 = vmatprep.subr.mxu0 0.0
    %v497 = vand.u32 %v85, 4294901760
    %498 = vmatpush1.msra.mxu0 %v497
    %499 = vmatprep.subr.mxu0 0.0
    %v500 = vand.u32 %v86, 4294901760
    %501 = vmatpush1.msra.mxu0 %v500
    %502 = vmatprep.subr.mxu0 0.0
    %v503 = vand.u32 %v87, 4294901760
    %504 = vmatpush1.msra.mxu0 %v503
    %505 = vmatprep.subr.mxu0 0.0
    %506 = vmatpush1.msra.mxu0 0.0
    %507 = vmatprep.subr.mxu0 0.0
    %508 = vmatpush1.msra.mxu0 0.0
    %509 = vmatprep.subr.mxu0 0.0
    %510 = vmatpush1.msra.mxu0 0.0
    %511 = vmatprep.subr.mxu0 0.0
    %512 = vmatpush1.msra.mxu0 0.0
    %513 = vmatprep.subr.mxu0 0.0
    %514 = vmatpush1.msra.mxu0 0.0
    %515 = vmatprep.subr.mxu0 0.0
    %516 = vmatpush1.msra.mxu0 0.0
    %517 = vmatprep.subr.mxu0 0.0
    %518 = vmatpush1.msra.mxu0 0.0
    %519 = vmatprep.subr.mxu0 0.0
    %520 = vmatpush1.msra.mxu0 0.0
    %521 = vmatprep.subr.mxu0 0.0
    %522 = vmatpush1.msra.mxu0 0.0
    %523 = vmatprep.subr.mxu0 0.0
    %524 = vmatpush1.msra.mxu0 0.0
    %525 = vmatprep.subr.mxu0 0.0
    %526 = vmatpush1.msra.mxu0 0.0
    %527 = vmatprep.subr.mxu0 0.0
    %528 = vmatpush1.msra.mxu0 0.0
    %529 = vmatprep.subr.mxu0 0.0
    %530 = vmatpush1.msra.mxu0 0.0
    %531 = vmatprep.subr.mxu0 0.0
    %532 = vmatpush1.msra.mxu0 0.0
    %533 = vmatprep.subr.mxu0 0.0
    %534 = vmatpush1.msra.mxu0 0.0
    %535 = vmatprep.subr.mxu0 0.0
    %536 = vmatpush1.msra.mxu0 0.0
    %537 = vmatprep.mubr.f32.mxu0 0.0
    %v538 = vand.u32 %v70, 4294901760
    %v539 = vsub.f32 %v70, %v538
    %v540 = vand.u32 %v539, 4294901760
    %541 = vmatmul.mubr.f32.gmra.mrb[0].mxu0 %v540
    %v542 = vpop.f32.mrb[0].mxu0
    %v543 = vadd.f32 %v447, %v542
    %v544 = vpop.f32.mrb[0].mxu0
    %545 = vmatprep.mubr.f32.mxu0 0.0
    %v546 = vand.u32 %v71, 4294901760
    %v547 = vsub.f32 %v71, %v546
    %v548 = vand.u32 %v547, 4294901760
    %549 = vmatmul.mubr.f32.gmra.mrb[0].mxu0 %v548
    %v550 = vpop.f32.mrb[0].mxu0
    %v551 = vadd.f32 %v454, %v550
    %v552 = vpop.f32.mrb[0].mxu0
    %553 = vdwg.mxu0
    %554 = vmatprep.subr.mxu0 0.0
    %v555 = vand.u32 %v72, 4294901760
    %v556 = vsub.f32 %v72, %v555
    %v557 = vand.u32 %v556, 4294901760
    %558 = vmatpush1.msra.mxu0 %v557
    %559 = vmatprep.subr.mxu0 0.0
    %v560 = vand.u32 %v73, 4294901760
    %v561 = vsub.f32 %v73, %v560
    %v562 = vand.u32 %v561, 4294901760
    %563 = vmatpush1.msra.mxu0 %v562
    %564 = vmatprep.subr.mxu0 0.0
    %v565 = vand.u32 %v74, 4294901760
    %v566 = vsub.f32 %v74, %v565
    %v567 = vand.u32 %v566, 4294901760
    %568 = vmatpush1.msra.mxu0 %v567
    %569 = vmatprep.subr.mxu0 0.0
    %v570 = vand.u32 %v75, 4294901760
    %v571 = vsub.f32 %v75, %v570
    %v572 = vand.u32 %v571, 4294901760
    %573 = vmatpush1.msra.mxu0 %v572
    %574 = vmatprep.subr.mxu0 0.0
    %v575 = vand.u32 %v76, 4294901760
    %v576 = vsub.f32 %v76, %v575
    %v577 = vand.u32 %v576, 4294901760
    %578 = vmatpush1.msra.mxu0 %v577
    %579 = vmatprep.subr.mxu0 0.0
    %v580 = vand.u32 %v77, 4294901760
    %v581 = vsub.f32 %v77, %v580
    %v582 = vand.u32 %v581, 4294901760
    %583 = vmatpush1.msra.mxu0 %v582
    %584 = vmatprep.subr.mxu0 0.0
    %v585 = vand.u32 %v78, 4294901760
    %v586 = vsub.f32 %v78, %v585
    %v587 = vand.u32 %v586, 4294901760
    %588 = vmatpush1.msra.mxu0 %v587
    %589 = vmatprep.subr.mxu0 0.0
    %v590 = vand.u32 %v79, 4294901760
    %v591 = vsub.f32 %v79, %v590
    %v592 = vand.u32 %v591, 4294901760
    %593 = vmatpush1.msra.mxu0 %v592
    %594 = vmatprep.subr.mxu0 0.0
    %v595 = vand.u32 %v80, 4294901760
    %v596 = vsub.f32 %v80, %v595
    %v597 = vand.u32 %v596, 4294901760
    %598 = vmatpush1.msra.mxu0 %v597
    %599 = vmatprep.subr.mxu0 0.0
    %v600 = vand.u32 %v81, 4294901760
    %v601 = vsub.f32 %v81, %v600
    %v602 = vand.u32 %v601, 4294901760
    %603 = vmatpush1.msra.mxu0 %v602
    %604 = vmatprep.subr.mxu0 0.0
    %v605 = vand.u32 %v82, 4294901760
    %v606 = vsub.f32 %v82, %v605
    %v607 = vand.u32 %v606, 4294901760
    %608 = vmatpush1.msra.mxu0 %v607
    %609 = vmatprep.subr.mxu0 0.0
    %v610 = vand.u32 %v83, 4294901760
    %v611 = vsub.f32 %v83, %v610
    %v612 = vand.u32 %v611, 4294901760
    %613 = vmatpush1.msra.mxu0 %v612
    %614 = vmatprep.subr.mxu0 0.0
    %v615 = vand.u32 %v84, 4294901760
    %v616 = vsub.f32 %v84, %v615
    %v617 = vand.u32 %v616, 4294901760
    %618 = vmatpush1.msra.mxu0 %v617
    %619 = vmatprep.subr.mxu0 0.0
    %v620 = vand.u32 %v85, 4294901760
    %v621 = vsub.f32 %v85, %v620
    %v622 = vand.u32 %v621, 4294901760
    %623 = vmatpush1.msra.mxu0 %v622
    %624 = vmatprep.subr.mxu0 0.0
    %v625 = vand.u32 %v86, 4294901760
    %v626 = vsub.f32 %v86, %v625
    %v627 = vand.u32 %v626, 4294901760
    %628 = vmatpush1.msra.mxu0 %v627
    %629 = vmatprep.subr.mxu0 0.0
    %v630 = vand.u32 %v87, 4294901760
    %v631 = vsub.f32 %v87, %v630
    %v632 = vand.u32 %v631, 4294901760
    %633 = vmatpush1.msra.mxu0 %v632
    %634 = vmatprep.subr.mxu0 0.0
    %635 = vmatpush1.msra.mxu0 0.0
    %636 = vmatprep.subr.mxu0 0.0
    %637 = vmatpush1.msra.mxu0 0.0
    %638 = vmatprep.subr.mxu0 0.0
    %639 = vmatpush1.msra.mxu0 0.0
    %640 = vmatprep.subr.mxu0 0.0
    %641 = vmatpush1.msra.mxu0 0.0
    %642 = vmatprep.subr.mxu0 0.0
    %643 = vmatpush1.msra.mxu0 0.0
    %644 = vmatprep.subr.mxu0 0.0
    %645 = vmatpush1.msra.mxu0 0.0
    %646 = vmatprep.subr.mxu0 0.0
    %647 = vmatpush1.msra.mxu0 0.0
    %648 = vmatprep.subr.mxu0 0.0
    %649 = vmatpush1.msra.mxu0 0.0
    %650 = vmatprep.subr.mxu0 0.0
    %651 = vmatpush1.msra.mxu0 0.0
    %652 = vmatprep.subr.mxu0 0.0
    %653 = vmatpush1.msra.mxu0 0.0
    %654 = vmatprep.subr.mxu0 0.0
    %655 = vmatpush1.msra.mxu0 0.0
    %656 = vmatprep.subr.mxu0 0.0
    %657 = vmatpush1.msra.mxu0 0.0
    %658 = vmatprep.subr.mxu0 0.0
    %659 = vmatpush1.msra.mxu0 0.0
    %660 = vmatprep.subr.mxu0 0.0
    %661 = vmatpush1.msra.mxu0 0.0
    %662 = vmatprep.subr.mxu0 0.0
    %663 = vmatpush1.msra.mxu0 0.0
    %664 = vmatprep.subr.mxu0 0.0
    %665 = vmatpush1.msra.mxu0 0.0
    %666 = vmatprep.mubr.f32.mxu0 0.0
    %v667 = vand.u32 %v70, 4294901760
    %668 = vmatmul.mubr.f32.gmra.mrb[0].mxu0 %v667
    %v669 = vpop.f32.mrb[0].mxu0
    %v670 = vadd.f32 %v543, %v669
    %v671 = vpop.f32.mrb[0].mxu0
    %672 = vmatprep.mubr.f32.mxu0 0.0
    %v673 = vand.u32 %v71, 4294901760
    %674 = vmatmul.mubr.f32.gmra.mrb[0].mxu0 %v673
    %v675 = vpop.f32.mrb[0].mxu0
    %v676 = vadd.f32 %v551, %v675
    %v677 = vpop.f32.mrb[0].mxu0
    %678 = vdwg.mxu0
    %679 = vmatprep.subr.mxu0 0.0
    %v680 = vand.u32 %v72, 4294901760
    %681 = vmatpush1.msra.mxu0 %v680
    %682 = vmatprep.subr.mxu0 0.0
    %v683 = vand.u32 %v73, 4294901760
    %684 = vmatpush1.msra.mxu0 %v683
    %685 = vmatprep.subr.mxu0 0.0
    %v686 = vand.u32 %v74, 4294901760
    %687 = vmatpush1.msra.mxu0 %v686
    %688 = vmatprep.subr.mxu0 0.0
    %v689 = vand.u32 %v75, 4294901760
    %690 = vmatpush1.msra.mxu0 %v689
    %691 = vmatprep.subr.mxu0 0.0
    %v692 = vand.u32 %v76, 4294901760
    %693 = vmatpush1.msra.mxu0 %v692
    %694 = vmatprep.subr.mxu0 0.0
    %v695 = vand.u32 %v77, 4294901760
    %696 = vmatpush1.msra.mxu0 %v695
    %697 = vmatprep.subr.mxu0 0.0
    %v698 = vand.u32 %v78, 4294901760
    %699 = vmatpush1.msra.mxu0 %v698
    %700 = vmatprep.subr.mxu0 0.0
    %v701 = vand.u32 %v79, 4294901760
    %702 = vmatpush1.msra.mxu0 %v701
    %703 = vmatprep.subr.mxu0 0.0
    %v704 = vand.u32 %v80, 4294901760
    %705 = vmatpush1.msra.mxu0 %v704
    %706 = vmatprep.subr.mxu0 0.0
    %v707 = vand.u32 %v81, 4294901760
    %708 = vmatpush1.msra.mxu0 %v707
    %709 = vmatprep.subr.mxu0 0.0
    %v710 = vand.u32 %v82, 4294901760
    %711 = vmatpush1.msra.mxu0 %v710
    %712 = vmatprep.subr.mxu0 0.0
    %v713 = vand.u32 %v83, 4294901760
    %714 = vmatpush1.msra.mxu0 %v713
    %715 = vmatprep.subr.mxu0 0.0
    %v716 = vand.u32 %v84, 4294901760
    %717 = vmatpush1.msra.mxu0 %v716
    %718 = vmatprep.subr.mxu0 0.0
    %v719 = vand.u32 %v85, 4294901760
    %720 = vmatpush1.msra.mxu0 %v719
    %721 = vmatprep.subr.mxu0 0.0
    %v722 = vand.u32 %v86, 4294901760
    %723 = vmatpush1.msra.mxu0 %v722
    %724 = vmatprep.subr.mxu0 0.0
    %v725 = vand.u32 %v87, 4294901760
    %726 = vmatpush1.msra.mxu0 %v725
    %727 = vmatprep.subr.mxu0 0.0
    %728 = vmatpush1.msra.mxu0 0.0
    %729 = vmatprep.subr.mxu0 0.0
    %730 = vmatpush1.msra.mxu0 0.0
    %731 = vmatprep.subr.mxu0 0.0
    %732 = vmatpush1.msra.mxu0 0.0
    %733 = vmatprep.subr.mxu0 0.0
    %734 = vmatpush1.msra.mxu0 0.0
    %735 = vmatprep.subr.mxu0 0.0
    %736 = vmatpush1.msra.mxu0 0.0
    %737 = vmatprep.subr.mxu0 0.0
    %738 = vmatpush1.msra.mxu0 0.0
    %739 = vmatprep.subr.mxu0 0.0
    %740 = vmatpush1.msra.mxu0 0.0
    %741 = vmatprep.subr.mxu0 0.0
    %742 = vmatpush1.msra.mxu0 0.0
    %743 = vmatprep.subr.mxu0 0.0
    %744 = vmatpush1.msra.mxu0 0.0
    %745 = vmatprep.subr.mxu0 0.0
    %746 = vmatpush1.msra.mxu0 0.0
    %747 = vmatprep.subr.mxu0 0.0
    %748 = vmatpush1.msra.mxu0 0.0
    %749 = vmatprep.subr.mxu0 0.0
    %750 = vmatpush1.msra.mxu0 0.0
    %751 = vmatprep.subr.mxu0 0.0
    %752 = vmatpush1.msra.mxu0 0.0
    %753 = vmatprep.subr.mxu0 0.0
    %754 = vmatpush1.msra.mxu0 0.0
    %755 = vmatprep.subr.mxu0 0.0
    %756 = vmatpush1.msra.mxu0 0.0
    %757 = vmatprep.subr.mxu0 0.0
    %758 = vmatpush1.msra.mxu0 0.0
    %759 = vmatprep.mubr.f32.mxu0 0.0
    %v760 = vand.u32 %v70, 4294901760
    %761 = vmatmul.mubr.f32.gmra.mrb[0].mxu0 %v760
    %v762 = vpop.f32.mrb[0].mxu0
    %v763 = vadd.f32 %v670, %v762
    %v764 = vpop.f32.mrb[0].mxu0
    %765 = vmatprep.mubr.f32.mxu0 0.0
    %v766 = vand.u32 %v71, 4294901760
    %767 = vmatmul.mubr.f32.gmra.mrb[0].mxu0 %v766
    %v768 = vpop.f32.mrb[0].mxu0
    %v769 = vadd.f32 %v676, %v768
    %v770 = vpop.f32.mrb[0].mxu0
    %771 = vdwg.mxu0
    %v772 = vadd.f32 %v68, %v763
    %v773 = vadd.f32 %v69, %v769
    %774 = vst [vmem:[#allocation2] sm:$0xff] %v772
    %775 = vst [vmem:[#allocation2 + $0x8] sm:$0xff] %v773
    // Predicated region
    $region38: #{tpu_custom_call.1} parent=1 // pred_check
      %p776 = pneg %p62
    $region39: #{tpu_custom_call.1} parent=1 // pred_check_branch
      %778 = sbr.rel (%p776) target = $region41
    $region40: #{tpu_custom_call.1} parent=1 // pred_region
      %v779 = vld [vmem:[#allocation2] sm:$0xff]
      %v780 = vld [vmem:[#allocation2 + $0x8] sm:$0xff]
      %v781 = vld [vmem:[%s2] sm:$0x1]
      %v783 = vlaneseq
      %v784 = vshrl.u32 %v783, 7
      %v785 = vsub.s32 0, %v784
      %v786 = vrot.slane %v781, %v785
      %v788 = vadd.f32 %v779, %v786
      %v789 = vadd.f32 %v780, %v786
      %v790 = vmax.f32 %v788, 0.0
      %v791 = vmax.f32 %v789, 0.0
      %v792 = vld [vmem:[#allocation8] sm:$0xff]
      %v793 = vld [vmem:[#allocation8 + $0x8] sm:$0xff]
      %v794 = vld [vmem:[#allocation8 + $0x10] sm:$0xff]
      %v795 = vld [vmem:[#allocation8 + $0x18] sm:$0xff]
      %v796 = vld [vmem:[#allocation8 + $0x20] sm:$0xff]
      %v797 = vld [vmem:[#allocation8 + $0x28] sm:$0xff]
      %v798 = vld [vmem:[#allocation8 + $0x30] sm:$0xff]
      %v799 = vld [vmem:[#allocation8 + $0x38] sm:$0xff]
      %v800 = vld [vmem:[#allocation8 + $0x40] sm:$0xff]
      %v801 = vld [vmem:[#allocation8 + $0x48] sm:$0xff]
      %v802 = vld [vmem:[#allocation8 + $0x50] sm:$0xff]
      %v803 = vld [vmem:[#allocation8 + $0x58] sm:$0xff]
      %v804 = vld [vmem:[#allocation8 + $0x60] sm:$0xff]
      %v805 = vld [vmem:[#allocation8 + $0x68] sm:$0xff]
      %v806 = vld [vmem:[#allocation8 + $0x70] sm:$0xff]
      %v807 = vld [vmem:[#allocation8 + $0x78] sm:$0xff]
      %v808 = vld [vmem:[%s4] sm:$0x1]
      %v810 = vlaneseq
      %v811 = vshrl.u32 %v810, 7
      %v812 = vsub.s32 0, %v811
      %v813 = vrot.slane %v808, %v812
      %815 = vmatprep.subr.mxu0 0.0
      %v816 = vand.u32 %v792, 4294901760
      %817 = vmatpush1.msra.mxu0 %v816
      %818 = vmatprep.subr.mxu0 0.0
      %v819 = vand.u32 %v793, 4294901760
      %820 = vmatpush1.msra.mxu0 %v819
      %821 = vmatprep.subr.mxu0 0.0
      %v822 = vand.u32 %v794, 4294901760
      %823 = vmatpush1.msra.mxu0 %v822
      %824 = vmatprep.subr.mxu0 0.0
      %v825 = vand.u32 %v795, 4294901760
      %826 = vmatpush1.msra.mxu0 %v825
      %827 = vmatprep.subr.mxu0 0.0
      %v828 = vand.u32 %v796, 4294901760
      %829 = vmatpush1.msra.mxu0 %v828
      %830 = vmatprep.subr.mxu0 0.0
      %v831 = vand.u32 %v797, 4294901760
      %832 = vmatpush1.msra.mxu0 %v831
      %833 = vmatprep.subr.mxu0 0.0
      %v834 = vand.u32 %v798, 4294901760
      %835 = vmatpush1.msra.mxu0 %v834
      %836 = vmatprep.subr.mxu0 0.0
      %v837 = vand.u32 %v799, 4294901760
      %838 = vmatpush1.msra.mxu0 %v837
      %839 = vmatprep.subr.mxu0 0.0
      %v840 = vand.u32 %v800, 4294901760
      %841 = vmatpush1.msra.mxu0 %v840
      %842 = vmatprep.subr.mxu0 0.0
      %v843 = vand.u32 %v801, 4294901760
      %844 = vmatpush1.msra.mxu0 %v843
      %845 = vmatprep.subr.mxu0 0.0
      %v846 = vand.u32 %v802, 4294901760
      %847 = vmatpush1.msra.mxu0 %v846
      %848 = vmatprep.subr.mxu0 0.0
      %v849 = vand.u32 %v803, 4294901760
      %850 = vmatpush1.msra.mxu0 %v849
      %851 = vmatprep.subr.mxu0 0.0
      %v852 = vand.u32 %v804, 4294901760
      %853 = vmatpush1.msra.mxu0 %v852
      %854 = vmatprep.subr.mxu0 0.0
      %v855 = vand.u32 %v805, 4294901760
      %856 = vmatpush1.msra.mxu0 %v855
      %857 = vmatprep.subr.mxu0 0.0
      %v858 = vand.u32 %v806, 4294901760
      %859 = vmatpush1.msra.mxu0 %v858
      %860 = vmatprep.subr.mxu0 0.0
      %v861 = vand.u32 %v807, 4294901760
      %862 = vmatpush1.msra.mxu0 %v861
      %863 = vmatprep.subr.mxu0 0.0
      %864 = vmatpush1.msra.mxu0 0.0
      %865 = vmatprep.subr.mxu0 0.0
      %866 = vmatpush1.msra.mxu0 0.0
      %867 = vmatprep.subr.mxu0 0.0
      %868 = vmatpush1.msra.mxu0 0.0
      %869 = vmatprep.subr.mxu0 0.0
      %870 = vmatpush1.msra.mxu0 0.0
      %871 = vmatprep.subr.mxu0 0.0
      %872 = vmatpush1.msra.mxu0 0.0
      %873 = vmatprep.subr.mxu0 0.0
      %874 = vmatpush1.msra.mxu0 0.0
      %875 = vmatprep.subr.mxu0 0.0
      %876 = vmatpush1.msra.mxu0 0.0
      %877 = vmatprep.subr.mxu0 0.0
      %878 = vmatpush1.msra.mxu0 0.0
      %879 = vmatprep.subr.mxu0 0.0
      %880 = vmatpush1.msra.mxu0 0.0
      %881 = vmatprep.subr.mxu0 0.0
      %882 = vmatpush1.msra.mxu0 0.0
      %883 = vmatprep.subr.mxu0 0.0
      %884 = vmatpush1.msra.mxu0 0.0
      %885 = vmatprep.subr.mxu0 0.0
      %886 = vmatpush1.msra.mxu0 0.0
      %887 = vmatprep.subr.mxu0 0.0
      %888 = vmatpush1.msra.mxu0 0.0
      %889 = vmatprep.subr.mxu0 0.0
      %890 = vmatpush1.msra.mxu0 0.0
      %891 = vmatprep.subr.mxu0 0.0
      %892 = vmatpush1.msra.mxu0 0.0
      %893 = vmatprep.subr.mxu0 0.0
      %894 = vmatpush1.msra.mxu0 0.0
      %895 = vmatprep.mubr.f32.mxu0 0.0
      %v896 = vand.u32 %v790, 4294901760
      %v897 = vsub.f32 %v790, %v896
      %v898 = vand.u32 %v897, 4294901760
      %v899 = vsub.f32 %v897, %v898
      %v900 = vand.u32 %v899, 4294901760
      %901 = vmatmul.mubr.f32.gmra.mrb[0].mxu0 %v900
      %v902 = vpop.f32.mrb[0].mxu0
      %v903 = vadd.f32 %v813, %v902
      %v904 = vpop.f32.mrb[0].mxu0
      %905 = vmatprep.mubr.f32.mxu0 0.0
      %v906 = vand.u32 %v791, 4294901760
      %v907 = vsub.f32 %v791, %v906
      %v908 = vand.u32 %v907, 4294901760
      %v909 = vsub.f32 %v907, %v908
      %v910 = vand.u32 %v909, 4294901760
      %911 = vmatmul.mubr.f32.gmra.mrb[0].mxu0 %v910
      %v912 = vpop.f32.mrb[0].mxu0
      %v913 = vadd.f32 %v813, %v912
      %v914 = vpop.f32.mrb[0].mxu0
      %915 = vdwg.mxu0
      %916 = vmatprep.subr.mxu0 0.0
      %v917 = vand.u32 %v792, 4294901760
      %v918 = vsub.f32 %v792, %v917
      %v919 = vand.u32 %v918, 4294901760
      %v920 = vsub.f32 %v918, %v919
      %v921 = vand.u32 %v920, 4294901760
      %922 = vmatpush1.msra.mxu0 %v921
      %923 = vmatprep.subr.mxu0 0.0
      %v924 = vand.u32 %v793, 4294901760
      %v925 = vsub.f32 %v793, %v924
      %v926 = vand.u32 %v925, 4294901760
      %v927 = vsub.f32 %v925, %v926
      %v928 = vand.u32 %v927, 4294901760
      %929 = vmatpush1.msra.mxu0 %v928
      %930 = vmatprep.subr.mxu0 0.0
      %v931 = vand.u32 %v794, 4294901760
      %v932 = vsub.f32 %v794, %v931
      %v933 = vand.u32 %v932, 4294901760
      %v934 = vsub.f32 %v932, %v933
      %v935 = vand.u32 %v934, 4294901760
      %936 = vmatpush1.msra.mxu0 %v935
      %937 = vmatprep.subr.mxu0 0.0
      %v938 = vand.u32 %v795, 4294901760
      %v939 = vsub.f32 %v795, %v938
      %v940 = vand.u32 %v939, 4294901760
      %v941 = vsub.f32 %v939, %v940
      %v942 = vand.u32 %v941, 4294901760
      %943 = vmatpush1.msra.mxu0 %v942
      %944 = vmatprep.subr.mxu0 0.0
      %v945 = vand.u32 %v796, 4294901760
      %v946 = vsub.f32 %v796, %v945
      %v947 = vand.u32 %v946, 4294901760
      %v948 = vsub.f32 %v946, %v947
      %v949 = vand.u32 %v948, 4294901760
      %950 = vmatpush1.msra.mxu0 %v949
      %951 = vmatprep.subr.mxu0 0.0
      %v952 = vand.u32 %v797, 4294901760
      %v953 = vsub.f32 %v797, %v952
      %v954 = vand.u32 %v953, 4294901760
      %v955 = vsub.f32 %v953, %v954
      %v956 = vand.u32 %v955, 4294901760
      %957 = vmatpush1.msra.mxu0 %v956
      %958 = vmatprep.subr.mxu0 0.0
      %v959 = vand.u32 %v798, 4294901760
      %v960 = vsub.f32 %v798, %v959
      %v961 = vand.u32 %v960, 4294901760
      %v962 = vsub.f32 %v960, %v961
      %v963 = vand.u32 %v962, 4294901760
      %964 = vmatpush1.msra.mxu0 %v963
      %965 = vmatprep.subr.mxu0 0.0
      %v966 = vand.u32 %v799, 4294901760
      %v967 = vsub.f32 %v799, %v966
      %v968 = vand.u32 %v967, 4294901760
      %v969 = vsub.f32 %v967, %v968
      %v970 = vand.u32 %v969, 4294901760
      %971 = vmatpush1.msra.mxu0 %v970
      %972 = vmatprep.subr.mxu0 0.0
      %v973 = vand.u32 %v800, 4294901760
      %v974 = vsub.f32 %v800, %v973
      %v975 = vand.u32 %v974, 4294901760
      %v976 = vsub.f32 %v974, %v975
      %v977 = vand.u32 %v976, 4294901760
      %978 = vmatpush1.msra.mxu0 %v977
      %979 = vmatprep.subr.mxu0 0.0
      %v980 = vand.u32 %v801, 4294901760
      %v981 = vsub.f32 %v801, %v980
      %v982 = vand.u32 %v981, 4294901760
      %v983 = vsub.f32 %v981, %v982
      %v984 = vand.u32 %v983, 4294901760
      %985 = vmatpush1.msra.mxu0 %v984
      %986 = vmatprep.subr.mxu0 0.0
      %v987 = vand.u32 %v802, 4294901760
      %v988 = vsub.f32 %v802, %v987
      %v989 = vand.u32 %v988, 4294901760
      %v990 = vsub.f32 %v988, %v989
      %v991 = vand.u32 %v990, 4294901760
      %992 = vmatpush1.msra.mxu0 %v991
      %993 = vmatprep.subr.mxu0 0.0
      %v994 = vand.u32 %v803, 4294901760
      %v995 = vsub.f32 %v803, %v994
      %v996 = vand.u32 %v995, 4294901760
      %v997 = vsub.f32 %v995, %v996
      %v998 = vand.u32 %v997, 4294901760
      %999 = vmatpush1.msra.mxu0 %v998
      %1000 = vmatprep.subr.mxu0 0.0
      %v1001 = vand.u32 %v804, 4294901760
      %v1002 = vsub.f32 %v804, %v1001
      %v1003 = vand.u32 %v1002, 4294901760
      %v1004 = vsub.f32 %v1002, %v1003
      %v1005 = vand.u32 %v1004, 4294901760
      %1006 = vmatpush1.msra.mxu0 %v1005
      %1007 = vmatprep.subr.mxu0 0.0
      %v1008 = vand.u32 %v805, 4294901760
      %v1009 = vsub.f32 %v805, %v1008
      %v1010 = vand.u32 %v1009, 4294901760
      %v1011 = vsub.f32 %v1009, %v1010
      %v1012 = vand.u32 %v1011, 4294901760
      %1013 = vmatpush1.msra.mxu0 %v1012
      %1014 = vmatprep.subr.mxu0 0.0
      %v1015 = vand.u32 %v806, 4294901760
      %v1016 = vsub.f32 %v806, %v1015
      %v1017 = vand.u32 %v1016, 4294901760
      %v1018 = vsub.f32 %v1016, %v1017
      %v1019 = vand.u32 %v1018, 4294901760
      %1020 = vmatpush1.msra.mxu0 %v1019
      %1021 = vmatprep.subr.mxu0 0.0
      %v1022 = vand.u32 %v807, 4294901760
      %v1023 = vsub.f32 %v807, %v1022
      %v1024 = vand.u32 %v1023, 4294901760
      %v1025 = vsub.f32 %v1023, %v1024
      %v1026 = vand.u32 %v1025, 4294901760
      %1027 = vmatpush1.msra.mxu0 %v1026
      %1028 = vmatprep.subr.mxu0 0.0
      %1029 = vmatpush1.msra.mxu0 0.0
      %1030 = vmatprep.subr.mxu0 0.0
      %1031 = vmatpush1.msra.mxu0 0.0
      %1032 = vmatprep.subr.mxu0 0.0
      %1033 = vmatpush1.msra.mxu0 0.0
      %1034 = vmatprep.subr.mxu0 0.0
      %1035 = vmatpush1.msra.mxu0 0.0
      %1036 = vmatprep.subr.mxu0 0.0
      %1037 = vmatpush1.msra.mxu0 0.0
      %1038 = vmatprep.subr.mxu0 0.0
      %1039 = vmatpush1.msra.mxu0 0.0
      %1040 = vmatprep.subr.mxu0 0.0
      %1041 = vmatpush1.msra.mxu0 0.0
      %1042 = vmatprep.subr.mxu0 0.0
      %1043 = vmatpush1.msra.mxu0 0.0
      %1044 = vmatprep.subr.mxu0 0.0
      %1045 = vmatpush1.msra.mxu0 0.0
      %1046 = vmatprep.subr.mxu0 0.0
      %1047 = vmatpush1.msra.mxu0 0.0
      %1048 = vmatprep.subr.mxu0 0.0
      %1049 = vmatpush1.msra.mxu0 0.0
      %1050 = vmatprep.subr.mxu0 0.0
      %1051 = vmatpush1.msra.mxu0 0.0
      %1052 = vmatprep.subr.mxu0 0.0
      %1053 = vmatpush1.msra.mxu0 0.0
      %1054 = vmatprep.subr.mxu0 0.0
      %1055 = vmatpush1.msra.mxu0 0.0
      %1056 = vmatprep.subr.mxu0 0.0
      %1057 = vmatpush1.msra.mxu0 0.0
      %1058 = vmatprep.subr.mxu0 0.0
      %1059 = vmatpush1.msra.mxu0 0.0
      %1060 = vmatprep.mubr.f32.mxu0 0.0
      %v1061 = vand.u32 %v790, 4294901760
      %1062 = vmatmul.mubr.f32.gmra.mrb[0].mxu0 %v1061
      %v1063 = vpop.f32.mrb[0].mxu0
      %v1064 = vadd.f32 %v903, %v1063
      %v1065 = vpop.f32.mrb[0].mxu0
      %1066 = vmatprep.mubr.f32.mxu0 0.0
      %v1067 = vand.u32 %v791, 4294901760
      %1068 = vmatmul.mubr.f32.gmra.mrb[0].mxu0 %v1067
      %v1069 = vpop.f32.mrb[0].mxu0
      %v1070 = vadd.f32 %v913, %v1069
      %v1071 = vpop.f32.mrb[0].mxu0
      %1072 = vdwg.mxu0
      %1073 = vmatprep.subr.mxu0 0.0
      %v1074 = vand.u32 %v792, 4294901760
      %v1075 = vsub.f32 %v792, %v1074
      %1076 = vmatpush1.msra.mxu0 %v1075
      %1077 = vmatprep.subr.mxu0 0.0
      %v1078 = vand.u32 %v793, 4294901760
      %v1079 = vsub.f32 %v793, %v1078
      %1080 = vmatpush1.msra.mxu0 %v1079
      %1081 = vmatprep.subr.mxu0 0.0
      %v1082 = vand.u32 %v794, 4294901760
      %v1083 = vsub.f32 %v794, %v1082
      %1084 = vmatpush1.msra.mxu0 %v1083
      %1085 = vmatprep.subr.mxu0 0.0
      %v1086 = vand.u32 %v795, 4294901760
      %v1087 = vsub.f32 %v795, %v1086
      %1088 = vmatpush1.msra.mxu0 %v1087
      %1089 = vmatprep.subr.mxu0 0.0
      %v1090 = vand.u32 %v796, 4294901760
      %v1091 = vsub.f32 %v796, %v1090
      %1092 = vmatpush1.msra.mxu0 %v1091
      %1093 = vmatprep.subr.mxu0 0.0
      %v1094 = vand.u32 %v797, 4294901760
      %v1095 = vsub.f32 %v797, %v1094
      %1096 = vmatpush1.msra.mxu0 %v1095
      %1097 = vmatprep.subr.mxu0 0.0
      %v1098 = vand.u32 %v798, 4294901760
      %v1099 = vsub.f32 %v798, %v1098
      %1100 = vmatpush1.msra.mxu0 %v1099
      %1101 = vmatprep.subr.mxu0 0.0
      %v1102 = vand.u32 %v799, 4294901760
      %v1103 = vsub.f32 %v799, %v1102
      %1104 = vmatpush1.msra.mxu0 %v1103
      %1105 = vmatprep.subr.mxu0 0.0
      %v1106 = vand.u32 %v800, 4294901760
      %v1107 = vsub.f32 %v800, %v1106
      %1108 = vmatpush1.msra.mxu0 %v1107
      %1109 = vmatprep.subr.mxu0 0.0
      %v1110 = vand.u32 %v801, 4294901760
      %v1111 = vsub.f32 %v801, %v1110
      %1112 = vmatpush1.msra.mxu0 %v1111
      %1113 = vmatprep.subr.mxu0 0.0
      %v1114 = vand.u32 %v802, 4294901760
      %v1115 = vsub.f32 %v802, %v1114
      %1116 = vmatpush1.msra.mxu0 %v1115
      %1117 = vmatprep.subr.mxu0 0.0
      %v1118 = vand.u32 %v803, 4294901760
      %v1119 = vsub.f32 %v803, %v1118
      %1120 = vmatpush1.msra.mxu0 %v1119
      %1121 = vmatprep.subr.mxu0 0.0
      %v1122 = vand.u32 %v804, 4294901760
      %v1123 = vsub.f32 %v804, %v1122
      %1124 = vmatpush1.msra.mxu0 %v1123
      %1125 = vmatprep.subr.mxu0 0.0
      %v1126 = vand.u32 %v805, 4294901760
      %v1127 = vsub.f32 %v805, %v1126
      %1128 = vmatpush1.msra.mxu0 %v1127
      %1129 = vmatprep.subr.mxu0 0.0
      %v1130 = vand.u32 %v806, 4294901760
      %v1131 = vsub.f32 %v806, %v1130
      %1132 = vmatpush1.msra.mxu0 %v1131
      %1133 = vmatprep.subr.mxu0 0.0
      %v1134 = vand.u32 %v807, 4294901760
      %v1135 = vsub.f32 %v807, %v1134
      %1136 = vmatpush1.msra.mxu0 %v1135
      %1137 = vmatprep.subr.mxu0 0.0
      %1138 = vmatpush1.msra.mxu0 0.0
      %1139 = vmatprep.subr.mxu0 0.0
      %1140 = vmatpush1.msra.mxu0 0.0
      %1141 = vmatprep.subr.mxu0 0.0
      %1142 = vmatpush1.msra.mxu0 0.0
      %1143 = vmatprep.subr.mxu0 0.0
      %1144 = vmatpush1.msra.mxu0 0.0
      %1145 = vmatprep.subr.mxu0 0.0
      %1146 = vmatpush1.msra.mxu0 0.0
      %1147 = vmatprep.subr.mxu0 0.0
      %1148 = vmatpush1.msra.mxu0 0.0
      %1149 = vmatprep.subr.mxu0 0.0
      %1150 = vmatpush1.msra.mxu0 0.0
      %1151 = vmatprep.subr.mxu0 0.0
      %1152 = vmatpush1.msra.mxu0 0.0
      %1153 = vmatprep.subr.mxu0 0.0
      %1154 = vmatpush1.msra.mxu0 0.0
      %1155 = vmatprep.subr.mxu0 0.0
      %1156 = vmatpush1.msra.mxu0 0.0
      %1157 = vmatprep.subr.mxu0 0.0
      %1158 = vmatpush1.msra.mxu0 0.0
      %1159 = vmatprep.subr.mxu0 0.0
      %1160 = vmatpush1.msra.mxu0 0.0
      %1161 = vmatprep.subr.mxu0 0.0
      %1162 = vmatpush1.msra.mxu0 0.0
      %1163 = vmatprep.subr.mxu0 0.0
      %1164 = vmatpush1.msra.mxu0 0.0
      %1165 = vmatprep.subr.mxu0 0.0
      %1166 = vmatpush1.msra.mxu0 0.0
      %1167 = vmatprep.subr.mxu0 0.0
      %1168 = vmatpush1.msra.mxu0 0.0
      %1169 = vmatprep.mubr.f32.mxu0 0.0
      %v1170 = vand.u32 %v790, 4294901760
      %v1171 = vsub.f32 %v790, %v1170
      %1172 = vmatmul.mubr.f32.gmra.mrb[0].mxu0 %v1171
      %v1173 = vpop.f32.mrb[0].mxu0
      %v1174 = vadd.f32 %v1064, %v1173
      %v1175 = vpop.f32.mrb[0].mxu0
      %1176 = vmatprep.mubr.f32.mxu0 0.0
      %v1177 = vand.u32 %v791, 4294901760
      %v1178 = vsub.f32 %v791, %v1177
      %1179 = vmatmul.mubr.f32.gmra.mrb[0].mxu0 %v1178
      %v1180 = vpop.f32.mrb[0].mxu0
      %v1181 = vadd.f32 %v1070, %v1180
      %v1182 = vpop.f32.mrb[0].mxu0
      %1183 = vdwg.mxu0
      %1184 = vmatprep.subr.mxu0 0.0
      %v1185 = vand.u32 %v792, 4294901760
      %1186 = vmatpush1.msra.mxu0 %v1185
      %1187 = vmatprep.subr.mxu0 0.0
      %v1188 = vand.u32 %v793, 4294901760
      %1189 = vmatpush1.msra.mxu0 %v1188
      %1190 = vmatprep.subr.mxu0 0.0
      %v1191 = vand.u32 %v794, 4294901760
      %1192 = vmatpush1.msra.mxu0 %v1191
      %1193 = vmatprep.subr.mxu0 0.0
      %v1194 = vand.u32 %v795, 4294901760
      %1195 = vmatpush1.msra.mxu0 %v1194
      %1196 = vmatprep.subr.mxu0 0.0
      %v1197 = vand.u32 %v796, 4294901760
      %1198 = vmatpush1.msra.mxu0 %v1197
      %1199 = vmatprep.subr.mxu0 0.0
      %v1200 = vand.u32 %v797, 4294901760
      %1201 = vmatpush1.msra.mxu0 %v1200
      %1202 = vmatprep.subr.mxu0 0.0
      %v1203 = vand.u32 %v798, 4294901760
      %1204 = vmatpush1.msra.mxu0 %v1203
      %1205 = vmatprep.subr.mxu0 0.0
      %v1206 = vand.u32 %v799, 4294901760
      %1207 = vmatpush1.msra.mxu0 %v1206
      %1208 = vmatprep.subr.mxu0 0.0
      %v1209 = vand.u32 %v800, 4294901760
      %1210 = vmatpush1.msra.mxu0 %v1209
      %1211 = vmatprep.subr.mxu0 0.0
      %v1212 = vand.u32 %v801, 4294901760
      %1213 = vmatpush1.msra.mxu0 %v1212
      %1214 = vmatprep.subr.mxu0 0.0
      %v1215 = vand.u32 %v802, 4294901760
      %1216 = vmatpush1.msra.mxu0 %v1215
      %1217 = vmatprep.subr.mxu0 0.0
      %v1218 = vand.u32 %v803, 4294901760
      %1219 = vmatpush1.msra.mxu0 %v1218
      %1220 = vmatprep.subr.mxu0 0.0
      %v1221 = vand.u32 %v804, 4294901760
      %1222 = vmatpush1.msra.mxu0 %v1221
      %1223 = vmatprep.subr.mxu0 0.0
      %v1224 = vand.u32 %v805, 4294901760
      %1225 = vmatpush1.msra.mxu0 %v1224
      %1226 = vmatprep.subr.mxu0 0.0
      %v1227 = vand.u32 %v806, 4294901760
      %1228 = vmatpush1.msra.mxu0 %v1227
      %1229 = vmatprep.subr.mxu0 0.0
      %v1230 = vand.u32 %v807, 4294901760
      %1231 = vmatpush1.msra.mxu0 %v1230
      %1232 = vmatprep.subr.mxu0 0.0
      %1233 = vmatpush1.msra.mxu0 0.0
      %1234 = vmatprep.subr.mxu0 0.0
      %1235 = vmatpush1.msra.mxu0 0.0
      %1236 = vmatprep.subr.mxu0 0.0
      %1237 = vmatpush1.msra.mxu0 0.0
      %1238 = vmatprep.subr.mxu0 0.0
      %1239 = vmatpush1.msra.mxu0 0.0
      %1240 = vmatprep.subr.mxu0 0.0
      %1241 = vmatpush1.msra.mxu0 0.0
      %1242 = vmatprep.subr.mxu0 0.0
      %1243 = vmatpush1.msra.mxu0 0.0
      %1244 = vmatprep.subr.mxu0 0.0
      %1245 = vmatpush1.msra.mxu0 0.0
      %1246 = vmatprep.subr.mxu0 0.0
      %1247 = vmatpush1.msra.mxu0 0.0
      %1248 = vmatprep.subr.mxu0 0.0
      %1249 = vmatpush1.msra.mxu0 0.0
      %1250 = vmatprep.subr.mxu0 0.0
      %1251 = vmatpush1.msra.mxu0 0.0
      %1252 = vmatprep.subr.mxu0 0.0
      %1253 = vmatpush1.msra.mxu0 0.0
      %1254 = vmatprep.subr.mxu0 0.0
      %1255 = vmatpush1.msra.mxu0 0.0
      %1256 = vmatprep.subr.mxu0 0.0
      %1257 = vmatpush1.msra.mxu0 0.0
      %1258 = vmatprep.subr.mxu0 0.0
      %1259 = vmatpush1.msra.mxu0 0.0
      %1260 = vmatprep.subr.mxu0 0.0
      %1261 = vmatpush1.msra.mxu0 0.0
      %1262 = vmatprep.subr.mxu0 0.0
      %1263 = vmatpush1.msra.mxu0 0.0
      %1264 = vmatprep.mubr.f32.mxu0 0.0
      %v1265 = vand.u32 %v790, 4294901760
      %v1266 = vsub.f32 %v790, %v1265
      %v1267 = vand.u32 %v1266, 4294901760
      %1268 = vmatmul.mubr.f32.gmra.mrb[0].mxu0 %v1267
      %v1269 = vpop.f32.mrb[0].mxu0
      %v1270 = vadd.f32 %v1174, %v1269
      %v1271 = vpop.f32.mrb[0].mxu0
      %1272 = vmatprep.mubr.f32.mxu0 0.0
      %v1273 = vand.u32 %v791, 4294901760
      %v1274 = vsub.f32 %v791, %v1273
      %v1275 = vand.u32 %v1274, 4294901760
      %1276 = vmatmul.mubr.f32.gmra.mrb[0].mxu0 %v1275
      %v1277 = vpop.f32.mrb[0].mxu0
      %v1278 = vadd.f32 %v1181, %v1277
      %v1279 = vpop.f32.mrb[0].mxu0
      %1280 = vdwg.mxu0
      %1281 = vmatprep.subr.mxu0 0.0
      %v1282 = vand.u32 %v792, 4294901760
      %v1283 = vsub.f32 %v792, %v1282
      %v1284 = vand.u32 %v1283, 4294901760
      %1285 = vmatpush1.msra.mxu0 %v1284
      %1286 = vmatprep.subr.mxu0 0.0
      %v1287 = vand.u32 %v793, 4294901760
      %v1288 = vsub.f32 %v793, %v1287
      %v1289 = vand.u32 %v1288, 4294901760
      %1290 = vmatpush1.msra.mxu0 %v1289
      %1291 = vmatprep.subr.mxu0 0.0
      %v1292 = vand.u32 %v794, 4294901760
      %v1293 = vsub.f32 %v794, %v1292
      %v1294 = vand.u32 %v1293, 4294901760
      %1295 = vmatpush1.msra.mxu0 %v1294
      %1296 = vmatprep.subr.mxu0 0.0
      %v1297 = vand.u32 %v795, 4294901760
      %v1298 = vsub.f32 %v795, %v1297
      %v1299 = vand.u32 %v1298, 4294901760
      %1300 = vmatpush1.msra.mxu0 %v1299
      %1301 = vmatprep.subr.mxu0 0.0
      %v1302 = vand.u32 %v796, 4294901760
      %v1303 = vsub.f32 %v796, %v1302
      %v1304 = vand.u32 %v1303, 4294901760
      %1305 = vmatpush1.msra.mxu0 %v1304
      %1306 = vmatprep.subr.mxu0 0.0
      %v1307 = vand.u32 %v797, 4294901760
      %v1308 = vsub.f32 %v797, %v1307
      %v1309 = vand.u32 %v1308, 4294901760
      %1310 = vmatpush1.msra.mxu0 %v1309
      %1311 = vmatprep.subr.mxu0 0.0
      %v1312 = vand.u32 %v798, 4294901760
      %v1313 = vsub.f32 %v798, %v1312
      %v1314 = vand.u32 %v1313, 4294901760
      %1315 = vmatpush1.msra.mxu0 %v1314
      %1316 = vmatprep.subr.mxu0 0.0
      %v1317 = vand.u32 %v799, 4294901760
      %v1318 = vsub.f32 %v799, %v1317
      %v1319 = vand.u32 %v1318, 4294901760
      %1320 = vmatpush1.msra.mxu0 %v1319
      %1321 = vmatprep.subr.mxu0 0.0
      %v1322 = vand.u32 %v800, 4294901760
      %v1323 = vsub.f32 %v800, %v1322
      %v1324 = vand.u32 %v1323, 4294901760
      %1325 = vmatpush1.msra.mxu0 %v1324
      %1326 = vmatprep.subr.mxu0 0.0
      %v1327 = vand.u32 %v801, 4294901760
      %v1328 = vsub.f32 %v801, %v1327
      %v1329 = vand.u32 %v1328, 4294901760
      %1330 = vmatpush1.msra.mxu0 %v1329
      %1331 = vmatprep.subr.mxu0 0.0
      %v1332 = vand.u32 %v802, 4294901760
      %v1333 = vsub.f32 %v802, %v1332
      %v1334 = vand.u32 %v1333, 4294901760
      %1335 = vmatpush1.msra.mxu0 %v1334
      %1336 = vmatprep.subr.mxu0 0.0
      %v1337 = vand.u32 %v803, 4294901760
      %v1338 = vsub.f32 %v803, %v1337
      %v1339 = vand.u32 %v1338, 4294901760
      %1340 = vmatpush1.msra.mxu0 %v1339
      %1341 = vmatprep.subr.mxu0 0.0
      %v1342 = vand.u32 %v804, 4294901760
      %v1343 = vsub.f32 %v804, %v1342
      %v1344 = vand.u32 %v1343, 4294901760
      %1345 = vmatpush1.msra.mxu0 %v1344
      %1346 = vmatprep.subr.mxu0 0.0
      %v1347 = vand.u32 %v805, 4294901760
      %v1348 = vsub.f32 %v805, %v1347
      %v1349 = vand.u32 %v1348, 4294901760
      %1350 = vmatpush1.msra.mxu0 %v1349
      %1351 = vmatprep.subr.mxu0 0.0
      %v1352 = vand.u32 %v806, 4294901760
      %v1353 = vsub.f32 %v806, %v1352
      %v1354 = vand.u32 %v1353, 4294901760
      %1355 = vmatpush1.msra.mxu0 %v1354
      %1356 = vmatprep.subr.mxu0 0.0
      %v1357 = vand.u32 %v807, 4294901760
      %v1358 = vsub.f32 %v807, %v1357
      %v1359 = vand.u32 %v1358, 4294901760
      %1360 = vmatpush1.msra.mxu0 %v1359
      %1361 = vmatprep.subr.mxu0 0.0
      %1362 = vmatpush1.msra.mxu0 0.0
      %1363 = vmatprep.subr.mxu0 0.0
      %1364 = vmatpush1.msra.mxu0 0.0
      %1365 = vmatprep.subr.mxu0 0.0
      %1366 = vmatpush1.msra.mxu0 0.0
      %1367 = vmatprep.subr.mxu0 0.0
      %1368 = vmatpush1.msra.mxu0 0.0
      %1369 = vmatprep.subr.mxu0 0.0
      %1370 = vmatpush1.msra.mxu0 0.0
      %1371 = vmatprep.subr.mxu0 0.0
      %1372 = vmatpush1.msra.mxu0 0.0
      %1373 = vmatprep.subr.mxu0 0.0
      %1374 = vmatpush1.msra.mxu0 0.0
      %1375 = vmatprep.subr.mxu0 0.0
      %1376 = vmatpush1.msra.mxu0 0.0
      %1377 = vmatprep.subr.mxu0 0.0
      %1378 = vmatpush1.msra.mxu0 0.0
      %1379 = vmatprep.subr.mxu0 0.0
      %1380 = vmatpush1.msra.mxu0 0.0
      %1381 = vmatprep.subr.mxu0 0.0
      %1382 = vmatpush1.msra.mxu0 0.0
      %1383 = vmatprep.subr.mxu0 0.0
      %1384 = vmatpush1.msra.mxu0 0.0
      %1385 = vmatprep.subr.mxu0 0.0
      %1386 = vmatpush1.msra.mxu0 0.0
      %1387 = vmatprep.subr.mxu0 0.0
      %1388 = vmatpush1.msra.mxu0 0.0
      %1389 = vmatprep.subr.mxu0 0.0
      %1390 = vmatpush1.msra.mxu0 0.0
      %1391 = vmatprep.subr.mxu0 0.0
      %1392 = vmatpush1.msra.mxu0 0.0
      %1393 = vmatprep.mubr.f32.mxu0 0.0
      %v1394 = vand.u32 %v790, 4294901760
      %1395 = vmatmul.mubr.f32.gmra.mrb[0].mxu0 %v1394
      %v1396 = vpop.f32.mrb[0].mxu0
      %v1397 = vadd.f32 %v1270, %v1396
      %v1398 = vpop.f32.mrb[0].mxu0
      %1399 = vmatprep.mubr.f32.mxu0 0.0
      %v1400 = vand.u32 %v791, 4294901760
      %1401 = vmatmul.mubr.f32.gmra.mrb[0].mxu0 %v1400
      %v1402 = vpop.f32.mrb[0].mxu0
      %v1403 = vadd.f32 %v1278, %v1402
      %v1404 = vpop.f32.mrb[0].mxu0
      %1405 = vdwg.mxu0
      %1406 = vmatprep.subr.mxu0 0.0
      %v1407 = vand.u32 %v792, 4294901760
      %1408 = vmatpush1.msra.mxu0 %v1407
      %1409 = vmatprep.subr.mxu0 0.0
      %v1410 = vand.u32 %v793, 4294901760
      %1411 = vmatpush1.msra.mxu0 %v1410
      %1412 = vmatprep.subr.mxu0 0.0
      %v1413 = vand.u32 %v794, 4294901760
      %1414 = vmatpush1.msra.mxu0 %v1413
      %1415 = vmatprep.subr.mxu0 0.0
      %v1416 = vand.u32 %v795, 4294901760
      %1417 = vmatpush1.msra.mxu0 %v1416
      %1418 = vmatprep.subr.mxu0 0.0
      %v1419 = vand.u32 %v796, 4294901760
      %1420 = vmatpush1.msra.mxu0 %v1419
      %1421 = vmatprep.subr.mxu0 0.0
      %v1422 = vand.u32 %v797, 4294901760
      %1423 = vmatpush1.msra.mxu0 %v1422
      %1424 = vmatprep.subr.mxu0 0.0
      %v1425 = vand.u32 %v798, 4294901760
      %1426 = vmatpush1.msra.mxu0 %v1425
      %1427 = vmatprep.subr.mxu0 0.0
      %v1428 = vand.u32 %v799, 4294901760
      %1429 = vmatpush1.msra.mxu0 %v1428
      %1430 = vmatprep.subr.mxu0 0.0
      %v1431 = vand.u32 %v800, 4294901760
      %1432 = vmatpush1.msra.mxu0 %v1431
      %1433 = vmatprep.subr.mxu0 0.0
      %v1434 = vand.u32 %v801, 4294901760
      %1435 = vmatpush1.msra.mxu0 %v1434
      %1436 = vmatprep.subr.mxu0 0.0
      %v1437 = vand.u32 %v802, 4294901760
      %1438 = vmatpush1.msra.mxu0 %v1437
      %1439 = vmatprep.subr.mxu0 0.0
      %v1440 = vand.u32 %v803, 4294901760
      %1441 = vmatpush1.msra.mxu0 %v1440
      %1442 = vmatprep.subr.mxu0 0.0
      %v1443 = vand.u32 %v804, 4294901760
      %1444 = vmatpush1.msra.mxu0 %v1443
      %1445 = vmatprep.subr.mxu0 0.0
      %v1446 = vand.u32 %v805, 4294901760
      %1447 = vmatpush1.msra.mxu0 %v1446
      %1448 = vmatprep.subr.mxu0 0.0
      %v1449 = vand.u32 %v806, 4294901760
      %1450 = vmatpush1.msra.mxu0 %v1449
      %1451 = vmatprep.subr.mxu0 0.0
      %v1452 = vand.u32 %v807, 4294901760
      %1453 = vmatpush1.msra.mxu0 %v1452
      %1454 = vmatprep.subr.mxu0 0.0
      %1455 = vmatpush1.msra.mxu0 0.0
      %1456 = vmatprep.subr.mxu0 0.0
      %1457 = vmatpush1.msra.mxu0 0.0
      %1458 = vmatprep.subr.mxu0 0.0
      %1459 = vmatpush1.msra.mxu0 0.0
      %1460 = vmatprep.subr.mxu0 0.0
      %1461 = vmatpush1.msra.mxu0 0.0
      %1462 = vmatprep.subr.mxu0 0.0
      %1463 = vmatpush1.msra.mxu0 0.0
      %1464 = vmatprep.subr.mxu0 0.0
      %1465 = vmatpush1.msra.mxu0 0.0
      %1466 = vmatprep.subr.mxu0 0.0
      %1467 = vmatpush1.msra.mxu0 0.0
      %1468 = vmatprep.subr.mxu0 0.0
      %1469 = vmatpush1.msra.mxu0 0.0
      %1470 = vmatprep.subr.mxu0 0.0
      %1471 = vmatpush1.msra.mxu0 0.0
      %1472 = vmatprep.subr.mxu0 0.0
      %1473 = vmatpush1.msra.mxu0 0.0
      %1474 = vmatprep.subr.mxu0 0.0
      %1475 = vmatpush1.msra.mxu0 0.0
      %1476 = vmatprep.subr.mxu0 0.0
      %1477 = vmatpush1.msra.mxu0 0.0
      %1478 = vmatprep.subr.mxu0 0.0
      %1479 = vmatpush1.msra.mxu0 0.0
      %1480 = vmatprep.subr.mxu0 0.0
      %1481 = vmatpush1.msra.mxu0 0.0
      %1482 = vmatprep.subr.mxu0 0.0
      %1483 = vmatpush1.msra.mxu0 0.0
      %1484 = vmatprep.subr.mxu0 0.0
      %1485 = vmatpush1.msra.mxu0 0.0
      %1486 = vmatprep.mubr.f32.mxu0 0.0
      %v1487 = vand.u32 %v790, 4294901760
      %1488 = vmatmul.mubr.f32.gmra.mrb[0].mxu0 %v1487
      %v1489 = vpop.f32.mrb[0].mxu0
      %v1490 = vadd.f32 %v1397, %v1489
      %v1491 = vpop.f32.mrb[0].mxu0
      %1492 = vmatprep.mubr.f32.mxu0 0.0
      %v1493 = vand.u32 %v791, 4294901760
      %1494 = vmatmul.mubr.f32.gmra.mrb[0].mxu0 %v1493
      %v1495 = vpop.f32.mrb[0].mxu0
      %v1496 = vadd.f32 %v1403, %v1495
      %v1497 = vpop.f32.mrb[0].mxu0
      %1498 = vdwg.mxu0
      %v1499 = vmul.f32 %v1490, %v1490
      %v1500 = vmul.f32 %v1496, %v1496
      %1501 = vadd.xlane.f32.xlu0 %v1499
      %v1502 = vpop.xlane.xlu0 %1501
      %1503 = vadd.xlane.f32.xlu0 %v1500
      %v1504 = vpop.xlane.xlu0 %1503
      %v1505 = vmax.f32 %v1502, 1e-24
      %v1506 = vmax.f32 %v1504, 1e-24
      %v1507 = vrsqrt.pop %v1505
      %v1508 = vrsqrt.pop %v1506
      %v1509 = vmul.f32 %v1490, %v1507
      %v1510 = vmul.f32 %v1496, %v1508
      %1511 = vst [vmem:[#allocation9] sm:$0xff] %v1509
      %1512 = vst [vmem:[#allocation9 + $0x8] sm:$0xff] %v1510
    $region41: #{tpu_custom_call.1} parent=1 // pred_fallthru
      _
    // Predicated region
    $region42: #{tpu_custom_call.1} parent=1 // pred_check
      _
    $region43: #{tpu_custom_call.1} parent=1 // pred_check_branch
      %1514 = sbr.rel (0) target = $region45
    $region44: #{tpu_custom_call.1} parent=1 // pred_region
      %s1516 = ssub.s32 256, 256
      %1517 = vsyncadd [#allocation5], %s1516
      %s1518 = sshll.u32 [#allocation9], 4
      %s1519 = int_to_ptr.vmem [resolvable:$true] %s1518
      %1524 = dma.vmem_to_hbm [thread:$0]  %s1519, 256, %s5, [#allocation5], 128, 128, 8
    $region45: #{tpu_custom_call.1} parent=1 // pred_fallthru
      _
    // Predicated region
    $region46: #{tpu_custom_call.1} parent=1 // pred_check
      _
    $region47: #{tpu_custom_call.1} parent=1 // pred_check_branch
      %1526 = sbr.rel (0) target = $region49
    $region48: #{tpu_custom_call.1} parent=1 // pred_region
      %1527 = dma.done [#allocation5], 256
    $region49: #{tpu_custom_call.1} parent=1 // pred_fallthru
      _
    %1528 = vsyncpa [#allocation4], 1
    %1529 = vsyncpa [#allocation7], 1
    %1530 = vsyncpa [#allocation5], 1

</llo_original>
